<compile_context>
chip_gen: v7x
topology: tpu7x:2x2x1
jax: 0.10.0
libtpu: 0.0.40
codegen_flags: <defaults>
</compile_context>

<pallas_src>
import functools

import jax
import jax.numpy as jnp
import numpy as np
from jax.experimental import pallas as pl
from jax.experimental.pallas import tpu as pltpu


# --------------------------------------------------------------------------
# helpers
# --------------------------------------------------------------------------
def _round_up(x, m):
    return ((x + m - 1) // m) * m


def _choose_tile(dim, max_tile, granule):
    """Largest multiple of `granule` that divides `dim` and is <= max_tile."""
    t = min(max_tile, dim)
    t = (t // granule) * granule
    while dim % t != 0:
        t -= granule
    return t


# Static architecture config: (name, out_channels, kernel, stride, pad).
CONV_CFG = (
    ("conv1", 64, 7, 2, 3),
    ("conv2", 128, 5, 2, 2),
    ("conv3", 512, 3, 2, 1),
)


# --------------------------------------------------------------------------
# Pallas kernels
# --------------------------------------------------------------------------
def _conv_bn_relu_kernel(a_ref, w_ref, s_ref, b_ref, o_ref):
    # a: (tm, Kp) bf16 patches, w: (Kp, tn) bf16, s/b: (1, tn) f32.
    # Single reduction step (K collapsed): no accumulator scratch needed.
    y = jnp.dot(a_ref[...], w_ref[...], preferred_element_type=jnp.float32)
    y = y * s_ref[...] + b_ref[...]                     # folded BN (+conv bias)
    o_ref[...] = jnp.maximum(y, 0.0).astype(o_ref.dtype)  # ReLU -> bf16


def _conv3_bn_relu_pool_fc_kernel(a_ref, w_ref, s_ref, b_ref, pool_ref,
                                  fcw_ref, fcb_ref, o_ref):
    # a: (M, Kp) bf16 conv3 patches (M = N*OH*OW), w: (Kp, C) bf16,
    # s/b: (1, C) f32, pool: (N, M) f32 averaging matrix (1/HW folded in),
    # fcw: (C, NCLSp) bf16, fcb: (1, NCLSp) f32.
    y = jnp.dot(a_ref[...], w_ref[...], preferred_element_type=jnp.float32)
    y = jnp.maximum(y * s_ref[...] + b_ref[...], 0.0)           # BN + ReLU, (M, C) f32
    pooled = jnp.dot(pool_ref[...], y,
                     preferred_element_type=jnp.float32)        # global avg pool, (N, C)
    o_ref[...] = jnp.dot(pooled.astype(jnp.bfloat16), fcw_ref[...],
                         preferred_element_type=jnp.float32) + fcb_ref[...]


# --------------------------------------------------------------------------
# Pallas wrappers
# --------------------------------------------------------------------------
def fused_conv_bn_relu(patches, w_pad, scale_pad, bias_pad, *, tm_max=256, tn_max=256):
    """relu((M,K)@(Kp,OCp) * scale + bias).  Returns (Mp, OCp) bf16 (zero-padded).

    `w_pad`/`scale_pad`/`bias_pad` are pre-laid-out (prepare_params): bf16
    (Kp, OCp) weight and f32 (1, OCp) scale/bias with Kp/OCp multiples of 128.
    """
    M, K = patches.shape
    Kp, OCp = w_pad.shape
    Mp = _round_up(M, 8)

    tm = _choose_tile(Mp, tm_max, 8)
    tn = _choose_tile(OCp, tn_max, 128)
    # v7x: ensure >=2 parallel blocks so the second TensorCore is not idle
    # (no effect on single-TC v5e/v6e beyond one extra tiny grid step).
    if (Mp // tm) * (OCp // tn) == 1 and Mp >= 16:
        tm = _choose_tile(Mp, max(8, tm // 2), 8)

    a = jnp.pad(patches.astype(jnp.bfloat16), ((0, Mp - M), (0, Kp - K)))

    grid = (Mp // tm, OCp // tn)
    return pl.pallas_call(
        _conv_bn_relu_kernel,
        out_shape=jax.ShapeDtypeStruct((Mp, OCp), jnp.bfloat16),
        grid_spec=pltpu.PrefetchScalarGridSpec(
            num_scalar_prefetch=0,
            grid=grid,
            in_specs=[
                pl.BlockSpec((tm, Kp), lambda i, j: (i, 0)),
                pl.BlockSpec((Kp, tn), lambda i, j: (0, j)),
                pl.BlockSpec((1, tn), lambda i, j: (0, j)),
                pl.BlockSpec((1, tn), lambda i, j: (0, j)),
            ],
            out_specs=pl.BlockSpec((tm, tn), lambda i, j: (i, j)),
        ),
        compiler_params=pltpu.CompilerParams(
            dimension_semantics=("parallel", "parallel"),
            vmem_limit_bytes=32 * 1024 * 1024,
        ),
    )(a, w_pad, scale_pad, bias_pad)


def fused_conv3_bn_relu_pool_fc(patches, n, hw, w3, s3, b3, fc_w, fc_b):
    """conv3 matmul + folded BN + ReLU + global avg pool + linear, one launch.

    Returns (n, NCLSp) f32 logits (lane-padded; slice outside).
    """
    M, K = patches.shape                  # M == n * hw
    Kp, OCp = w3.shape
    NCLSp = fc_w.shape[1]

    a = jnp.pad(patches.astype(jnp.bfloat16), ((0, 0), (0, Kp - K)))
    # (n, M) averaging matrix: row s has 1/hw on that sample's hw rows.
    pool = jnp.asarray(np.repeat(np.eye(n, dtype=np.float32), hw, axis=1) / hw)

    return pl.pallas_call(
        _conv3_bn_relu_pool_fc_kernel,
        out_shape=jax.ShapeDtypeStruct((n, NCLSp), jnp.float32),
        grid=(1,),
        in_specs=[
            pl.BlockSpec((M, Kp), lambda i: (0, 0)),
            pl.BlockSpec((Kp, OCp), lambda i: (0, 0)),
            pl.BlockSpec((1, OCp), lambda i: (0, 0)),
            pl.BlockSpec((1, OCp), lambda i: (0, 0)),
            pl.BlockSpec((n, M), lambda i: (0, 0)),
            pl.BlockSpec((OCp, NCLSp), lambda i: (0, 0)),
            pl.BlockSpec((1, NCLSp), lambda i: (0, 0)),
        ],
        out_specs=pl.BlockSpec((n, NCLSp), lambda i: (0, 0)),
        compiler_params=pltpu.CompilerParams(
            dimension_semantics=("arbitrary",),
            vmem_limit_bytes=32 * 1024 * 1024,
        ),
    )(a, w3, s3, b3, pool, fc_w, fc_b)


# --------------------------------------------------------------------------
# JAX glue: im2col, BN folding, one-time parameter layout, forward
# --------------------------------------------------------------------------
def im2col_nhwc(x, kh, kw, stride, pad):
    """x: (N, H, W, C) -> (N*OH*OW, kh*kw*C), patch feature order (kh, kw, C)."""
    N, H, W, C = x.shape
    xp = jnp.pad(x, ((0, 0), (pad, pad), (pad, pad), (0, 0)))
    OH = (H + 2 * pad - kh) // stride + 1
    OW = (W + 2 * pad - kw) // stride + 1
    cols = []
    for i in range(kh):
        for j in range(kw):
            cols.append(
                xp[:, i : i + stride * OH : stride, j : j + stride * OW : stride, :]
            )
    patches = jnp.concatenate(cols, axis=-1)  # (N, OH, OW, kh*kw*C)
    return patches.reshape(N * OH * OW, kh * kw * C), OH, OW


def fold_bn(conv_bias, gamma, beta, running_mean, running_var, eps=1e-5):
    scale = gamma / jnp.sqrt(running_var + eps)
    bias = (conv_bias - running_mean) * scale + beta
    return scale.reshape(1, -1), bias.reshape(1, -1)


def prepare_params(params):
    """One-time layout/fold: done at parameter-load time, NOT per forward call."""
    prep = {}
    for idx, (cname, oc, ksz, _stride, _pad) in enumerate(CONV_CFG, 1):
        w = params[f"{cname}_w"]                        # (OC, IC, KH, KW)
        cb = params[f"{cname}_b"]
        gamma, beta, rmean, rvar = params[f"bn{idx}"]
        oc_, ic, kh, kw = w.shape
        K = kh * kw * ic
        Kp = _round_up(K, 128)
        OCp = _round_up(oc_, 128)
        # (OC, IC, KH, KW) -> (KH, KW, IC, OC) -> (K, OC), matching patch order.
        w_mat = jnp.transpose(w, (2, 3, 1, 0)).reshape(K, oc_)
        w_mat = jnp.pad(w_mat, ((0, Kp - K), (0, OCp - oc_))).astype(jnp.bfloat16)
        scale, bias = fold_bn(cb, gamma, beta, rmean, rvar)
        # Padded output channels: scale=0, bias=0 -> relu(0) = 0 exactly.
        scale = jnp.pad(scale.astype(jnp.float32), ((0, 0), (0, OCp - oc_)))
        bias = jnp.pad(bias.astype(jnp.float32), ((0, 0), (0, OCp - oc_)))
        prep[cname] = {"w": w_mat, "scale": scale, "bias": bias}

    oc3 = CONV_CFG[2][1]
    oc3p = _round_up(oc3, 128)
    fc_w = params["fc_w"]                               # (512, num_classes)
    c_fc, ncls = fc_w.shape
    nclsp = _round_up(ncls, 128)
    prep["fc_w"] = jnp.pad(fc_w, ((0, oc3p - c_fc), (0, nclsp - ncls))).astype(jnp.bfloat16)
    prep["fc_b"] = jnp.pad(params["fc_b"].astype(jnp.float32).reshape(1, -1),
                           ((0, 0), (0, nclsp - ncls)))
    return prep


def init_params(key, num_channels, num_classes):
    ks = jax.random.split(key, 8)

    def conv_init(k, oc, ic, kh, kw):
        fan_in = ic * kh * kw
        bound = 1.0 / jnp.sqrt(fan_in)
        kw_, kb_ = jax.random.split(k)
        w = jax.random.uniform(kw_, (oc, ic, kh, kw), jnp.float32, -bound, bound)
        b = jax.random.uniform(kb_, (oc,), jnp.float32, -bound, bound)
        return w, b

    def bn_init(c):
        return (jnp.ones((c,), jnp.float32), jnp.zeros((c,), jnp.float32),
                jnp.zeros((c,), jnp.float32), jnp.ones((c,), jnp.float32))

    p = {}
    p["conv1_w"], p["conv1_b"] = conv_init(ks[0], 64, num_channels, 7, 7)
    p["conv2_w"], p["conv2_b"] = conv_init(ks[1], 128, 64, 5, 5)
    p["conv3_w"], p["conv3_b"] = conv_init(ks[2], 512, 128, 3, 3)
    p["bn1"] = bn_init(64)
    p["bn2"] = bn_init(128)
    p["bn3"] = bn_init(512)
    bound = 1.0 / jnp.sqrt(512.0)
    p["fc_w"] = jax.random.uniform(ks[3], (512, num_classes), jnp.float32, -bound, bound)
    p["fc_b"] = jax.random.uniform(ks[4], (num_classes,), jnp.float32, -bound, bound)
    return p


@functools.partial(jax.jit, static_argnames=("num_classes",))
def custom_cnn_forward(x_nchw, prep, *, num_classes):
    # NCHW (PyTorch) -> NHWC (kernel layout), bf16 activations between layers.
    x = jnp.transpose(x_nchw, (0, 2, 3, 1)).astype(jnp.bfloat16)
    N = x.shape[0]

    # conv1, conv2: fused matmul + folded BN + ReLU (dropout = identity, eval).
    for name, oc, ksz, stride, pad in CONV_CFG[:2]:
        patches, OH, OW = im2col_nhwc(x, ksz, ksz, stride, pad)
        out = fused_conv_bn_relu(patches, prep[name]["w"],
                                 prep[name]["scale"], prep[name]["bias"])
        # Slice padded rows AND padded channels off so the next layer's
        # reduction doesn't multiply zeros (conv2: K=1664, not 3200).
        x = out[: N * OH * OW, :oc].reshape(N, OH, OW, oc)

    # conv3 + BN + ReLU + global average pool + FC, fused into one launch.
    _, _, ksz, stride, pad = CONV_CFG[2]
    patches, OH, OW = im2col_nhwc(x, ksz, ksz, stride, pad)
    logits = fused_conv3_bn_relu_pool_fc(
        patches, N, OH * OW,
        prep["conv3"]["w"], prep["conv3"]["scale"], prep["conv3"]["bias"],
        prep["fc_w"], prep["fc_b"])
    return logits[:, :num_classes]


if __name__ == "__main__":
    num_channels, num_classes, drop_rate = 4, 10, 0.1  # drop_rate unused in eval mode
    key = jax.random.PRNGKey(0)
    kx, kp = jax.random.split(key)

    x = jax.random.normal(kx, (2, num_channels, 16, 16), jnp.float32)  # NCHW like PyTorch
    params = init_params(kp, num_channels, num_classes)
    prep = prepare_params(params)          # one-time weight layout / BN fold

    logits = custom_cnn_forward(x, prep, num_classes=num_classes)
    jax.block_until_ready(logits)
    assert logits.shape == (2, num_classes)
    print("KERNEL_OK")
</pallas_src>

<mosaic_0001>
module attributes {stable_mosaic.version = 11 : i64} {
  func.func @_conv_bn_relu_kernel(%arg0: i32, %arg1: i32, %arg2: memref<64x256xbf16, #tpu.memory_space<vmem>>, %arg3: memref<256x128xbf16, #tpu.memory_space<vmem>>, %arg4: memref<1x128xf32, #tpu.memory_space<vmem>>, %arg5: memref<1x128xf32, #tpu.memory_space<vmem>>, %arg6: memref<64x128xbf16, #tpu.memory_space<vmem>>) attributes {dimension_semantics = [#tpu.dimension_semantics<parallel>, #tpu.dimension_semantics<parallel>], iteration_bounds = array<i64: 2, 1>, scalar_prefetch = 0 : i64, scratch_operands = 0 : i64, tpu.core_type = #tpu.core_type<tc>, window_params = [{transform_indices = @transform_0, window_bounds = array<i64: 64, 256>}, {transform_indices = @transform_1, window_bounds = array<i64: 256, 128>}, {transform_indices = @transform_2, window_bounds = array<i64: 1, 128>}, {transform_indices = @transform_3, window_bounds = array<i64: 1, 128>}, {transform_indices = @transform_4, window_bounds = array<i64: 64, 128>}]} {
    %c0 = arith.constant 0 : index
    %c0_0 = arith.constant 0 : index
    %0 = vector.load %arg2[%c0, %c0_0] : memref<64x256xbf16, #tpu.memory_space<vmem>>, vector<64x256xbf16>
    %c0_1 = arith.constant 0 : index
    %c0_2 = arith.constant 0 : index
    %1 = vector.load %arg3[%c0_1, %c0_2] : memref<256x128xbf16, #tpu.memory_space<vmem>>, vector<256x128xbf16>
    %cst = arith.constant dense<0.000000e+00> : vector<64x128xf32>
    %2 = tpu.matmul %0, %1, %cst {dimension_numbers = #tpu.dot_dimension_numbers<[1], [0], [0], [1], [0, 0, 1, 1], [], []>} : vector<64x256xbf16>, vector<256x128xbf16>, vector<64x128xf32> -> vector<64x128xf32>
    %c0_3 = arith.constant 0 : index
    %c0_4 = arith.constant 0 : index
    %3 = vector.load %arg4[%c0_3, %c0_4] : memref<1x128xf32, #tpu.memory_space<vmem>>, vector<1x128xf32>
    %4 = vector.broadcast %3 : vector<1x128xf32> to vector<64x128xf32>
    %5 = arith.mulf %2, %4 : vector<64x128xf32>
    %c0_5 = arith.constant 0 : index
    %c0_6 = arith.constant 0 : index
    %6 = vector.load %arg5[%c0_5, %c0_6] : memref<1x128xf32, #tpu.memory_space<vmem>>, vector<1x128xf32>
    %7 = vector.broadcast %6 : vector<1x128xf32> to vector<64x128xf32>
    %8 = arith.addf %5, %7 : vector<64x128xf32>
    %cst_7 = arith.constant 0.000000e+00 : f32
    %9 = vector.broadcast %cst_7 : f32 to vector<64x128xf32>
    %10 = arith.maximumf %8, %9 : vector<64x128xf32>
    %11 = arith.truncf %10 : vector<64x128xf32> to vector<64x128xbf16>
    %c0_8 = arith.constant 0 : index
    %c0_9 = arith.constant 0 : index
    %12 = vector.load %arg6[%c0_8, %c0_9] : memref<64x128xbf16, #tpu.memory_space<vmem>>, vector<64x128xbf16>
    tpu.vector_store %arg6[%c0_8, %c0_9], %11 {strides = array<i32>} : memref<64x128xbf16, #tpu.memory_space<vmem>>, vector<64x128xbf16>,
    return
  }
  func.func @transform_0(%arg0: i32, %arg1: i32) -> (i32, i32) {
    %c0_i32 = arith.constant 0 : i32
    %c0_i32_0 = arith.constant 0 : i32
    return %arg0, %c0_i32 : i32, i32
  }
  func.func @transform_1(%arg0: i32, %arg1: i32) -> (i32, i32) {
    %c0_i32 = arith.constant 0 : i32
    %c0_i32_0 = arith.constant 0 : i32
    return %c0_i32, %arg1 : i32, i32
  }
  func.func @transform_2(%arg0: i32, %arg1: i32) -> (i32, i32) {
    %c0_i32 = arith.constant 0 : i32
    %c0_i32_0 = arith.constant 0 : i32
    return %c0_i32, %arg1 : i32, i32
  }
  func.func @transform_3(%arg0: i32, %arg1: i32) -> (i32, i32) {
    %c0_i32 = arith.constant 0 : i32
    %c0_i32_0 = arith.constant 0 : i32
    return %c0_i32, %arg1 : i32, i32
  }
  func.func @transform_4(%arg0: i32, %arg1: i32) -> (i32, i32) {
    %c0_i32 = arith.constant 0 : i32
    return %arg0, %arg1 : i32, i32
  }
}

module attributes {stable_mosaic.version = 11 : i64} {
  func.func @_conv_bn_relu_kernel(%arg0: i32, %arg1: i32, %arg2: memref<16x1664xbf16, #tpu.memory_space<vmem>>, %arg3: memref<1664x128xbf16, #tpu.memory_space<vmem>>, %arg4: memref<1x128xf32, #tpu.memory_space<vmem>>, %arg5: memref<1x128xf32, #tpu.memory_space<vmem>>, %arg6: memref<16x128xbf16, #tpu.memory_space<vmem>>) attributes {dimension_semantics = [#tpu.dimension_semantics<parallel>, #tpu.dimension_semantics<parallel>], iteration_bounds = array<i64: 2, 1>, scalar_prefetch = 0 : i64, scratch_operands = 0 : i64, tpu.core_type = #tpu.core_type<tc>, window_params = [{transform_indices = @transform_0, window_bounds = array<i64: 16, 1664>}, {transform_indices = @transform_1, window_bounds = array<i64: 1664, 128>}, {transform_indices = @transform_2, window_bounds = array<i64: 1, 128>}, {transform_indices = @transform_3, window_bounds = array<i64: 1, 128>}, {transform_indices = @transform_4, window_bounds = array<i64: 16, 128>}]} {
    %c0 = arith.constant 0 : index
    %c0_0 = arith.constant 0 : index
    %0 = vector.load %arg2[%c0, %c0_0] : memref<16x1664xbf16, #tpu.memory_space<vmem>>, vector<16x1664xbf16>
    %c0_1 = arith.constant 0 : index
    %c0_2 = arith.constant 0 : index
    %1 = vector.load %arg3[%c0_1, %c0_2] : memref<1664x128xbf16, #tpu.memory_space<vmem>>, vector<1664x128xbf16>
    %cst = arith.constant dense<0.000000e+00> : vector<16x128xf32>
    %2 = tpu.matmul %0, %1, %cst {dimension_numbers = #tpu.dot_dimension_numbers<[1], [0], [0], [1], [0, 0, 1, 1], [], []>} : vector<16x1664xbf16>, vector<1664x128xbf16>, vector<16x128xf32> -> vector<16x128xf32>
    %c0_3 = arith.constant 0 : index
    %c0_4 = arith.constant 0 : index
    %3 = vector.load %arg4[%c0_3, %c0_4] : memref<1x128xf32, #tpu.memory_space<vmem>>, vector<1x128xf32>
    %4 = vector.broadcast %3 : vector<1x128xf32> to vector<16x128xf32>
    %5 = arith.mulf %2, %4 : vector<16x128xf32>
    %c0_5 = arith.constant 0 : index
    %c0_6 = arith.constant 0 : index
    %6 = vector.load %arg5[%c0_5, %c0_6] : memref<1x128xf32, #tpu.memory_space<vmem>>, vector<1x128xf32>
    %7 = vector.broadcast %6 : vector<1x128xf32> to vector<16x128xf32>
    %8 = arith.addf %5, %7 : vector<16x128xf32>
    %cst_7 = arith.constant 0.000000e+00 : f32
    %9 = vector.broadcast %cst_7 : f32 to vector<16x128xf32>
    %10 = arith.maximumf %8, %9 : vector<16x128xf32>
    %11 = arith.truncf %10 : vector<16x128xf32> to vector<16x128xbf16>
    %c0_8 = arith.constant 0 : index
    %c0_9 = arith.constant 0 : index
    %12 = vector.load %arg6[%c0_8, %c0_9] : memref<16x128xbf16, #tpu.memory_space<vmem>>, vector<16x128xbf16>
    tpu.vector_store %arg6[%c0_8, %c0_9], %11 {strides = array<i32>} : memref<16x128xbf16, #tpu.memory_space<vmem>>, vector<16x128xbf16>,
    return
  }
  func.func @transform_0(%arg0: i32, %arg1: i32) -> (i32, i32) {
    %c0_i32 = arith.constant 0 : i32
    %c0_i32_0 = arith.constant 0 : i32
    return %arg0, %c0_i32 : i32, i32
  }
  func.func @transform_1(%arg0: i32, %arg1: i32) -> (i32, i32) {
    %c0_i32 = arith.constant 0 : i32
    %c0_i32_0 = arith.constant 0 : i32
    return %c0_i32, %arg1 : i32, i32
  }
  func.func @transform_2(%arg0: i32, %arg1: i32) -> (i32, i32) {
    %c0_i32 = arith.constant 0 : i32
    %c0_i32_0 = arith.constant 0 : i32
    return %c0_i32, %arg1 : i32, i32
  }
  func.func @transform_3(%arg0: i32, %arg1: i32) -> (i32, i32) {
    %c0_i32 = arith.constant 0 : i32
    %c0_i32_0 = arith.constant 0 : i32
    return %c0_i32, %arg1 : i32, i32
  }
  func.func @transform_4(%arg0: i32, %arg1: i32) -> (i32, i32) {
    %c0_i32 = arith.constant 0 : i32
    return %arg0, %arg1 : i32, i32
  }
}

module attributes {stable_mosaic.version = 11 : i64} {
  func.func @_conv3_bn_relu_pool_fc_kernel(%arg0: i32, %arg1: memref<8x1152xbf16, #tpu.memory_space<vmem>>, %arg2: memref<1152x512xbf16, #tpu.memory_space<vmem>>, %arg3: memref<1x512xf32, #tpu.memory_space<vmem>>, %arg4: memref<1x512xf32, #tpu.memory_space<vmem>>, %arg5: memref<2x8xf32, #tpu.memory_space<vmem>>, %arg6: memref<512x128xbf16, #tpu.memory_space<vmem>>, %arg7: memref<1x128xf32, #tpu.memory_space<vmem>>, %arg8: memref<2x128xf32, #tpu.memory_space<vmem>>) attributes {dimension_semantics = [#tpu.dimension_semantics<arbitrary>], iteration_bounds = array<i64: 1>, scalar_prefetch = 0 : i64, scratch_operands = 0 : i64, tpu.core_type = #tpu.core_type<tc>, window_params = [{pipeline_mode = #tpu.pipeline_mode<synchronous>, transform_indices = @transform_0, window_bounds = array<i64: 8, 1152>}, {pipeline_mode = #tpu.pipeline_mode<synchronous>, transform_indices = @transform_1, window_bounds = array<i64: 1152, 512>}, {pipeline_mode = #tpu.pipeline_mode<synchronous>, transform_indices = @transform_2, window_bounds = array<i64: 1, 512>}, {pipeline_mode = #tpu.pipeline_mode<synchronous>, transform_indices = @transform_3, window_bounds = array<i64: 1, 512>}, {pipeline_mode = #tpu.pipeline_mode<synchronous>, transform_indices = @transform_4, window_bounds = array<i64: 2, 8>}, {pipeline_mode = #tpu.pipeline_mode<synchronous>, transform_indices = @transform_5, window_bounds = array<i64: 512, 128>}, {pipeline_mode = #tpu.pipeline_mode<synchronous>, transform_indices = @transform_6, window_bounds = array<i64: 1, 128>}, {pipeline_mode = #tpu.pipeline_mode<synchronous>, transform_indices = @transform_7, window_bounds = array<i64: 2, 128>}]} {
    %c0 = arith.constant 0 : index
    %c0_0 = arith.constant 0 : index
    %0 = vector.load %arg1[%c0, %c0_0] : memref<8x1152xbf16, #tpu.memory_space<vmem>>, vector<8x1152xbf16>
    %c0_1 = arith.constant 0 : index
    %c0_2 = arith.constant 0 : index
    %1 = vector.load %arg2[%c0_1, %c0_2] : memref<1152x512xbf16, #tpu.memory_space<vmem>>, vector<1152x512xbf16>
    %cst = arith.constant dense<0.000000e+00> : vector<8x512xf32>
    %2 = tpu.matmul %0, %1, %cst {dimension_numbers = #tpu.dot_dimension_numbers<[1], [0], [0], [1], [0, 0, 1, 1], [], []>} : vector<8x1152xbf16>, vector<1152x512xbf16>, vector<8x512xf32> -> vector<8x512xf32>
    %c0_3 = arith.constant 0 : index
    %c0_4 = arith.constant 0 : index
    %3 = vector.load %arg3[%c0_3, %c0_4] : memref<1x512xf32, #tpu.memory_space<vmem>>, vector<1x512xf32>
    %4 = vector.broadcast %3 : vector<1x512xf32> to vector<8x512xf32>
    %5 = arith.mulf %2, %4 : vector<8x512xf32>
    %c0_5 = arith.constant 0 : index
    %c0_6 = arith.constant 0 : index
    %6 = vector.load %arg4[%c0_5, %c0_6] : memref<1x512xf32, #tpu.memory_space<vmem>>, vector<1x512xf32>
    %7 = vector.broadcast %6 : vector<1x512xf32> to vector<8x512xf32>
    %8 = arith.addf %5, %7 : vector<8x512xf32>
    %cst_7 = arith.constant 0.000000e+00 : f32
    %9 = vector.broadcast %cst_7 : f32 to vector<8x512xf32>
    %10 = arith.maximumf %8, %9 : vector<8x512xf32>
    %c0_8 = arith.constant 0 : index
    %c0_9 = arith.constant 0 : index
    %11 = vector.load %arg5[%c0_8, %c0_9] : memref<2x8xf32, #tpu.memory_space<vmem>>, vector<2x8xf32>
    %cst_10 = arith.constant dense<0.000000e+00> : vector<2x512xf32>
    %12 = tpu.matmul %11, %10, %cst_10 {dimension_numbers = #tpu.dot_dimension_numbers<[1], [0], [0], [1], [0, 0, 1, 1], [], []>} : vector<2x8xf32>, vector<8x512xf32>, vector<2x512xf32> -> vector<2x512xf32>
    %13 = arith.truncf %12 : vector<2x512xf32> to vector<2x512xbf16>
    %c0_11 = arith.constant 0 : index
    %c0_12 = arith.constant 0 : index
    %14 = vector.load %arg6[%c0_11, %c0_12] : memref<512x128xbf16, #tpu.memory_space<vmem>>, vector<512x128xbf16>
    %cst_13 = arith.constant dense<0.000000e+00> : vector<2x128xf32>
    %15 = tpu.matmul %13, %14, %cst_13 {dimension_numbers = #tpu.dot_dimension_numbers<[1], [0], [0], [1], [0, 0, 1, 1], [], []>} : vector<2x512xbf16>, vector<512x128xbf16>, vector<2x128xf32> -> vector<2x128xf32>
    %c0_14 = arith.constant 0 : index
    %c0_15 = arith.constant 0 : index
    %16 = vector.load %arg7[%c0_14, %c0_15] : memref<1x128xf32, #tpu.memory_space<vmem>>, vector<1x128xf32>
    %17 = vector.broadcast %16 : vector<1x128xf32> to vector<2x128xf32>
    %18 = arith.addf %15, %17 : vector<2x128xf32>
    %c0_16 = arith.constant 0 : index
    %c0_17 = arith.constant 0 : index
    %19 = vector.load %arg8[%c0_16, %c0_17] : memref<2x128xf32, #tpu.memory_space<vmem>>, vector<2x128xf32>
    tpu.vector_store %arg8[%c0_16, %c0_17], %18 {strides = array<i32>} : memref<2x128xf32, #tpu.memory_space<vmem>>, vector<2x128xf32>,
    return
  }
  func.func @transform_0(%arg0: i32) -> (i32, i32) {
    %c0_i32 = arith.constant 0 : i32
    %c0_i32_0 = arith.constant 0 : i32
    %c0_i32_1 = arith.constant 0 : i32
    return %c0_i32, %c0_i32_0 : i32, i32
  }
  func.func @transform_1(%arg0: i32) -> (i32, i32) {
    %c0_i32 = arith.constant 0 : i32
    %c0_i32_0 = arith.constant 0 : i32
    %c0_i32_1 = arith.constant 0 : i32
    return %c0_i32, %c0_i32_0 : i32, i32
  }
  func.func @transform_2(%arg0: i32) -> (i32, i32) {
    %c0_i32 = arith.constant 0 : i32
    %c0_i32_0 = arith.constant 0 : i32
    %c0_i32_1 = arith.constant 0 : i32
    return %c0_i32, %c0_i32_0 : i32, i32
  }
  func.func @transform_3(%arg0: i32) -> (i32, i32) {
    %c0_i32 = arith.constant 0 : i32
    %c0_i32_0 = arith.constant 0 : i32
    %c0_i32_1 = arith.constant 0 : i32
    return %c0_i32, %c0_i32_0 : i32, i32
  }
  func.func @transform_4(%arg0: i32) -> (i32, i32) {
    %c0_i32 = arith.constant 0 : i32
    %c0_i32_0 = arith.constant 0 : i32
    %c0_i32_1 = arith.constant 0 : i32
    return %c0_i32, %c0_i32_0 : i32, i32
  }
  func.func @transform_5(%arg0: i32) -> (i32, i32) {
    %c0_i32 = arith.constant 0 : i32
    %c0_i32_0 = arith.constant 0 : i32
    %c0_i32_1 = arith.constant 0 : i32
    return %c0_i32, %c0_i32_0 : i32, i32
  }
  func.func @transform_6(%arg0: i32) -> (i32, i32) {
    %c0_i32 = arith.constant 0 : i32
    %c0_i32_0 = arith.constant 0 : i32
    %c0_i32_1 = arith.constant 0 : i32
    return %c0_i32, %c0_i32_0 : i32, i32
  }
  func.func @transform_7(%arg0: i32) -> (i32, i32) {
    %c0_i32 = arith.constant 0 : i32
    %c0_i32_0 = arith.constant 0 : i32
    %c0_i32_1 = arith.constant 0 : i32
    return %c0_i32, %c0_i32_0 : i32, i32
  }
}

</mosaic_0001>

<llo_original>
// kernel: custom_cnn_forward.3
$region0: #{custom_cnn_forward.3}
  #allocation0 [shape = 'u32[]', space=smem, size = 0x4, offset = 0x4, fixed_abs, tag = 'smem constant byte address 0x4 - core index']
  #allocation1 [shape = 'u32[144,128]{1,0:T(1,128)}', space=vmem, size = 0x12000, scoped, tag = 'internal scratch']
  %s0 = inlined_call_operand.vmem [shape: bf16[128,256], index: 0, kind: input, shape index: {}]
  %s1 = inlined_call_operand.vmem [shape: bf16[256,128], index: 1, kind: input, shape index: {}]
  %s2 = inlined_call_operand.vmem [shape: f32[1,128], index: 2, kind: input, shape index: {}]
  %s3 = inlined_call_operand.vmem [shape: f32[1,128], index: 3, kind: input, shape index: {}]
  %s4 = inlined_call_operand.vmem [shape: bf16[128,128], index: 4, kind: output, shape index: {}]
  %s5 = sld [smem:[#allocation0]]
  $region49: #{custom_cnn_forward.3} parent=0
    _
  %s7 = ssub.s32 1, %s5
  %s8 = scalar_select 0, %s7, %s5
  loop: start=0, step=1, limit=4
  $region2: #{custom_cnn_forward.3} parent=0 // loop_pre_header
    _
  $region3: #{custom_cnn_forward.3} parent=0 // loop_header
    %s10 = sphi 0, %s14
    %p11 = scmp.ge.s32.totalorder %s10, 4
    %s17 = sphi 0, %s29
    %s18 = sphi 0, %s25
    %s19 = sphi 0, %s17
    %s20 = sphi 0, %s18
    %s21 = sphi 0, %s19
    %s22 = sphi 0, %s20
    %s32 = sphi 0, %s34
    %s35 = sphi 0, %s32
    %s36 = sphi 0, %s35
    %s52 = sphi 0, %s36
    %s58 = sphi 0, %s60
    %s61 = sphi 0, %s58
    %s62 = sphi 0, %s61
    %s78 = sphi 0, %s62
    %s84 = sphi 0, %s86
    %s87 = sphi 0, %s84
    %s88 = sphi 0, %s87
    %s104 = sphi 0, %s88
    %s110 = sphi 0, %s112
    %s113 = sphi 0, %s110
    %s114 = sphi 0, %s113
    %s130 = sphi 0, %s114
    %s138 = sphi 0, %s140
    %s141 = sphi 0, %s138
    %s142 = sphi 0, %s141
    %s158 = sphi 0, %s142
  $region4: #{custom_cnn_forward.3} parent=0 // loop_header_branch
    %13 = sbr.rel (%p11) target = $region8
  $region5: #{custom_cnn_forward.3} parent=0 // loop_body
    %s15 = ssub.s32 %s10, 1
    %s16 = ssub.s32 %s10, 2
    %s23 = sadd.s32 1, %s18
    %p24 = scmp.ge.s32.totalorder %s23, 1
    %s25 = scalar_select %p24, 0, %s23
    %s26 = sadd.s32 1, %s17
    %s27 = scalar_select %p24, %s26, %s17
    %p28 = scmp.ge.s32.totalorder %s27, 2
    %s29 = scalar_select %p28, 0, %s27
    %s30 = ssub.s32 %s17, %s29
    %p31 = scmp.eq.s32.totalorder %s30, 0
    %s33 = sadd.s32 %s32, 1
    %s34 = scalar_select %p31, %s32, %s33
    %p37 = pneg %p31
    %p38 = scmp.eq.s32.totalorder %s10, 1
    %p39 = por %p37, %p38
    %p40 = scmp.ne.s32.totalorder %s32, %s35
    %p41 = scmp.eq.s32.totalorder %s10, 0
    %p42 = por %p40, %p41
    %p43 = scmp.ne.s32.totalorder %s32, %s35
    %p44 = scmp.eq.s32.totalorder %s15, 1
    %p45 = por %p43, %p44
    %p46 = scmp.ne.s32.totalorder %s35, %s36
    %p47 = scmp.eq.s32.totalorder %s15, 0
    %p48 = por %p46, %p47
    %p49 = scmp.ne.s32.totalorder %s35, %s36
    %p50 = scmp.eq.s32.totalorder %s16, 1
    %p51 = por %p49, %p50
    %p53 = scmp.ne.s32.totalorder %s36, %s52
    %p54 = scmp.eq.s32.totalorder %s16, 0
    %p55 = por %p53, %p54
    %s56 = ssub.s32 %s18, %s25
    %p57 = scmp.eq.s32.totalorder %s56, 0
    %s59 = sadd.s32 %s58, 1
    %s60 = scalar_select %p57, %s58, %s59
    %p63 = pneg %p57
    %p64 = scmp.eq.s32.totalorder %s10, 1
    %p65 = por %p63, %p64
    %p66 = scmp.ne.s32.totalorder %s58, %s61
    %p67 = scmp.eq.s32.totalorder %s10, 0
    %p68 = por %p66, %p67
    %p69 = scmp.ne.s32.totalorder %s58, %s61
    %p70 = scmp.eq.s32.totalorder %s15, 1
    %p71 = por %p69, %p70
    %p72 = scmp.ne.s32.totalorder %s61, %s62
    %p73 = scmp.eq.s32.totalorder %s15, 0
    %p74 = por %p72, %p73
    %p75 = scmp.ne.s32.totalorder %s61, %s62
    %p76 = scmp.eq.s32.totalorder %s16, 1
    %p77 = por %p75, %p76
    %p79 = scmp.ne.s32.totalorder %s62, %s78
    %p80 = scmp.eq.s32.totalorder %s16, 0
    %p81 = por %p79, %p80
    %s82 = ssub.s32 %s18, %s25
    %p83 = scmp.eq.s32.totalorder %s82, 0
    %s85 = sadd.s32 %s84, 1
    %s86 = scalar_select %p83, %s84, %s85
    %p89 = pneg %p83
    %p90 = scmp.eq.s32.totalorder %s10, 1
    %p91 = por %p89, %p90
    %p92 = scmp.ne.s32.totalorder %s84, %s87
    %p93 = scmp.eq.s32.totalorder %s10, 0
    %p94 = por %p92, %p93
    %p95 = scmp.ne.s32.totalorder %s84, %s87
    %p96 = scmp.eq.s32.totalorder %s15, 1
    %p97 = por %p95, %p96
    %p98 = scmp.ne.s32.totalorder %s87, %s88
    %p99 = scmp.eq.s32.totalorder %s15, 0
    %p100 = por %p98, %p99
    %p101 = scmp.ne.s32.totalorder %s87, %s88
    %p102 = scmp.eq.s32.totalorder %s16, 1
    %p103 = por %p101, %p102
    %p105 = scmp.ne.s32.totalorder %s88, %s104
    %p106 = scmp.eq.s32.totalorder %s16, 0
    %p107 = por %p105, %p106
    %s108 = ssub.s32 %s18, %s25
    %p109 = scmp.eq.s32.totalorder %s108, 0
    %s111 = sadd.s32 %s110, 1
    %s112 = scalar_select %p109, %s110, %s111
    %p115 = pneg %p109
    %p116 = scmp.eq.s32.totalorder %s10, 1
    %p117 = por %p115, %p116
    %p118 = scmp.ne.s32.totalorder %s110, %s113
    %p119 = scmp.eq.s32.totalorder %s10, 0
    %p120 = por %p118, %p119
    %p121 = scmp.ne.s32.totalorder %s110, %s113
    %p122 = scmp.eq.s32.totalorder %s15, 1
    %p123 = por %p121, %p122
    %p124 = scmp.ne.s32.totalorder %s113, %s114
    %p125 = scmp.eq.s32.totalorder %s15, 0
    %p126 = por %p124, %p125
    %p127 = scmp.ne.s32.totalorder %s113, %s114
    %p128 = scmp.eq.s32.totalorder %s16, 1
    %p129 = por %p127, %p128
    %p131 = scmp.ne.s32.totalorder %s114, %s130
    %p132 = scmp.eq.s32.totalorder %s16, 0
    %p133 = por %p131, %p132
    %s134 = ssub.s32 %s17, %s29
    %s135 = ssub.s32 %s18, %s25
    %s136 = sor.u32 %s134, %s135
    %p137 = scmp.eq.s32.totalorder %s136, 0
    %s139 = sadd.s32 %s138, 1
    %s140 = scalar_select %p137, %s138, %s139
    %p143 = pneg %p137
    %p144 = scmp.eq.s32.totalorder %s10, 1
    %p145 = por %p143, %p144
    %p146 = scmp.ne.s32.totalorder %s138, %s141
    %p147 = scmp.eq.s32.totalorder %s10, 0
    %p148 = por %p146, %p147
    %p149 = scmp.ne.s32.totalorder %s138, %s141
    %p150 = scmp.eq.s32.totalorder %s15, 1
    %p151 = por %p149, %p150
    %p152 = scmp.ne.s32.totalorder %s141, %s142
    %p153 = scmp.eq.s32.totalorder %s15, 0
    %p154 = por %p152, %p153
    %p155 = scmp.ne.s32.totalorder %s141, %s142
    %p156 = scmp.eq.s32.totalorder %s16, 1
    %p157 = por %p155, %p156
    %p159 = scmp.ne.s32.totalorder %s142, %s158
    %p160 = scmp.eq.s32.totalorder %s16, 0
    %p161 = por %p159, %p160
    %p162 = scmp.le.s32.totalorder 1, %s10
    %p163 = scmp.lt.s32.totalorder %s10, 3
    %p164 = pnand %p162, %p163
    %p165 = pneg %p164
    // Predicated region
    $region9: #{custom_cnn_forward.3} parent=5 // pred_check
      _
    $region10: #{custom_cnn_forward.3} parent=5 // pred_check_branch
      %167 = sbr.rel (%p164) target = $region12
    $region11: #{custom_cnn_forward.3} parent=5 // pred_region
      %s168 = ssub.s32 %s10, 1
      // Predicated region
      $region13: #{custom_cnn_forward.3} parent=11 // pred_check
        %p169 = pneg %p74
      $region14: #{custom_cnn_forward.3} parent=11 // pred_check_branch
        %171 = sbr.rel (%p169) target = $region16
      $region15: #{custom_cnn_forward.3} parent=11 // pred_region
        %p172 = scmp.lt.s32.totalorder %s20, 0
        %s173 = scalar_select %p172, %s20, 0
        %s174 = smul.addr %s173, 4
        %s175 = scalar_lea.vmem %s1, %s174
      $region16: #{custom_cnn_forward.3} parent=11 // pred_fallthru
        _
      // Predicated region
      $region17: #{custom_cnn_forward.3} parent=11 // pred_check
        %p176 = pneg %p100
      $region18: #{custom_cnn_forward.3} parent=11 // pred_check_branch
        %178 = sbr.rel (%p176) target = $region20
      $region19: #{custom_cnn_forward.3} parent=11 // pred_region
        %p179 = scmp.lt.s32.totalorder %s20, 0
        %s180 = scalar_select %p179, %s20, 0
        %s181 = scalar_lea.vmem %s2, %s180
      $region20: #{custom_cnn_forward.3} parent=11 // pred_fallthru
        _
      // Predicated region
      $region21: #{custom_cnn_forward.3} parent=11 // pred_check
        %p182 = pneg %p126
      $region22: #{custom_cnn_forward.3} parent=11 // pred_check_branch
        %184 = sbr.rel (%p182) target = $region24
      $region23: #{custom_cnn_forward.3} parent=11 // pred_region
        %p185 = scmp.lt.s32.totalorder %s20, 0
        %s186 = scalar_select %p185, %s20, 0
        %s187 = scalar_lea.vmem %s3, %s186
      $region24: #{custom_cnn_forward.3} parent=11 // pred_fallthru
        _
    $region12: #{custom_cnn_forward.3} parent=5 // pred_fallthru
      _
    %p188 = scmp.lt.s32.totalorder %s10, 2
    // Predicated region
    $region25: #{custom_cnn_forward.3} parent=5 // pred_check
      %p189 = pneg %p188
    $region26: #{custom_cnn_forward.3} parent=5 // pred_check_branch
      %191 = sbr.rel (%p189) target = $region28
    $region27: #{custom_cnn_forward.3} parent=5 // pred_region
      // Predicated region
      $region29: #{custom_cnn_forward.3} parent=27 // pred_check
        %p192 = pneg %p42
      $region30: #{custom_cnn_forward.3} parent=27 // pred_check_branch
        %194 = sbr.rel (%p192) target = $region32
      $region31: #{custom_cnn_forward.3} parent=27 // pred_region
        %s195 = smul.u32 8, %s17
        %p196 = scmp.lt.s32.totalorder %s195, 15
        %s197 = scalar_select %p196, %s195, 15
        %s198 = smul.addr %s197, 2
        %s199 = smul.addr %s198, 4
        %s200 = scalar_lea.vmem %s0, %s199
        %s201 = smul.u32 8, %s17
      $region32: #{custom_cnn_forward.3} parent=27 // pred_fallthru
        _
    $region28: #{custom_cnn_forward.3} parent=5 // pred_fallthru
      _
    %p202 = scmp.le.s32.totalorder 1, %s10
    %p203 = scmp.lt.s32.totalorder %s10, 3
    %p204 = pnand %p202, %p203
    %p205 = pneg %p204
    // Predicated region
    $region33: #{custom_cnn_forward.3} parent=5 // pred_check
      _
    $region34: #{custom_cnn_forward.3} parent=5 // pred_check_branch
      %207 = sbr.rel (%p204) target = $region36
    $region35: #{custom_cnn_forward.3} parent=5 // pred_region
      %s208 = ssub.s32 %s10, 1
      %s209 = smul.u32 8, %s19
      %p210 = scmp.lt.s32.totalorder %s209, 15
      %s211 = scalar_select %p210, %s209, 15
      %s212 = smul.addr %s211, 2
      %s213 = smul.addr %s212, 4
      %s214 = scalar_lea.vmem %s0, %s213
      %p215 = pneg %p48
      %p216 = pneg %p45
      %p217 = scmp.lt.s32.totalorder %s20, 0
      %s218 = scalar_select %p217, %s20, 0
      %s219 = smul.addr %s218, 4
      %s220 = scalar_lea.vmem %s1, %s219
      %p221 = pneg %p74
      %p222 = pneg %p71
      %p223 = scmp.lt.s32.totalorder %s20, 0
      %s224 = scalar_select %p223, %s20, 0
      %s225 = scalar_lea.vmem %s2, %s224
      %p226 = pneg %p100
      %p227 = pneg %p97
      %p228 = scmp.lt.s32.totalorder %s20, 0
      %s229 = scalar_select %p228, %s20, 0
      %s230 = scalar_lea.vmem %s3, %s229
      %p231 = pneg %p126
      %p232 = pneg %p123
      %p233 = pneg %p154
      %p234 = pneg %p151
      %s235 = smul.u32 8, %s19
      %p236 = scmp.lt.s32.totalorder %s235, 15
      %s237 = scalar_select %p236, %s235, 15
      %p238 = scmp.lt.s32.totalorder %s20, 0
      %s239 = scalar_select %p238, %s20, 0
      %s240 = sadd.s32 %s239, %s237
      %s241 = smul.addr %s240, 4
      %s242 = scalar_lea.vmem %s4, %s241
      %s243 = smul.u32 8, %s19
      %p244 = scmp.lt.s32.totalorder %s243, 15
      %s245 = scalar_select %p244, %s243, 15
      %s246 = smul.addr %s245, 2
      %s247 = smul.addr %s246, 4
      %s248 = scalar_lea.vmem %s0, %s247
      %s249 = smul.u32 8, %s19
      %p250 = scmp.lt.s32.totalorder %s20, 0
      %s251 = scalar_select %p250, %s20, 0
      %s252 = smul.addr %s251, 4
      %s253 = scalar_lea.vmem %s1, %s252
      %p254 = scmp.lt.s32.totalorder %s20, 0
      %s255 = scalar_select %p254, %s20, 0
      %s256 = scalar_lea.vmem %s2, %s255
      %p257 = scmp.lt.s32.totalorder %s20, 0
      %s258 = scalar_select %p257, %s20, 0
      %s259 = scalar_lea.vmem %s3, %s258
      %s260 = smul.u32 8, %s19
      %p261 = scmp.lt.s32.totalorder %s260, 15
      %s262 = scalar_select %p261, %s260, 15
      %p263 = scmp.lt.s32.totalorder %s20, 0
      %s264 = scalar_select %p263, %s20, 0
      %s265 = sadd.s32 %s264, %s262
      %s266 = smul.addr %s265, 4
      %s267 = scalar_lea.vmem %s4, %s266
      %s268 = smul.u32 8, %s19
      %v270 = vld [vmem:[%s248] sm:$0xff]
      %v271 = vld [vmem:[%s248 + $0x8] sm:$0xff]
      %v272 = vld [vmem:[%s248 + $0x10] sm:$0xff]
      %v273 = vld [vmem:[%s248 + $0x18] sm:$0xff]
      %v274 = vld [vmem:[%s248 + $0x20] sm:$0xff]
      %v275 = vld [vmem:[%s248 + $0x28] sm:$0xff]
      %v276 = vld [vmem:[%s248 + $0x30] sm:$0xff]
      %v277 = vld [vmem:[%s248 + $0x38] sm:$0xff]
      %v278 = vld [vmem:[%s253] sm:$0xf]
      %v279 = vld [vmem:[%s253 + $0x4] sm:$0xf]
      %v280 = vld [vmem:[%s253 + $0x8] sm:$0xf]
      %v281 = vld [vmem:[%s253 + $0xc] sm:$0xf]
      %v282 = vld [vmem:[%s253 + $0x10] sm:$0xf]
      %v283 = vld [vmem:[%s253 + $0x14] sm:$0xf]
      %v284 = vld [vmem:[%s253 + $0x18] sm:$0xf]
      %v285 = vld [vmem:[%s253 + $0x1c] sm:$0xf]
      %v286 = vld [vmem:[%s253 + $0x20] sm:$0xf]
      %v287 = vld [vmem:[%s253 + $0x24] sm:$0xf]
      %v288 = vld [vmem:[%s253 + $0x28] sm:$0xf]
      %v289 = vld [vmem:[%s253 + $0x2c] sm:$0xf]
      %v290 = vld [vmem:[%s253 + $0x30] sm:$0xf]
      %v291 = vld [vmem:[%s253 + $0x34] sm:$0xf]
      %v292 = vld [vmem:[%s253 + $0x38] sm:$0xf]
      %v293 = vld [vmem:[%s253 + $0x3c] sm:$0xf]
      %v294 = vld [vmem:[%s253 + $0x40] sm:$0xf]
      %v295 = vld [vmem:[%s253 + $0x44] sm:$0xf]
      %v296 = vld [vmem:[%s253 + $0x48] sm:$0xf]
      %v297 = vld [vmem:[%s253 + $0x4c] sm:$0xf]
      %v298 = vld [vmem:[%s253 + $0x50] sm:$0xf]
      %v299 = vld [vmem:[%s253 + $0x54] sm:$0xf]
      %v300 = vld [vmem:[%s253 + $0x58] sm:$0xf]
      %v301 = vld [vmem:[%s253 + $0x5c] sm:$0xf]
      %v302 = vld [vmem:[%s253 + $0x60] sm:$0xf]
      %v303 = vld [vmem:[%s253 + $0x64] sm:$0xf]
      %v304 = vld [vmem:[%s253 + $0x68] sm:$0xf]
      %v305 = vld [vmem:[%s253 + $0x6c] sm:$0xf]
      %v306 = vld [vmem:[%s253 + $0x70] sm:$0xf]
      %v307 = vld [vmem:[%s253 + $0x74] sm:$0xf]
      %v308 = vld [vmem:[%s253 + $0x78] sm:$0xf]
      %v309 = vld [vmem:[%s253 + $0x7c] sm:$0xf]
      %v318 = vunpack.c.l.b16 %v270
      %v319 = vunpack.c.h.b16 %v270
      %v320 = vunpack.c.l.b16 %v271
      %v321 = vunpack.c.h.b16 %v271
      %v322 = vunpack.c.l.b16 %v272
      %v323 = vunpack.c.h.b16 %v272
      %v324 = vunpack.c.l.b16 %v273
      %v325 = vunpack.c.h.b16 %v273
      %v326 = vunpack.c.l.b16 %v274
      %v327 = vunpack.c.h.b16 %v274
      %v328 = vunpack.c.l.b16 %v275
      %v329 = vunpack.c.h.b16 %v275
      %v330 = vunpack.c.l.b16 %v276
      %v331 = vunpack.c.h.b16 %v276
      %v332 = vunpack.c.l.b16 %v277
      %v333 = vunpack.c.h.b16 %v277
      %v334 = vpack.c.b16 %v320, %v318
      %v335 = vpack.c.b16 %v321, %v319
      %v336 = vpack.c.b16 %v324, %v322
      %v337 = vpack.c.b16 %v325, %v323
      %v338 = vpack.c.b16 %v328, %v326
      %v339 = vpack.c.b16 %v329, %v327
      %v340 = vpack.c.b16 %v332, %v330
      %v341 = vpack.c.b16 %v333, %v331
      %v382 = vunpack.c.l.b16 %v278
      %v383 = vunpack.c.l.b16 %v279
      %v384 = vunpack.c.l.b16 %v280
      %v385 = vunpack.c.l.b16 %v281
      %v386 = vunpack.c.l.b16 %v282
      %v387 = vunpack.c.l.b16 %v283
      %v388 = vunpack.c.l.b16 %v284
      %v389 = vunpack.c.l.b16 %v285
      %v390 = vunpack.c.l.b16 %v286
      %v391 = vunpack.c.l.b16 %v287
      %v392 = vunpack.c.l.b16 %v288
      %v393 = vunpack.c.l.b16 %v289
      %v394 = vunpack.c.l.b16 %v290
      %v395 = vunpack.c.l.b16 %v291
      %v396 = vunpack.c.l.b16 %v292
      %v397 = vunpack.c.l.b16 %v293
      %v398 = vunpack.c.l.b16 %v294
      %v399 = vunpack.c.l.b16 %v295
      %v400 = vunpack.c.l.b16 %v296
      %v401 = vunpack.c.l.b16 %v297
      %v402 = vunpack.c.l.b16 %v298
      %v403 = vunpack.c.l.b16 %v299
      %v404 = vunpack.c.l.b16 %v300
      %v405 = vunpack.c.l.b16 %v301
      %v406 = vunpack.c.l.b16 %v302
      %v407 = vunpack.c.l.b16 %v303
      %v408 = vunpack.c.l.b16 %v304
      %v409 = vunpack.c.l.b16 %v305
      %v410 = vunpack.c.l.b16 %v306
      %v411 = vunpack.c.l.b16 %v307
      %v412 = vunpack.c.l.b16 %v308
      %v413 = vunpack.c.l.b16 %v309
      %v414 = vpack.c.b16 %v383, %v382
      %v415 = vpack.c.b16 %v385, %v384
      %v416 = vpack.c.b16 %v387, %v386
      %v417 = vpack.c.b16 %v389, %v388
      %v418 = vpack.c.b16 %v391, %v390
      %v419 = vpack.c.b16 %v393, %v392
      %v420 = vpack.c.b16 %v395, %v394
      %v421 = vpack.c.b16 %v397, %v396
      %v422 = vpack.c.b16 %v399, %v398
      %v423 = vpack.c.b16 %v401, %v400
      %v424 = vpack.c.b16 %v403, %v402
      %v425 = vpack.c.b16 %v405, %v404
      %v426 = vpack.c.b16 %v407, %v406
      %v427 = vpack.c.b16 %v409, %v408
      %v428 = vpack.c.b16 %v411, %v410
      %v429 = vpack.c.b16 %v413, %v412
      %446 = vmatprep.subr.bf16.mxu0 0
      %447 = vmatpush1.bf16.msra.mxu0 %v414
      %448 = vmatprep.subr.bf16.mxu0 0
      %449 = vmatpush1.bf16.msra.mxu0 %v415
      %450 = vmatprep.subr.bf16.mxu0 0
      %451 = vmatpush1.bf16.msra.mxu0 %v416
      %452 = vmatprep.subr.bf16.mxu0 0
      %453 = vmatpush1.bf16.msra.mxu0 %v417
      %454 = vmatprep.subr.bf16.mxu0 0
      %455 = vmatpush1.bf16.msra.mxu0 %v418
      %456 = vmatprep.subr.bf16.mxu0 0
      %457 = vmatpush1.bf16.msra.mxu0 %v419
      %458 = vmatprep.subr.bf16.mxu0 0
      %459 = vmatpush1.bf16.msra.mxu0 %v420
      %460 = vmatprep.subr.bf16.mxu0 0
      %461 = vmatpush1.bf16.msra.mxu0 %v421
      %462 = vmatprep.subr.bf16.mxu0 0
      %463 = vmatpush1.bf16.msra.mxu0 %v422
      %464 = vmatprep.subr.bf16.mxu0 0
      %465 = vmatpush1.bf16.msra.mxu0 %v423
      %466 = vmatprep.subr.bf16.mxu0 0
      %467 = vmatpush1.bf16.msra.mxu0 %v424
      %468 = vmatprep.subr.bf16.mxu0 0
      %469 = vmatpush1.bf16.msra.mxu0 %v425
      %470 = vmatprep.subr.bf16.mxu0 0
      %471 = vmatpush1.bf16.msra.mxu0 %v426
      %472 = vmatprep.subr.bf16.mxu0 0
      %473 = vmatpush1.bf16.msra.mxu0 %v427
      %474 = vmatprep.subr.bf16.mxu0 0
      %475 = vmatpush1.bf16.msra.mxu0 %v428
      %476 = vmatprep.subr.bf16.mxu0 0
      %477 = vmatpush1.bf16.msra.mxu0 %v429
      %478 = vmatprep.mubr.bf16.mxu0 %v335
      %479 = vmatmul.mubr.bf16.gmra.mrb[0].mxu0 %v334
      %v480 = vpop.f32.mrb[0].mxu0
      %v481 = vadd.f32 0.0, %v480
      %v482 = vpop.f32.mrb[0].mxu0
      %v483 = vpop.f32.mrb[0].mxu0
      %v484 = vadd.f32 0.0, %v483
      %v485 = vpop.f32.mrb[0].mxu0
      %486 = vmatprep.mubr.bf16.mxu0 %v337
      %487 = vmatmul.mubr.bf16.gmra.mrb[0].mxu0 %v336
      %v488 = vpop.f32.mrb[0].mxu0
      %v489 = vadd.f32 0.0, %v488
      %v490 = vpop.f32.mrb[0].mxu0
      %v491 = vpop.f32.mrb[0].mxu0
      %v492 = vadd.f32 0.0, %v491
      %v493 = vpop.f32.mrb[0].mxu0
      %494 = vmatprep.mubr.bf16.mxu0 %v339
      %495 = vmatmul.mubr.bf16.gmra.mrb[0].mxu0 %v338
      %v496 = vpop.f32.mrb[0].mxu0
      %v497 = vadd.f32 0.0, %v496
      %v498 = vpop.f32.mrb[0].mxu0
      %v499 = vpop.f32.mrb[0].mxu0
      %v500 = vadd.f32 0.0, %v499
      %v501 = vpop.f32.mrb[0].mxu0
      %502 = vmatprep.mubr.bf16.mxu0 %v341
      %503 = vmatmul.mubr.bf16.gmra.mrb[0].mxu0 %v340
      %v504 = vpop.f32.mrb[0].mxu0
      %v505 = vadd.f32 0.0, %v504
      %v506 = vpop.f32.mrb[0].mxu0
      %v507 = vpop.f32.mrb[0].mxu0
      %v508 = vadd.f32 0.0, %v507
      %v509 = vpop.f32.mrb[0].mxu0
      %510 = vdwg.mxu0
      %v511 = vld [vmem:[%s256] sm:$0x1]
      %v513 = vlaneseq
      %v514 = vshrl.u32 %v513, 7
      %v515 = vsub.s32 0, %v514
      %v516 = vrot.slane %v511, %v515
      %v518 = vmul.f32 %v481, %v516
      %v519 = vmul.f32 %v484, %v516
      %v520 = vmul.f32 %v489, %v516
      %v521 = vmul.f32 %v492, %v516
      %v522 = vmul.f32 %v497, %v516
      %v523 = vmul.f32 %v500, %v516
      %v524 = vmul.f32 %v505, %v516
      %v525 = vmul.f32 %v508, %v516
      %v526 = vld [vmem:[%s259] sm:$0x1]
      %v528 = vlaneseq
      %v529 = vshrl.u32 %v528, 7
      %v530 = vsub.s32 0, %v529
      %v531 = vrot.slane %v526, %v530
      %v533 = vadd.f32 %v518, %v531
      %v534 = vadd.f32 %v519, %v531
      %v535 = vadd.f32 %v520, %v531
      %v536 = vadd.f32 %v521, %v531
      %v537 = vadd.f32 %v522, %v531
      %v538 = vadd.f32 %v523, %v531
      %v539 = vadd.f32 %v524, %v531
      %v540 = vadd.f32 %v525, %v531
      %v541 = vmax.f32 %v533, 0.0
      %v542 = vmax.f32 %v534, 0.0
      %v543 = vmax.f32 %v535, 0.0
      %v544 = vmax.f32 %v536, 0.0
      %v545 = vmax.f32 %v537, 0.0
      %v546 = vmax.f32 %v538, 0.0
      %v547 = vmax.f32 %v539, 0.0
      %v548 = vmax.f32 %v540, 0.0
      %v549 = vpack.c.bf16 %v542, %v541
      %v550 = vpack.c.bf16 %v544, %v543
      %v551 = vpack.c.bf16 %v546, %v545
      %v552 = vpack.c.bf16 %v548, %v547
      %v557 = vunpack.c.l.b16 %v549
      %v558 = vunpack.c.h.b16 %v549
      %v559 = vunpack.c.l.b16 %v550
      %v560 = vunpack.c.h.b16 %v550
      %v561 = vunpack.c.l.b16 %v551
      %v562 = vunpack.c.h.b16 %v551
      %v563 = vunpack.c.l.b16 %v552
      %v564 = vunpack.c.h.b16 %v552
      %v565 = vpack.c.b16 %v557, %v557
      %v566 = vpack.c.b16 %v558, %v558
      %v567 = vpack.c.b16 %v559, %v559
      %v568 = vpack.c.b16 %v560, %v560
      %v569 = vpack.c.b16 %v561, %v561
      %v570 = vpack.c.b16 %v562, %v562
      %v571 = vpack.c.b16 %v563, %v563
      %v572 = vpack.c.b16 %v564, %v564
      %581 = vst [vmem:[%s267] sm:$0xf] %v565
      %582 = vst [vmem:[%s267 + $0x4] sm:$0xf] %v566
      %583 = vst [vmem:[%s267 + $0x8] sm:$0xf] %v567
      %584 = vst [vmem:[%s267 + $0xc] sm:$0xf] %v568
      %585 = vst [vmem:[%s267 + $0x10] sm:$0xf] %v569
      %586 = vst [vmem:[%s267 + $0x14] sm:$0xf] %v570
      %587 = vst [vmem:[%s267 + $0x18] sm:$0xf] %v571
      %588 = vst [vmem:[%s267 + $0x1c] sm:$0xf] %v572
      %s589 = smul.u32 8, %s19
      %p590 = scmp.lt.s32.totalorder %s589, 15
      %s591 = scalar_select %p590, %s589, 15
      %p592 = scmp.lt.s32.totalorder %s20, 0
      %s593 = scalar_select %p592, %s20, 0
      %s594 = sadd.s32 %s593, %s591
      %s595 = smul.addr %s594, 4
      %s596 = scalar_lea.vmem %s4, %s595
      // Predicated region
      $region37: #{custom_cnn_forward.3} parent=35 // pred_check
        %p597 = pneg %p151
      $region38: #{custom_cnn_forward.3} parent=35 // pred_check_branch
        %599 = sbr.rel (%p597) target = $region40
      $region39: #{custom_cnn_forward.3} parent=35 // pred_region
        %s600 = smul.u32 8, %s19
      $region40: #{custom_cnn_forward.3} parent=35 // pred_fallthru
        _
    $region36: #{custom_cnn_forward.3} parent=5 // pred_fallthru
      _
    %p601 = scmp.le.s32.totalorder 2, %s10
    // Predicated region
    $region41: #{custom_cnn_forward.3} parent=5 // pred_check
      %p602 = pneg %p601
    $region42: #{custom_cnn_forward.3} parent=5 // pred_check_branch
      %604 = sbr.rel (%p602) target = $region44
    $region43: #{custom_cnn_forward.3} parent=5 // pred_region
      %s605 = ssub.s32 %s10, 2
      // Predicated region
      $region45: #{custom_cnn_forward.3} parent=43 // pred_check
        %p606 = pneg %p157
      $region46: #{custom_cnn_forward.3} parent=43 // pred_check_branch
        %608 = sbr.rel (%p606) target = $region48
      $region47: #{custom_cnn_forward.3} parent=43 // pred_region
        %s609 = smul.u32 8, %s21
        %p610 = scmp.lt.s32.totalorder %s609, 15
        %s611 = scalar_select %p610, %s609, 15
        %p612 = scmp.lt.s32.totalorder %s22, 0
        %s613 = scalar_select %p612, %s22, 0
        %s614 = sadd.s32 %s613, %s611
        %s615 = smul.addr %s614, 4
        %s616 = scalar_lea.vmem %s4, %s615
      $region48: #{custom_cnn_forward.3} parent=43 // pred_fallthru
        _
    $region44: #{custom_cnn_forward.3} parent=5 // pred_fallthru
      _
  $region6: #{custom_cnn_forward.3} parent=0 // loop_footer
    %s14 = sadd.s32 1, %s10
  $region7: #{custom_cnn_forward.3} parent=0 // loop_footer_branch
    %9 = sbr.rel target = $region3
  $region8: #{custom_cnn_forward.3} parent=0 // loop_exit
    _

// kernel: custom_cnn_forward.4
$region0: #{custom_cnn_forward.4}
  #allocation0 [shape = 'u32[]', space=smem, size = 0x4, offset = 0x4, fixed_abs, tag = 'smem constant byte address 0x4 - core index']
  #allocation1 [shape = 'u32[144,128]{1,0:T(1,128)}', space=vmem, size = 0x12000, scoped, tag = 'internal scratch']
  %s0 = inlined_call_operand.vmem [shape: bf16[32,1664], index: 0, kind: input, shape index: {}]
  %s1 = inlined_call_operand.vmem [shape: bf16[1664,128], index: 1, kind: input, shape index: {}]
  %s2 = inlined_call_operand.vmem [shape: f32[1,128], index: 2, kind: input, shape index: {}]
  %s3 = inlined_call_operand.vmem [shape: f32[1,128], index: 3, kind: input, shape index: {}]
  %s4 = inlined_call_operand.vmem [shape: bf16[32,128], index: 4, kind: output, shape index: {}]
  %s5 = sld [smem:[#allocation0]]
  $region49: #{custom_cnn_forward.4} parent=0
    _
  %s7 = ssub.s32 1, %s5
  %s8 = scalar_select 0, %s7, %s5
  loop: start=0, step=1, limit=4
  $region2: #{custom_cnn_forward.4} parent=0 // loop_pre_header
    _
  $region3: #{custom_cnn_forward.4} parent=0 // loop_header
    %s10 = sphi 0, %s14
    %p11 = scmp.ge.s32.totalorder %s10, 4
    %s17 = sphi 0, %s29
    %s18 = sphi 0, %s25
    %s19 = sphi 0, %s17
    %s20 = sphi 0, %s18
    %s21 = sphi 0, %s19
    %s22 = sphi 0, %s20
    %s32 = sphi 0, %s34
    %s35 = sphi 0, %s32
    %s36 = sphi 0, %s35
    %s52 = sphi 0, %s36
    %s58 = sphi 0, %s60
    %s61 = sphi 0, %s58
    %s62 = sphi 0, %s61
    %s78 = sphi 0, %s62
    %s84 = sphi 0, %s86
    %s87 = sphi 0, %s84
    %s88 = sphi 0, %s87
    %s104 = sphi 0, %s88
    %s110 = sphi 0, %s112
    %s113 = sphi 0, %s110
    %s114 = sphi 0, %s113
    %s130 = sphi 0, %s114
    %s138 = sphi 0, %s140
    %s141 = sphi 0, %s138
    %s142 = sphi 0, %s141
    %s158 = sphi 0, %s142
  $region4: #{custom_cnn_forward.4} parent=0 // loop_header_branch
    %13 = sbr.rel (%p11) target = $region8
  $region5: #{custom_cnn_forward.4} parent=0 // loop_body
    %s15 = ssub.s32 %s10, 1
    %s16 = ssub.s32 %s10, 2
    %s23 = sadd.s32 1, %s18
    %p24 = scmp.ge.s32.totalorder %s23, 1
    %s25 = scalar_select %p24, 0, %s23
    %s26 = sadd.s32 1, %s17
    %s27 = scalar_select %p24, %s26, %s17
    %p28 = scmp.ge.s32.totalorder %s27, 2
    %s29 = scalar_select %p28, 0, %s27
    %s30 = ssub.s32 %s17, %s29
    %p31 = scmp.eq.s32.totalorder %s30, 0
    %s33 = sadd.s32 %s32, 1
    %s34 = scalar_select %p31, %s32, %s33
    %p37 = pneg %p31
    %p38 = scmp.eq.s32.totalorder %s10, 1
    %p39 = por %p37, %p38
    %p40 = scmp.ne.s32.totalorder %s32, %s35
    %p41 = scmp.eq.s32.totalorder %s10, 0
    %p42 = por %p40, %p41
    %p43 = scmp.ne.s32.totalorder %s32, %s35
    %p44 = scmp.eq.s32.totalorder %s15, 1
    %p45 = por %p43, %p44
    %p46 = scmp.ne.s32.totalorder %s35, %s36
    %p47 = scmp.eq.s32.totalorder %s15, 0
    %p48 = por %p46, %p47
    %p49 = scmp.ne.s32.totalorder %s35, %s36
    %p50 = scmp.eq.s32.totalorder %s16, 1
    %p51 = por %p49, %p50
    %p53 = scmp.ne.s32.totalorder %s36, %s52
    %p54 = scmp.eq.s32.totalorder %s16, 0
    %p55 = por %p53, %p54
    %s56 = ssub.s32 %s18, %s25
    %p57 = scmp.eq.s32.totalorder %s56, 0
    %s59 = sadd.s32 %s58, 1
    %s60 = scalar_select %p57, %s58, %s59
    %p63 = pneg %p57
    %p64 = scmp.eq.s32.totalorder %s10, 1
    %p65 = por %p63, %p64
    %p66 = scmp.ne.s32.totalorder %s58, %s61
    %p67 = scmp.eq.s32.totalorder %s10, 0
    %p68 = por %p66, %p67
    %p69 = scmp.ne.s32.totalorder %s58, %s61
    %p70 = scmp.eq.s32.totalorder %s15, 1
    %p71 = por %p69, %p70
    %p72 = scmp.ne.s32.totalorder %s61, %s62
    %p73 = scmp.eq.s32.totalorder %s15, 0
    %p74 = por %p72, %p73
    %p75 = scmp.ne.s32.totalorder %s61, %s62
    %p76 = scmp.eq.s32.totalorder %s16, 1
    %p77 = por %p75, %p76
    %p79 = scmp.ne.s32.totalorder %s62, %s78
    %p80 = scmp.eq.s32.totalorder %s16, 0
    %p81 = por %p79, %p80
    %s82 = ssub.s32 %s18, %s25
    %p83 = scmp.eq.s32.totalorder %s82, 0
    %s85 = sadd.s32 %s84, 1
    %s86 = scalar_select %p83, %s84, %s85
    %p89 = pneg %p83
    %p90 = scmp.eq.s32.totalorder %s10, 1
    %p91 = por %p89, %p90
    %p92 = scmp.ne.s32.totalorder %s84, %s87
    %p93 = scmp.eq.s32.totalorder %s10, 0
    %p94 = por %p92, %p93
    %p95 = scmp.ne.s32.totalorder %s84, %s87
    %p96 = scmp.eq.s32.totalorder %s15, 1
    %p97 = por %p95, %p96
    %p98 = scmp.ne.s32.totalorder %s87, %s88
    %p99 = scmp.eq.s32.totalorder %s15, 0
    %p100 = por %p98, %p99
    %p101 = scmp.ne.s32.totalorder %s87, %s88
    %p102 = scmp.eq.s32.totalorder %s16, 1
    %p103 = por %p101, %p102
    %p105 = scmp.ne.s32.totalorder %s88, %s104
    %p106 = scmp.eq.s32.totalorder %s16, 0
    %p107 = por %p105, %p106
    %s108 = ssub.s32 %s18, %s25
    %p109 = scmp.eq.s32.totalorder %s108, 0
    %s111 = sadd.s32 %s110, 1
    %s112 = scalar_select %p109, %s110, %s111
    %p115 = pneg %p109
    %p116 = scmp.eq.s32.totalorder %s10, 1
    %p117 = por %p115, %p116
    %p118 = scmp.ne.s32.totalorder %s110, %s113
    %p119 = scmp.eq.s32.totalorder %s10, 0
    %p120 = por %p118, %p119
    %p121 = scmp.ne.s32.totalorder %s110, %s113
    %p122 = scmp.eq.s32.totalorder %s15, 1
    %p123 = por %p121, %p122
    %p124 = scmp.ne.s32.totalorder %s113, %s114
    %p125 = scmp.eq.s32.totalorder %s15, 0
    %p126 = por %p124, %p125
    %p127 = scmp.ne.s32.totalorder %s113, %s114
    %p128 = scmp.eq.s32.totalorder %s16, 1
    %p129 = por %p127, %p128
    %p131 = scmp.ne.s32.totalorder %s114, %s130
    %p132 = scmp.eq.s32.totalorder %s16, 0
    %p133 = por %p131, %p132
    %s134 = ssub.s32 %s17, %s29
    %s135 = ssub.s32 %s18, %s25
    %s136 = sor.u32 %s134, %s135
    %p137 = scmp.eq.s32.totalorder %s136, 0
    %s139 = sadd.s32 %s138, 1
    %s140 = scalar_select %p137, %s138, %s139
    %p143 = pneg %p137
    %p144 = scmp.eq.s32.totalorder %s10, 1
    %p145 = por %p143, %p144
    %p146 = scmp.ne.s32.totalorder %s138, %s141
    %p147 = scmp.eq.s32.totalorder %s10, 0
    %p148 = por %p146, %p147
    %p149 = scmp.ne.s32.totalorder %s138, %s141
    %p150 = scmp.eq.s32.totalorder %s15, 1
    %p151 = por %p149, %p150
    %p152 = scmp.ne.s32.totalorder %s141, %s142
    %p153 = scmp.eq.s32.totalorder %s15, 0
    %p154 = por %p152, %p153
    %p155 = scmp.ne.s32.totalorder %s141, %s142
    %p156 = scmp.eq.s32.totalorder %s16, 1
    %p157 = por %p155, %p156
    %p159 = scmp.ne.s32.totalorder %s142, %s158
    %p160 = scmp.eq.s32.totalorder %s16, 0
    %p161 = por %p159, %p160
    %p162 = scmp.le.s32.totalorder 1, %s10
    %p163 = scmp.lt.s32.totalorder %s10, 3
    %p164 = pnand %p162, %p163
    %p165 = pneg %p164
    // Predicated region
    $region9: #{custom_cnn_forward.4} parent=5 // pred_check
      _
    $region10: #{custom_cnn_forward.4} parent=5 // pred_check_branch
      %167 = sbr.rel (%p164) target = $region12
    $region11: #{custom_cnn_forward.4} parent=5 // pred_region
      %s168 = ssub.s32 %s10, 1
      // Predicated region
      $region13: #{custom_cnn_forward.4} parent=11 // pred_check
        %p169 = pneg %p74
      $region14: #{custom_cnn_forward.4} parent=11 // pred_check_branch
        %171 = sbr.rel (%p169) target = $region16
      $region15: #{custom_cnn_forward.4} parent=11 // pred_region
        %p172 = scmp.lt.s32.totalorder %s20, 0
        %s173 = scalar_select %p172, %s20, 0
        %s174 = smul.addr %s173, 4
        %s175 = scalar_lea.vmem %s1, %s174
      $region16: #{custom_cnn_forward.4} parent=11 // pred_fallthru
        _
      // Predicated region
      $region17: #{custom_cnn_forward.4} parent=11 // pred_check
        %p176 = pneg %p100
      $region18: #{custom_cnn_forward.4} parent=11 // pred_check_branch
        %178 = sbr.rel (%p176) target = $region20
      $region19: #{custom_cnn_forward.4} parent=11 // pred_region
        %p179 = scmp.lt.s32.totalorder %s20, 0
        %s180 = scalar_select %p179, %s20, 0
        %s181 = scalar_lea.vmem %s2, %s180
      $region20: #{custom_cnn_forward.4} parent=11 // pred_fallthru
        _
      // Predicated region
      $region21: #{custom_cnn_forward.4} parent=11 // pred_check
        %p182 = pneg %p126
      $region22: #{custom_cnn_forward.4} parent=11 // pred_check_branch
        %184 = sbr.rel (%p182) target = $region24
      $region23: #{custom_cnn_forward.4} parent=11 // pred_region
        %p185 = scmp.lt.s32.totalorder %s20, 0
        %s186 = scalar_select %p185, %s20, 0
        %s187 = scalar_lea.vmem %s3, %s186
      $region24: #{custom_cnn_forward.4} parent=11 // pred_fallthru
        _
    $region12: #{custom_cnn_forward.4} parent=5 // pred_fallthru
      _
    %p188 = scmp.lt.s32.totalorder %s10, 2
    // Predicated region
    $region25: #{custom_cnn_forward.4} parent=5 // pred_check
      %p189 = pneg %p188
    $region26: #{custom_cnn_forward.4} parent=5 // pred_check_branch
      %191 = sbr.rel (%p189) target = $region28
    $region27: #{custom_cnn_forward.4} parent=5 // pred_region
      // Predicated region
      $region29: #{custom_cnn_forward.4} parent=27 // pred_check
        %p192 = pneg %p42
      $region30: #{custom_cnn_forward.4} parent=27 // pred_check_branch
        %194 = sbr.rel (%p192) target = $region32
      $region31: #{custom_cnn_forward.4} parent=27 // pred_region
        %s195 = smul.u32 2, %s17
        %p196 = scmp.lt.s32.totalorder %s195, 3
        %s197 = scalar_select %p196, %s195, 3
        %s198 = smul.addr %s197, 13
        %s199 = smul.addr %s198, 4
        %s200 = scalar_lea.vmem %s0, %s199
        %s201 = smul.u32 2, %s17
      $region32: #{custom_cnn_forward.4} parent=27 // pred_fallthru
        _
    $region28: #{custom_cnn_forward.4} parent=5 // pred_fallthru
      _
    %p202 = scmp.le.s32.totalorder 1, %s10
    %p203 = scmp.lt.s32.totalorder %s10, 3
    %p204 = pnand %p202, %p203
    %p205 = pneg %p204
    // Predicated region
    $region33: #{custom_cnn_forward.4} parent=5 // pred_check
      _
    $region34: #{custom_cnn_forward.4} parent=5 // pred_check_branch
      %207 = sbr.rel (%p204) target = $region36
    $region35: #{custom_cnn_forward.4} parent=5 // pred_region
      %s208 = ssub.s32 %s10, 1
      %s209 = smul.u32 2, %s19
      %p210 = scmp.lt.s32.totalorder %s209, 3
      %s211 = scalar_select %p210, %s209, 3
      %s212 = smul.addr %s211, 13
      %s213 = smul.addr %s212, 4
      %s214 = scalar_lea.vmem %s0, %s213
      %p215 = pneg %p48
      %p216 = pneg %p45
      %p217 = scmp.lt.s32.totalorder %s20, 0
      %s218 = scalar_select %p217, %s20, 0
      %s219 = smul.addr %s218, 4
      %s220 = scalar_lea.vmem %s1, %s219
      %p221 = pneg %p74
      %p222 = pneg %p71
      %p223 = scmp.lt.s32.totalorder %s20, 0
      %s224 = scalar_select %p223, %s20, 0
      %s225 = scalar_lea.vmem %s2, %s224
      %p226 = pneg %p100
      %p227 = pneg %p97
      %p228 = scmp.lt.s32.totalorder %s20, 0
      %s229 = scalar_select %p228, %s20, 0
      %s230 = scalar_lea.vmem %s3, %s229
      %p231 = pneg %p126
      %p232 = pneg %p123
      %p233 = pneg %p154
      %p234 = pneg %p151
      %s235 = smul.u32 2, %s19
      %p236 = scmp.lt.s32.totalorder %s235, 3
      %s237 = scalar_select %p236, %s235, 3
      %p238 = scmp.lt.s32.totalorder %s20, 0
      %s239 = scalar_select %p238, %s20, 0
      %s240 = sadd.s32 %s239, %s237
      %s241 = smul.addr %s240, 4
      %s242 = scalar_lea.vmem %s4, %s241
      %s243 = smul.u32 2, %s19
      %p244 = scmp.lt.s32.totalorder %s243, 3
      %s245 = scalar_select %p244, %s243, 3
      %s246 = smul.addr %s245, 13
      %s247 = smul.addr %s246, 4
      %s248 = scalar_lea.vmem %s0, %s247
      %s249 = smul.u32 2, %s19
      %p250 = scmp.lt.s32.totalorder %s20, 0
      %s251 = scalar_select %p250, %s20, 0
      %s252 = smul.addr %s251, 4
      %s253 = scalar_lea.vmem %s1, %s252
      %p254 = scmp.lt.s32.totalorder %s20, 0
      %s255 = scalar_select %p254, %s20, 0
      %s256 = scalar_lea.vmem %s2, %s255
      %p257 = scmp.lt.s32.totalorder %s20, 0
      %s258 = scalar_select %p257, %s20, 0
      %s259 = scalar_lea.vmem %s3, %s258
      %s260 = smul.u32 2, %s19
      %p261 = scmp.lt.s32.totalorder %s260, 3
      %s262 = scalar_select %p261, %s260, 3
      %p263 = scmp.lt.s32.totalorder %s20, 0
      %s264 = scalar_select %p263, %s20, 0
      %s265 = sadd.s32 %s264, %s262
      %s266 = smul.addr %s265, 4
      %s267 = scalar_lea.vmem %s4, %s266
      %s268 = smul.u32 2, %s19
      %v270 = vld [vmem:[%s248] sm:$0xff]
      %v271 = vld [vmem:[%s248 + $0x8] sm:$0xff]
      %v272 = vld [vmem:[%s248 + $0x10] sm:$0xff]
      %v273 = vld [vmem:[%s248 + $0x18] sm:$0xff]
      %v274 = vld [vmem:[%s248 + $0x20] sm:$0xff]
      %v275 = vld [vmem:[%s248 + $0x28] sm:$0xff]
      %v276 = vld [vmem:[%s248 + $0x30] sm:$0xf]
      %v277 = vld [vmem:[%s248 + $0x34] sm:$0xff]
      %v278 = vld [vmem:[%s248 + $0x3c] sm:$0xff]
      %v279 = vld [vmem:[%s248 + $0x44] sm:$0xff]
      %v280 = vld [vmem:[%s248 + $0x4c] sm:$0xff]
      %v281 = vld [vmem:[%s248 + $0x54] sm:$0xff]
      %v282 = vld [vmem:[%s248 + $0x5c] sm:$0xff]
      %v283 = vld [vmem:[%s248 + $0x64] sm:$0xf]
      %v284 = vld [vmem:[%s253] sm:$0xf]
      %v285 = vld [vmem:[%s253 + $0x4] sm:$0xf]
      %v286 = vld [vmem:[%s253 + $0x8] sm:$0xf]
      %v287 = vld [vmem:[%s253 + $0xc] sm:$0xf]
      %v288 = vld [vmem:[%s253 + $0x10] sm:$0xf]
      %v289 = vld [vmem:[%s253 + $0x14] sm:$0xf]
      %v290 = vld [vmem:[%s253 + $0x18] sm:$0xf]
      %v291 = vld [vmem:[%s253 + $0x1c] sm:$0xf]
      %v292 = vld [vmem:[%s253 + $0x20] sm:$0xf]
      %v293 = vld [vmem:[%s253 + $0x24] sm:$0xf]
      %v294 = vld [vmem:[%s253 + $0x28] sm:$0xf]
      %v295 = vld [vmem:[%s253 + $0x2c] sm:$0xf]
      %v296 = vld [vmem:[%s253 + $0x30] sm:$0xf]
      %v297 = vld [vmem:[%s253 + $0x34] sm:$0xf]
      %v298 = vld [vmem:[%s253 + $0x38] sm:$0xf]
      %v299 = vld [vmem:[%s253 + $0x3c] sm:$0xf]
      %v300 = vld [vmem:[%s253 + $0x40] sm:$0xf]
      %v301 = vld [vmem:[%s253 + $0x44] sm:$0xf]
      %v302 = vld [vmem:[%s253 + $0x48] sm:$0xf]
      %v303 = vld [vmem:[%s253 + $0x4c] sm:$0xf]
      %v304 = vld [vmem:[%s253 + $0x50] sm:$0xf]
      %v305 = vld [vmem:[%s253 + $0x54] sm:$0xf]
      %v306 = vld [vmem:[%s253 + $0x58] sm:$0xf]
      %v307 = vld [vmem:[%s253 + $0x5c] sm:$0xf]
      %v308 = vld [vmem:[%s253 + $0x60] sm:$0xf]
      %v309 = vld [vmem:[%s253 + $0x64] sm:$0xf]
      %v310 = vld [vmem:[%s253 + $0x68] sm:$0xf]
      %v311 = vld [vmem:[%s253 + $0x6c] sm:$0xf]
      %v312 = vld [vmem:[%s253 + $0x70] sm:$0xf]
      %v313 = vld [vmem:[%s253 + $0x74] sm:$0xf]
      %v314 = vld [vmem:[%s253 + $0x78] sm:$0xf]
      %v315 = vld [vmem:[%s253 + $0x7c] sm:$0xf]
      %v316 = vld [vmem:[%s253 + $0x80] sm:$0xf]
      %v317 = vld [vmem:[%s253 + $0x84] sm:$0xf]
      %v318 = vld [vmem:[%s253 + $0x88] sm:$0xf]
      %v319 = vld [vmem:[%s253 + $0x8c] sm:$0xf]
      %v320 = vld [vmem:[%s253 + $0x90] sm:$0xf]
      %v321 = vld [vmem:[%s253 + $0x94] sm:$0xf]
      %v322 = vld [vmem:[%s253 + $0x98] sm:$0xf]
      %v323 = vld [vmem:[%s253 + $0x9c] sm:$0xf]
      %v324 = vld [vmem:[%s253 + $0xa0] sm:$0xf]
      %v325 = vld [vmem:[%s253 + $0xa4] sm:$0xf]
      %v326 = vld [vmem:[%s253 + $0xa8] sm:$0xf]
      %v327 = vld [vmem:[%s253 + $0xac] sm:$0xf]
      %v328 = vld [vmem:[%s253 + $0xb0] sm:$0xf]
      %v329 = vld [vmem:[%s253 + $0xb4] sm:$0xf]
      %v330 = vld [vmem:[%s253 + $0xb8] sm:$0xf]
      %v331 = vld [vmem:[%s253 + $0xbc] sm:$0xf]
      %v332 = vld [vmem:[%s253 + $0xc0] sm:$0xf]
      %v333 = vld [vmem:[%s253 + $0xc4] sm:$0xf]
      %v334 = vld [vmem:[%s253 + $0xc8] sm:$0xf]
      %v335 = vld [vmem:[%s253 + $0xcc] sm:$0xf]
      %v336 = vld [vmem:[%s253 + $0xd0] sm:$0xf]
      %v337 = vld [vmem:[%s253 + $0xd4] sm:$0xf]
      %v338 = vld [vmem:[%s253 + $0xd8] sm:$0xf]
      %v339 = vld [vmem:[%s253 + $0xdc] sm:$0xf]
      %v340 = vld [vmem:[%s253 + $0xe0] sm:$0xf]
      %v341 = vld [vmem:[%s253 + $0xe4] sm:$0xf]
      %v342 = vld [vmem:[%s253 + $0xe8] sm:$0xf]
      %v343 = vld [vmem:[%s253 + $0xec] sm:$0xf]
      %v344 = vld [vmem:[%s253 + $0xf0] sm:$0xf]
      %v345 = vld [vmem:[%s253 + $0xf4] sm:$0xf]
      %v346 = vld [vmem:[%s253 + $0xf8] sm:$0xf]
      %v347 = vld [vmem:[%s253 + $0xfc] sm:$0xf]
      %v348 = vld [vmem:[%s253 + $0x100] sm:$0xf]
      %v349 = vld [vmem:[%s253 + $0x104] sm:$0xf]
      %v350 = vld [vmem:[%s253 + $0x108] sm:$0xf]
      %v351 = vld [vmem:[%s253 + $0x10c] sm:$0xf]
      %v352 = vld [vmem:[%s253 + $0x110] sm:$0xf]
      %v353 = vld [vmem:[%s253 + $0x114] sm:$0xf]
      %v354 = vld [vmem:[%s253 + $0x118] sm:$0xf]
      %v355 = vld [vmem:[%s253 + $0x11c] sm:$0xf]
      %v356 = vld [vmem:[%s253 + $0x120] sm:$0xf]
      %v357 = vld [vmem:[%s253 + $0x124] sm:$0xf]
      %v358 = vld [vmem:[%s253 + $0x128] sm:$0xf]
      %v359 = vld [vmem:[%s253 + $0x12c] sm:$0xf]
      %v360 = vld [vmem:[%s253 + $0x130] sm:$0xf]
      %v361 = vld [vmem:[%s253 + $0x134] sm:$0xf]
      %v362 = vld [vmem:[%s253 + $0x138] sm:$0xf]
      %v363 = vld [vmem:[%s253 + $0x13c] sm:$0xf]
      %v364 = vld [vmem:[%s253 + $0x140] sm:$0xf]
      %v365 = vld [vmem:[%s253 + $0x144] sm:$0xf]
      %v366 = vld [vmem:[%s253 + $0x148] sm:$0xf]
      %v367 = vld [vmem:[%s253 + $0x14c] sm:$0xf]
      %v368 = vld [vmem:[%s253 + $0x150] sm:$0xf]
      %v369 = vld [vmem:[%s253 + $0x154] sm:$0xf]
      %v370 = vld [vmem:[%s253 + $0x158] sm:$0xf]
      %v371 = vld [vmem:[%s253 + $0x15c] sm:$0xf]
      %v372 = vld [vmem:[%s253 + $0x160] sm:$0xf]
      %v373 = vld [vmem:[%s253 + $0x164] sm:$0xf]
      %v374 = vld [vmem:[%s253 + $0x168] sm:$0xf]
      %v375 = vld [vmem:[%s253 + $0x16c] sm:$0xf]
      %v376 = vld [vmem:[%s253 + $0x170] sm:$0xf]
      %v377 = vld [vmem:[%s253 + $0x174] sm:$0xf]
      %v378 = vld [vmem:[%s253 + $0x178] sm:$0xf]
      %v379 = vld [vmem:[%s253 + $0x17c] sm:$0xf]
      %v380 = vld [vmem:[%s253 + $0x180] sm:$0xf]
      %v381 = vld [vmem:[%s253 + $0x184] sm:$0xf]
      %v382 = vld [vmem:[%s253 + $0x188] sm:$0xf]
      %v383 = vld [vmem:[%s253 + $0x18c] sm:$0xf]
      %v384 = vld [vmem:[%s253 + $0x190] sm:$0xf]
      %v385 = vld [vmem:[%s253 + $0x194] sm:$0xf]
      %v386 = vld [vmem:[%s253 + $0x198] sm:$0xf]
      %v387 = vld [vmem:[%s253 + $0x19c] sm:$0xf]
      %v388 = vld [vmem:[%s253 + $0x1a0] sm:$0xf]
      %v389 = vld [vmem:[%s253 + $0x1a4] sm:$0xf]
      %v390 = vld [vmem:[%s253 + $0x1a8] sm:$0xf]
      %v391 = vld [vmem:[%s253 + $0x1ac] sm:$0xf]
      %v392 = vld [vmem:[%s253 + $0x1b0] sm:$0xf]
      %v393 = vld [vmem:[%s253 + $0x1b4] sm:$0xf]
      %v394 = vld [vmem:[%s253 + $0x1b8] sm:$0xf]
      %v395 = vld [vmem:[%s253 + $0x1bc] sm:$0xf]
      %v396 = vld [vmem:[%s253 + $0x1c0] sm:$0xf]
      %v397 = vld [vmem:[%s253 + $0x1c4] sm:$0xf]
      %v398 = vld [vmem:[%s253 + $0x1c8] sm:$0xf]
      %v399 = vld [vmem:[%s253 + $0x1cc] sm:$0xf]
      %v400 = vld [vmem:[%s253 + $0x1d0] sm:$0xf]
      %v401 = vld [vmem:[%s253 + $0x1d4] sm:$0xf]
      %v402 = vld [vmem:[%s253 + $0x1d8] sm:$0xf]
      %v403 = vld [vmem:[%s253 + $0x1dc] sm:$0xf]
      %v404 = vld [vmem:[%s253 + $0x1e0] sm:$0xf]
      %v405 = vld [vmem:[%s253 + $0x1e4] sm:$0xf]
      %v406 = vld [vmem:[%s253 + $0x1e8] sm:$0xf]
      %v407 = vld [vmem:[%s253 + $0x1ec] sm:$0xf]
      %v408 = vld [vmem:[%s253 + $0x1f0] sm:$0xf]
      %v409 = vld [vmem:[%s253 + $0x1f4] sm:$0xf]
      %v410 = vld [vmem:[%s253 + $0x1f8] sm:$0xf]
      %v411 = vld [vmem:[%s253 + $0x1fc] sm:$0xf]
      %v412 = vld [vmem:[%s253 + $0x200] sm:$0xf]
      %v413 = vld [vmem:[%s253 + $0x204] sm:$0xf]
      %v414 = vld [vmem:[%s253 + $0x208] sm:$0xf]
      %v415 = vld [vmem:[%s253 + $0x20c] sm:$0xf]
      %v416 = vld [vmem:[%s253 + $0x210] sm:$0xf]
      %v417 = vld [vmem:[%s253 + $0x214] sm:$0xf]
      %v418 = vld [vmem:[%s253 + $0x218] sm:$0xf]
      %v419 = vld [vmem:[%s253 + $0x21c] sm:$0xf]
      %v420 = vld [vmem:[%s253 + $0x220] sm:$0xf]
      %v421 = vld [vmem:[%s253 + $0x224] sm:$0xf]
      %v422 = vld [vmem:[%s253 + $0x228] sm:$0xf]
      %v423 = vld [vmem:[%s253 + $0x22c] sm:$0xf]
      %v424 = vld [vmem:[%s253 + $0x230] sm:$0xf]
      %v425 = vld [vmem:[%s253 + $0x234] sm:$0xf]
      %v426 = vld [vmem:[%s253 + $0x238] sm:$0xf]
      %v427 = vld [vmem:[%s253 + $0x23c] sm:$0xf]
      %v428 = vld [vmem:[%s253 + $0x240] sm:$0xf]
      %v429 = vld [vmem:[%s253 + $0x244] sm:$0xf]
      %v430 = vld [vmem:[%s253 + $0x248] sm:$0xf]
      %v431 = vld [vmem:[%s253 + $0x24c] sm:$0xf]
      %v432 = vld [vmem:[%s253 + $0x250] sm:$0xf]
      %v433 = vld [vmem:[%s253 + $0x254] sm:$0xf]
      %v434 = vld [vmem:[%s253 + $0x258] sm:$0xf]
      %v435 = vld [vmem:[%s253 + $0x25c] sm:$0xf]
      %v436 = vld [vmem:[%s253 + $0x260] sm:$0xf]
      %v437 = vld [vmem:[%s253 + $0x264] sm:$0xf]
      %v438 = vld [vmem:[%s253 + $0x268] sm:$0xf]
      %v439 = vld [vmem:[%s253 + $0x26c] sm:$0xf]
      %v440 = vld [vmem:[%s253 + $0x270] sm:$0xf]
      %v441 = vld [vmem:[%s253 + $0x274] sm:$0xf]
      %v442 = vld [vmem:[%s253 + $0x278] sm:$0xf]
      %v443 = vld [vmem:[%s253 + $0x27c] sm:$0xf]
      %v444 = vld [vmem:[%s253 + $0x280] sm:$0xf]
      %v445 = vld [vmem:[%s253 + $0x284] sm:$0xf]
      %v446 = vld [vmem:[%s253 + $0x288] sm:$0xf]
      %v447 = vld [vmem:[%s253 + $0x28c] sm:$0xf]
      %v448 = vld [vmem:[%s253 + $0x290] sm:$0xf]
      %v449 = vld [vmem:[%s253 + $0x294] sm:$0xf]
      %v450 = vld [vmem:[%s253 + $0x298] sm:$0xf]
      %v451 = vld [vmem:[%s253 + $0x29c] sm:$0xf]
      %v452 = vld [vmem:[%s253 + $0x2a0] sm:$0xf]
      %v453 = vld [vmem:[%s253 + $0x2a4] sm:$0xf]
      %v454 = vld [vmem:[%s253 + $0x2a8] sm:$0xf]
      %v455 = vld [vmem:[%s253 + $0x2ac] sm:$0xf]
      %v456 = vld [vmem:[%s253 + $0x2b0] sm:$0xf]
      %v457 = vld [vmem:[%s253 + $0x2b4] sm:$0xf]
      %v458 = vld [vmem:[%s253 + $0x2b8] sm:$0xf]
      %v459 = vld [vmem:[%s253 + $0x2bc] sm:$0xf]
      %v460 = vld [vmem:[%s253 + $0x2c0] sm:$0xf]
      %v461 = vld [vmem:[%s253 + $0x2c4] sm:$0xf]
      %v462 = vld [vmem:[%s253 + $0x2c8] sm:$0xf]
      %v463 = vld [vmem:[%s253 + $0x2cc] sm:$0xf]
      %v464 = vld [vmem:[%s253 + $0x2d0] sm:$0xf]
      %v465 = vld [vmem:[%s253 + $0x2d4] sm:$0xf]
      %v466 = vld [vmem:[%s253 + $0x2d8] sm:$0xf]
      %v467 = vld [vmem:[%s253 + $0x2dc] sm:$0xf]
      %v468 = vld [vmem:[%s253 + $0x2e0] sm:$0xf]
      %v469 = vld [vmem:[%s253 + $0x2e4] sm:$0xf]
      %v470 = vld [vmem:[%s253 + $0x2e8] sm:$0xf]
      %v471 = vld [vmem:[%s253 + $0x2ec] sm:$0xf]
      %v472 = vld [vmem:[%s253 + $0x2f0] sm:$0xf]
      %v473 = vld [vmem:[%s253 + $0x2f4] sm:$0xf]
      %v474 = vld [vmem:[%s253 + $0x2f8] sm:$0xf]
      %v475 = vld [vmem:[%s253 + $0x2fc] sm:$0xf]
      %v476 = vld [vmem:[%s253 + $0x300] sm:$0xf]
      %v477 = vld [vmem:[%s253 + $0x304] sm:$0xf]
      %v478 = vld [vmem:[%s253 + $0x308] sm:$0xf]
      %v479 = vld [vmem:[%s253 + $0x30c] sm:$0xf]
      %v480 = vld [vmem:[%s253 + $0x310] sm:$0xf]
      %v481 = vld [vmem:[%s253 + $0x314] sm:$0xf]
      %v482 = vld [vmem:[%s253 + $0x318] sm:$0xf]
      %v483 = vld [vmem:[%s253 + $0x31c] sm:$0xf]
      %v484 = vld [vmem:[%s253 + $0x320] sm:$0xf]
      %v485 = vld [vmem:[%s253 + $0x324] sm:$0xf]
      %v486 = vld [vmem:[%s253 + $0x328] sm:$0xf]
      %v487 = vld [vmem:[%s253 + $0x32c] sm:$0xf]
      %v488 = vld [vmem:[%s253 + $0x330] sm:$0xf]
      %v489 = vld [vmem:[%s253 + $0x334] sm:$0xf]
      %v490 = vld [vmem:[%s253 + $0x338] sm:$0xf]
      %v491 = vld [vmem:[%s253 + $0x33c] sm:$0xf]
      %v506 = vunpack.c.l.b16 %v270
      %v507 = vunpack.c.h.b16 %v270
      %v508 = vunpack.c.l.b16 %v271
      %v509 = vunpack.c.h.b16 %v271
      %v510 = vunpack.c.l.b16 %v272
      %v511 = vunpack.c.h.b16 %v272
      %v512 = vunpack.c.l.b16 %v273
      %v513 = vunpack.c.h.b16 %v273
      %v514 = vunpack.c.l.b16 %v274
      %v515 = vunpack.c.h.b16 %v274
      %v516 = vunpack.c.l.b16 %v275
      %v517 = vunpack.c.h.b16 %v275
      %v518 = vunpack.c.l.b16 %v276
      %v519 = vunpack.c.l.b16 %v277
      %v520 = vunpack.c.h.b16 %v277
      %v521 = vunpack.c.l.b16 %v278
      %v522 = vunpack.c.h.b16 %v278
      %v523 = vunpack.c.l.b16 %v279
      %v524 = vunpack.c.h.b16 %v279
      %v525 = vunpack.c.l.b16 %v280
      %v526 = vunpack.c.h.b16 %v280
      %v527 = vunpack.c.l.b16 %v281
      %v528 = vunpack.c.h.b16 %v281
      %v529 = vunpack.c.l.b16 %v282
      %v530 = vunpack.c.h.b16 %v282
      %v531 = vunpack.c.l.b16 %v283
      %v532 = vpack.c.b16 %v519, %v506
      %v533 = vpack.c.b16 %v520, %v507
      %v534 = vpack.c.b16 %v521, %v508
      %v535 = vpack.c.b16 %v522, %v509
      %v536 = vpack.c.b16 %v523, %v510
      %v537 = vpack.c.b16 %v524, %v511
      %v538 = vpack.c.b16 %v525, %v512
      %v539 = vpack.c.b16 %v526, %v513
      %v540 = vpack.c.b16 %v527, %v514
      %v541 = vpack.c.b16 %v528, %v515
      %v542 = vpack.c.b16 %v529, %v516
      %v543 = vpack.c.b16 %v530, %v517
      %v544 = vpack.c.b16 %v531, %v518
      %v766 = vunpack.c.l.b16 %v284
      %v767 = vunpack.c.l.b16 %v285
      %v768 = vunpack.c.l.b16 %v286
      %v769 = vunpack.c.l.b16 %v287
      %v770 = vunpack.c.l.b16 %v288
      %v771 = vunpack.c.l.b16 %v289
      %v772 = vunpack.c.l.b16 %v290
      %v773 = vunpack.c.l.b16 %v291
      %v774 = vunpack.c.l.b16 %v292
      %v775 = vunpack.c.l.b16 %v293
      %v776 = vunpack.c.l.b16 %v294
      %v777 = vunpack.c.l.b16 %v295
      %v778 = vunpack.c.l.b16 %v296
      %v779 = vunpack.c.l.b16 %v297
      %v780 = vunpack.c.l.b16 %v298
      %v781 = vunpack.c.l.b16 %v299
      %v782 = vunpack.c.l.b16 %v300
      %v783 = vunpack.c.l.b16 %v301
      %v784 = vunpack.c.l.b16 %v302
      %v785 = vunpack.c.l.b16 %v303
      %v786 = vunpack.c.l.b16 %v304
      %v787 = vunpack.c.l.b16 %v305
      %v788 = vunpack.c.l.b16 %v306
      %v789 = vunpack.c.l.b16 %v307
      %v790 = vunpack.c.l.b16 %v308
      %v791 = vunpack.c.l.b16 %v309
      %v792 = vunpack.c.l.b16 %v310
      %v793 = vunpack.c.l.b16 %v311
      %v794 = vunpack.c.l.b16 %v312
      %v795 = vunpack.c.l.b16 %v313
      %v796 = vunpack.c.l.b16 %v314
      %v797 = vunpack.c.l.b16 %v315
      %v798 = vunpack.c.l.b16 %v316
      %v799 = vunpack.c.l.b16 %v317
      %v800 = vunpack.c.l.b16 %v318
      %v801 = vunpack.c.l.b16 %v319
      %v802 = vunpack.c.l.b16 %v320
      %v803 = vunpack.c.l.b16 %v321
      %v804 = vunpack.c.l.b16 %v322
      %v805 = vunpack.c.l.b16 %v323
      %v806 = vunpack.c.l.b16 %v324
      %v807 = vunpack.c.l.b16 %v325
      %v808 = vunpack.c.l.b16 %v326
      %v809 = vunpack.c.l.b16 %v327
      %v810 = vunpack.c.l.b16 %v328
      %v811 = vunpack.c.l.b16 %v329
      %v812 = vunpack.c.l.b16 %v330
      %v813 = vunpack.c.l.b16 %v331
      %v814 = vunpack.c.l.b16 %v332
      %v815 = vunpack.c.l.b16 %v333
      %v816 = vunpack.c.l.b16 %v334
      %v817 = vunpack.c.l.b16 %v335
      %v818 = vunpack.c.l.b16 %v336
      %v819 = vunpack.c.l.b16 %v337
      %v820 = vunpack.c.l.b16 %v338
      %v821 = vunpack.c.l.b16 %v339
      %v822 = vunpack.c.l.b16 %v340
      %v823 = vunpack.c.l.b16 %v341
      %v824 = vunpack.c.l.b16 %v342
      %v825 = vunpack.c.l.b16 %v343
      %v826 = vunpack.c.l.b16 %v344
      %v827 = vunpack.c.l.b16 %v345
      %v828 = vunpack.c.l.b16 %v346
      %v829 = vunpack.c.l.b16 %v347
      %v830 = vunpack.c.l.b16 %v348
      %v831 = vunpack.c.l.b16 %v349
      %v832 = vunpack.c.l.b16 %v350
      %v833 = vunpack.c.l.b16 %v351
      %v834 = vunpack.c.l.b16 %v352
      %v835 = vunpack.c.l.b16 %v353
      %v836 = vunpack.c.l.b16 %v354
      %v837 = vunpack.c.l.b16 %v355
      %v838 = vunpack.c.l.b16 %v356
      %v839 = vunpack.c.l.b16 %v357
      %v840 = vunpack.c.l.b16 %v358
      %v841 = vunpack.c.l.b16 %v359
      %v842 = vunpack.c.l.b16 %v360
      %v843 = vunpack.c.l.b16 %v361
      %v844 = vunpack.c.l.b16 %v362
      %v845 = vunpack.c.l.b16 %v363
      %v846 = vunpack.c.l.b16 %v364
      %v847 = vunpack.c.l.b16 %v365
      %v848 = vunpack.c.l.b16 %v366
      %v849 = vunpack.c.l.b16 %v367
      %v850 = vunpack.c.l.b16 %v368
      %v851 = vunpack.c.l.b16 %v369
      %v852 = vunpack.c.l.b16 %v370
      %v853 = vunpack.c.l.b16 %v371
      %v854 = vunpack.c.l.b16 %v372
      %v855 = vunpack.c.l.b16 %v373
      %v856 = vunpack.c.l.b16 %v374
      %v857 = vunpack.c.l.b16 %v375
      %v858 = vunpack.c.l.b16 %v376
      %v859 = vunpack.c.l.b16 %v377
      %v860 = vunpack.c.l.b16 %v378
      %v861 = vunpack.c.l.b16 %v379
      %v862 = vunpack.c.l.b16 %v380
      %v863 = vunpack.c.l.b16 %v381
      %v864 = vunpack.c.l.b16 %v382
      %v865 = vunpack.c.l.b16 %v383
      %v866 = vunpack.c.l.b16 %v384
      %v867 = vunpack.c.l.b16 %v385
      %v868 = vunpack.c.l.b16 %v386
      %v869 = vunpack.c.l.b16 %v387
      %v870 = vunpack.c.l.b16 %v388
      %v871 = vunpack.c.l.b16 %v389
      %v872 = vunpack.c.l.b16 %v390
      %v873 = vunpack.c.l.b16 %v391
      %v874 = vunpack.c.l.b16 %v392
      %v875 = vunpack.c.l.b16 %v393
      %v876 = vunpack.c.l.b16 %v394
      %v877 = vunpack.c.l.b16 %v395
      %v878 = vunpack.c.l.b16 %v396
      %v879 = vunpack.c.l.b16 %v397
      %v880 = vunpack.c.l.b16 %v398
      %v881 = vunpack.c.l.b16 %v399
      %v882 = vunpack.c.l.b16 %v400
      %v883 = vunpack.c.l.b16 %v401
      %v884 = vunpack.c.l.b16 %v402
      %v885 = vunpack.c.l.b16 %v403
      %v886 = vunpack.c.l.b16 %v404
      %v887 = vunpack.c.l.b16 %v405
      %v888 = vunpack.c.l.b16 %v406
      %v889 = vunpack.c.l.b16 %v407
      %v890 = vunpack.c.l.b16 %v408
      %v891 = vunpack.c.l.b16 %v409
      %v892 = vunpack.c.l.b16 %v410
      %v893 = vunpack.c.l.b16 %v411
      %v894 = vunpack.c.l.b16 %v412
      %v895 = vunpack.c.l.b16 %v413
      %v896 = vunpack.c.l.b16 %v414
      %v897 = vunpack.c.l.b16 %v415
      %v898 = vunpack.c.l.b16 %v416
      %v899 = vunpack.c.l.b16 %v417
      %v900 = vunpack.c.l.b16 %v418
      %v901 = vunpack.c.l.b16 %v419
      %v902 = vunpack.c.l.b16 %v420
      %v903 = vunpack.c.l.b16 %v421
      %v904 = vunpack.c.l.b16 %v422
      %v905 = vunpack.c.l.b16 %v423
      %v906 = vunpack.c.l.b16 %v424
      %v907 = vunpack.c.l.b16 %v425
      %v908 = vunpack.c.l.b16 %v426
      %v909 = vunpack.c.l.b16 %v427
      %v910 = vunpack.c.l.b16 %v428
      %v911 = vunpack.c.l.b16 %v429
      %v912 = vunpack.c.l.b16 %v430
      %v913 = vunpack.c.l.b16 %v431
      %v914 = vunpack.c.l.b16 %v432
      %v915 = vunpack.c.l.b16 %v433
      %v916 = vunpack.c.l.b16 %v434
      %v917 = vunpack.c.l.b16 %v435
      %v918 = vunpack.c.l.b16 %v436
      %v919 = vunpack.c.l.b16 %v437
      %v920 = vunpack.c.l.b16 %v438
      %v921 = vunpack.c.l.b16 %v439
      %v922 = vunpack.c.l.b16 %v440
      %v923 = vunpack.c.l.b16 %v441
      %v924 = vunpack.c.l.b16 %v442
      %v925 = vunpack.c.l.b16 %v443
      %v926 = vunpack.c.l.b16 %v444
      %v927 = vunpack.c.l.b16 %v445
      %v928 = vunpack.c.l.b16 %v446
      %v929 = vunpack.c.l.b16 %v447
      %v930 = vunpack.c.l.b16 %v448
      %v931 = vunpack.c.l.b16 %v449
      %v932 = vunpack.c.l.b16 %v450
      %v933 = vunpack.c.l.b16 %v451
      %v934 = vunpack.c.l.b16 %v452
      %v935 = vunpack.c.l.b16 %v453
      %v936 = vunpack.c.l.b16 %v454
      %v937 = vunpack.c.l.b16 %v455
      %v938 = vunpack.c.l.b16 %v456
      %v939 = vunpack.c.l.b16 %v457
      %v940 = vunpack.c.l.b16 %v458
      %v941 = vunpack.c.l.b16 %v459
      %v942 = vunpack.c.l.b16 %v460
      %v943 = vunpack.c.l.b16 %v461
      %v944 = vunpack.c.l.b16 %v462
      %v945 = vunpack.c.l.b16 %v463
      %v946 = vunpack.c.l.b16 %v464
      %v947 = vunpack.c.l.b16 %v465
      %v948 = vunpack.c.l.b16 %v466
      %v949 = vunpack.c.l.b16 %v467
      %v950 = vunpack.c.l.b16 %v468
      %v951 = vunpack.c.l.b16 %v469
      %v952 = vunpack.c.l.b16 %v470
      %v953 = vunpack.c.l.b16 %v471
      %v954 = vunpack.c.l.b16 %v472
      %v955 = vunpack.c.l.b16 %v473
      %v956 = vunpack.c.l.b16 %v474
      %v957 = vunpack.c.l.b16 %v475
      %v958 = vunpack.c.l.b16 %v476
      %v959 = vunpack.c.l.b16 %v477
      %v960 = vunpack.c.l.b16 %v478
      %v961 = vunpack.c.l.b16 %v479
      %v962 = vunpack.c.l.b16 %v480
      %v963 = vunpack.c.l.b16 %v481
      %v964 = vunpack.c.l.b16 %v482
      %v965 = vunpack.c.l.b16 %v483
      %v966 = vunpack.c.l.b16 %v484
      %v967 = vunpack.c.l.b16 %v485
      %v968 = vunpack.c.l.b16 %v486
      %v969 = vunpack.c.l.b16 %v487
      %v970 = vunpack.c.l.b16 %v488
      %v971 = vunpack.c.l.b16 %v489
      %v972 = vunpack.c.l.b16 %v490
      %v973 = vunpack.c.l.b16 %v491
      %v974 = vpack.c.b16 %v767, %v766
      %v975 = vpack.c.b16 %v769, %v768
      %v976 = vpack.c.b16 %v771, %v770
      %v977 = vpack.c.b16 %v773, %v772
      %v978 = vpack.c.b16 %v775, %v774
      %v979 = vpack.c.b16 %v777, %v776
      %v980 = vpack.c.b16 %v779, %v778
      %v981 = vpack.c.b16 %v781, %v780
      %v982 = vpack.c.b16 %v783, %v782
      %v983 = vpack.c.b16 %v785, %v784
      %v984 = vpack.c.b16 %v787, %v786
      %v985 = vpack.c.b16 %v789, %v788
      %v986 = vpack.c.b16 %v791, %v790
      %v987 = vpack.c.b16 %v793, %v792
      %v988 = vpack.c.b16 %v795, %v794
      %v989 = vpack.c.b16 %v797, %v796
      %v990 = vpack.c.b16 %v799, %v798
      %v991 = vpack.c.b16 %v801, %v800
      %v992 = vpack.c.b16 %v803, %v802
      %v993 = vpack.c.b16 %v805, %v804
      %v994 = vpack.c.b16 %v807, %v806
      %v995 = vpack.c.b16 %v809, %v808
      %v996 = vpack.c.b16 %v811, %v810
      %v997 = vpack.c.b16 %v813, %v812
      %v998 = vpack.c.b16 %v815, %v814
      %v999 = vpack.c.b16 %v817, %v816
      %v1000 = vpack.c.b16 %v819, %v818
      %v1001 = vpack.c.b16 %v821, %v820
      %v1002 = vpack.c.b16 %v823, %v822
      %v1003 = vpack.c.b16 %v825, %v824
      %v1004 = vpack.c.b16 %v827, %v826
      %v1005 = vpack.c.b16 %v829, %v828
      %v1006 = vpack.c.b16 %v831, %v830
      %v1007 = vpack.c.b16 %v833, %v832
      %v1008 = vpack.c.b16 %v835, %v834
      %v1009 = vpack.c.b16 %v837, %v836
      %v1010 = vpack.c.b16 %v839, %v838
      %v1011 = vpack.c.b16 %v841, %v840
      %v1012 = vpack.c.b16 %v843, %v842
      %v1013 = vpack.c.b16 %v845, %v844
      %v1014 = vpack.c.b16 %v847, %v846
      %v1015 = vpack.c.b16 %v849, %v848
      %v1016 = vpack.c.b16 %v851, %v850
      %v1017 = vpack.c.b16 %v853, %v852
      %v1018 = vpack.c.b16 %v855, %v854
      %v1019 = vpack.c.b16 %v857, %v856
      %v1020 = vpack.c.b16 %v859, %v858
      %v1021 = vpack.c.b16 %v861, %v860
      %v1022 = vpack.c.b16 %v863, %v862
      %v1023 = vpack.c.b16 %v865, %v864
      %v1024 = vpack.c.b16 %v867, %v866
      %v1025 = vpack.c.b16 %v869, %v868
      %v1026 = vpack.c.b16 %v871, %v870
      %v1027 = vpack.c.b16 %v873, %v872
      %v1028 = vpack.c.b16 %v875, %v874
      %v1029 = vpack.c.b16 %v877, %v876
      %v1030 = vpack.c.b16 %v879, %v878
      %v1031 = vpack.c.b16 %v881, %v880
      %v1032 = vpack.c.b16 %v883, %v882
      %v1033 = vpack.c.b16 %v885, %v884
      %v1034 = vpack.c.b16 %v887, %v886
      %v1035 = vpack.c.b16 %v889, %v888
      %v1036 = vpack.c.b16 %v891, %v890
      %v1037 = vpack.c.b16 %v893, %v892
      %v1038 = vpack.c.b16 %v895, %v894
      %v1039 = vpack.c.b16 %v897, %v896
      %v1040 = vpack.c.b16 %v899, %v898
      %v1041 = vpack.c.b16 %v901, %v900
      %v1042 = vpack.c.b16 %v903, %v902
      %v1043 = vpack.c.b16 %v905, %v904
      %v1044 = vpack.c.b16 %v907, %v906
      %v1045 = vpack.c.b16 %v909, %v908
      %v1046 = vpack.c.b16 %v911, %v910
      %v1047 = vpack.c.b16 %v913, %v912
      %v1048 = vpack.c.b16 %v915, %v914
      %v1049 = vpack.c.b16 %v917, %v916
      %v1050 = vpack.c.b16 %v919, %v918
      %v1051 = vpack.c.b16 %v921, %v920
      %v1052 = vpack.c.b16 %v923, %v922
      %v1053 = vpack.c.b16 %v925, %v924
      %v1054 = vpack.c.b16 %v927, %v926
      %v1055 = vpack.c.b16 %v929, %v928
      %v1056 = vpack.c.b16 %v931, %v930
      %v1057 = vpack.c.b16 %v933, %v932
      %v1058 = vpack.c.b16 %v935, %v934
      %v1059 = vpack.c.b16 %v937, %v936
      %v1060 = vpack.c.b16 %v939, %v938
      %v1061 = vpack.c.b16 %v941, %v940
      %v1062 = vpack.c.b16 %v943, %v942
      %v1063 = vpack.c.b16 %v945, %v944
      %v1064 = vpack.c.b16 %v947, %v946
      %v1065 = vpack.c.b16 %v949, %v948
      %v1066 = vpack.c.b16 %v951, %v950
      %v1067 = vpack.c.b16 %v953, %v952
      %v1068 = vpack.c.b16 %v955, %v954
      %v1069 = vpack.c.b16 %v957, %v956
      %v1070 = vpack.c.b16 %v959, %v958
      %v1071 = vpack.c.b16 %v961, %v960
      %v1072 = vpack.c.b16 %v963, %v962
      %v1073 = vpack.c.b16 %v965, %v964
      %v1074 = vpack.c.b16 %v967, %v966
      %v1075 = vpack.c.b16 %v969, %v968
      %v1076 = vpack.c.b16 %v971, %v970
      %v1077 = vpack.c.b16 %v973, %v972
      %1182 = vmatprep.subr.bf16.mxu0 0
      %1183 = vmatpush1.bf16.msra.mxu0 %v974
      %1184 = vmatprep.subr.bf16.mxu0 0
      %1185 = vmatpush1.bf16.msra.mxu0 %v975
      %1186 = vmatprep.subr.bf16.mxu0 0
      %1187 = vmatpush1.bf16.msra.mxu0 %v976
      %1188 = vmatprep.subr.bf16.mxu0 0
      %1189 = vmatpush1.bf16.msra.mxu0 %v977
      %1190 = vmatprep.subr.bf16.mxu0 0
      %1191 = vmatpush1.bf16.msra.mxu0 %v978
      %1192 = vmatprep.subr.bf16.mxu0 0
      %1193 = vmatpush1.bf16.msra.mxu0 %v979
      %1194 = vmatprep.subr.bf16.mxu0 0
      %1195 = vmatpush1.bf16.msra.mxu0 %v980
      %1196 = vmatprep.subr.bf16.mxu0 0
      %1197 = vmatpush1.bf16.msra.mxu0 %v981
      %1198 = vmatprep.subr.bf16.mxu0 0
      %1199 = vmatpush1.bf16.msra.mxu0 %v982
      %1200 = vmatprep.subr.bf16.mxu0 0
      %1201 = vmatpush1.bf16.msra.mxu0 %v983
      %1202 = vmatprep.subr.bf16.mxu0 0
      %1203 = vmatpush1.bf16.msra.mxu0 %v984
      %1204 = vmatprep.subr.bf16.mxu0 0
      %1205 = vmatpush1.bf16.msra.mxu0 %v985
      %1206 = vmatprep.subr.bf16.mxu0 0
      %1207 = vmatpush1.bf16.msra.mxu0 %v986
      %1208 = vmatprep.subr.bf16.mxu0 0
      %1209 = vmatpush1.bf16.msra.mxu0 %v987
      %1210 = vmatprep.subr.bf16.mxu0 0
      %1211 = vmatpush1.bf16.msra.mxu0 %v988
      %1212 = vmatprep.subr.bf16.mxu0 0
      %1213 = vmatpush1.bf16.msra.mxu0 %v989
      %1214 = vmatprep.mubr.bf16.mxu0 %v533
      %1215 = vmatmul.mubr.bf16.gmra.mrb[0].mxu0 %v532
      %v1216 = vpop.f32.mrb[0].mxu0
      %v1217 = vadd.f32 0.0, %v1216
      %v1218 = vpop.f32.mrb[0].mxu0
      %v1219 = vpop.f32.mrb[0].mxu0
      %v1220 = vadd.f32 0.0, %v1219
      %v1221 = vpop.f32.mrb[0].mxu0
      %1222 = vdwg.mxu0
      %1223 = vmatprep.subr.bf16.mxu0 0
      %1224 = vmatpush1.bf16.msra.mxu0 %v990
      %1225 = vmatprep.subr.bf16.mxu0 0
      %1226 = vmatpush1.bf16.msra.mxu0 %v991
      %1227 = vmatprep.subr.bf16.mxu0 0
      %1228 = vmatpush1.bf16.msra.mxu0 %v992
      %1229 = vmatprep.subr.bf16.mxu0 0
      %1230 = vmatpush1.bf16.msra.mxu0 %v993
      %1231 = vmatprep.subr.bf16.mxu0 0
      %1232 = vmatpush1.bf16.msra.mxu0 %v994
      %1233 = vmatprep.subr.bf16.mxu0 0
      %1234 = vmatpush1.bf16.msra.mxu0 %v995
      %1235 = vmatprep.subr.bf16.mxu0 0
      %1236 = vmatpush1.bf16.msra.mxu0 %v996
      %1237 = vmatprep.subr.bf16.mxu0 0
      %1238 = vmatpush1.bf16.msra.mxu0 %v997
      %1239 = vmatprep.subr.bf16.mxu0 0
      %1240 = vmatpush1.bf16.msra.mxu0 %v998
      %1241 = vmatprep.subr.bf16.mxu0 0
      %1242 = vmatpush1.bf16.msra.mxu0 %v999
      %1243 = vmatprep.subr.bf16.mxu0 0
      %1244 = vmatpush1.bf16.msra.mxu0 %v1000
      %1245 = vmatprep.subr.bf16.mxu0 0
      %1246 = vmatpush1.bf16.msra.mxu0 %v1001
      %1247 = vmatprep.subr.bf16.mxu0 0
      %1248 = vmatpush1.bf16.msra.mxu0 %v1002
      %1249 = vmatprep.subr.bf16.mxu0 0
      %1250 = vmatpush1.bf16.msra.mxu0 %v1003
      %1251 = vmatprep.subr.bf16.mxu0 0
      %1252 = vmatpush1.bf16.msra.mxu0 %v1004
      %1253 = vmatprep.subr.bf16.mxu0 0
      %1254 = vmatpush1.bf16.msra.mxu0 %v1005
      %1255 = vmatprep.mubr.bf16.mxu0 %v535
      %1256 = vmatmul.mubr.bf16.gmra.mrb[0].mxu0 %v534
      %v1257 = vpop.f32.mrb[0].mxu0
      %v1258 = vadd.f32 %v1217, %v1257
      %v1259 = vpop.f32.mrb[0].mxu0
      %v1260 = vpop.f32.mrb[0].mxu0
      %v1261 = vadd.f32 %v1220, %v1260
      %v1262 = vpop.f32.mrb[0].mxu0
      %1263 = vdwg.mxu0
      %1264 = vmatprep.subr.bf16.mxu0 0
      %1265 = vmatpush1.bf16.msra.mxu0 %v1006
      %1266 = vmatprep.subr.bf16.mxu0 0
      %1267 = vmatpush1.bf16.msra.mxu0 %v1007
      %1268 = vmatprep.subr.bf16.mxu0 0
      %1269 = vmatpush1.bf16.msra.mxu0 %v1008
      %1270 = vmatprep.subr.bf16.mxu0 0
      %1271 = vmatpush1.bf16.msra.mxu0 %v1009
      %1272 = vmatprep.subr.bf16.mxu0 0
      %1273 = vmatpush1.bf16.msra.mxu0 %v1010
      %1274 = vmatprep.subr.bf16.mxu0 0
      %1275 = vmatpush1.bf16.msra.mxu0 %v1011
      %1276 = vmatprep.subr.bf16.mxu0 0
      %1277 = vmatpush1.bf16.msra.mxu0 %v1012
      %1278 = vmatprep.subr.bf16.mxu0 0
      %1279 = vmatpush1.bf16.msra.mxu0 %v1013
      %1280 = vmatprep.subr.bf16.mxu0 0
      %1281 = vmatpush1.bf16.msra.mxu0 %v1014
      %1282 = vmatprep.subr.bf16.mxu0 0
      %1283 = vmatpush1.bf16.msra.mxu0 %v1015
      %1284 = vmatprep.subr.bf16.mxu0 0
      %1285 = vmatpush1.bf16.msra.mxu0 %v1016
      %1286 = vmatprep.subr.bf16.mxu0 0
      %1287 = vmatpush1.bf16.msra.mxu0 %v1017
      %1288 = vmatprep.subr.bf16.mxu0 0
      %1289 = vmatpush1.bf16.msra.mxu0 %v1018
      %1290 = vmatprep.subr.bf16.mxu0 0
      %1291 = vmatpush1.bf16.msra.mxu0 %v1019
      %1292 = vmatprep.subr.bf16.mxu0 0
      %1293 = vmatpush1.bf16.msra.mxu0 %v1020
      %1294 = vmatprep.subr.bf16.mxu0 0
      %1295 = vmatpush1.bf16.msra.mxu0 %v1021
      %1296 = vmatprep.mubr.bf16.mxu0 %v537
      %1297 = vmatmul.mubr.bf16.gmra.mrb[0].mxu0 %v536
      %v1298 = vpop.f32.mrb[0].mxu0
      %v1299 = vadd.f32 %v1258, %v1298
      %v1300 = vpop.f32.mrb[0].mxu0
      %v1301 = vpop.f32.mrb[0].mxu0
      %v1302 = vadd.f32 %v1261, %v1301
      %v1303 = vpop.f32.mrb[0].mxu0
      %1304 = vdwg.mxu0
      %1305 = vmatprep.subr.bf16.mxu0 0
      %1306 = vmatpush1.bf16.msra.mxu0 %v1022
      %1307 = vmatprep.subr.bf16.mxu0 0
      %1308 = vmatpush1.bf16.msra.mxu0 %v1023
      %1309 = vmatprep.subr.bf16.mxu0 0
      %1310 = vmatpush1.bf16.msra.mxu0 %v1024
      %1311 = vmatprep.subr.bf16.mxu0 0
      %1312 = vmatpush1.bf16.msra.mxu0 %v1025
      %1313 = vmatprep.subr.bf16.mxu0 0
      %1314 = vmatpush1.bf16.msra.mxu0 %v1026
      %1315 = vmatprep.subr.bf16.mxu0 0
      %1316 = vmatpush1.bf16.msra.mxu0 %v1027
      %1317 = vmatprep.subr.bf16.mxu0 0
      %1318 = vmatpush1.bf16.msra.mxu0 %v1028
      %1319 = vmatprep.subr.bf16.mxu0 0
      %1320 = vmatpush1.bf16.msra.mxu0 %v1029
      %1321 = vmatprep.subr.bf16.mxu0 0
      %1322 = vmatpush1.bf16.msra.mxu0 %v1030
      %1323 = vmatprep.subr.bf16.mxu0 0
      %1324 = vmatpush1.bf16.msra.mxu0 %v1031
      %1325 = vmatprep.subr.bf16.mxu0 0
      %1326 = vmatpush1.bf16.msra.mxu0 %v1032
      %1327 = vmatprep.subr.bf16.mxu0 0
      %1328 = vmatpush1.bf16.msra.mxu0 %v1033
      %1329 = vmatprep.subr.bf16.mxu0 0
      %1330 = vmatpush1.bf16.msra.mxu0 %v1034
      %1331 = vmatprep.subr.bf16.mxu0 0
      %1332 = vmatpush1.bf16.msra.mxu0 %v1035
      %1333 = vmatprep.subr.bf16.mxu0 0
      %1334 = vmatpush1.bf16.msra.mxu0 %v1036
      %1335 = vmatprep.subr.bf16.mxu0 0
      %1336 = vmatpush1.bf16.msra.mxu0 %v1037
      %1337 = vmatprep.mubr.bf16.mxu0 %v539
      %1338 = vmatmul.mubr.bf16.gmra.mrb[0].mxu0 %v538
      %v1339 = vpop.f32.mrb[0].mxu0
      %v1340 = vadd.f32 %v1299, %v1339
      %v1341 = vpop.f32.mrb[0].mxu0
      %v1342 = vpop.f32.mrb[0].mxu0
      %v1343 = vadd.f32 %v1302, %v1342
      %v1344 = vpop.f32.mrb[0].mxu0
      %1345 = vdwg.mxu0
      %1346 = vmatprep.subr.bf16.mxu0 0
      %1347 = vmatpush1.bf16.msra.mxu0 %v1038
      %1348 = vmatprep.subr.bf16.mxu0 0
      %1349 = vmatpush1.bf16.msra.mxu0 %v1039
      %1350 = vmatprep.subr.bf16.mxu0 0
      %1351 = vmatpush1.bf16.msra.mxu0 %v1040
      %1352 = vmatprep.subr.bf16.mxu0 0
      %1353 = vmatpush1.bf16.msra.mxu0 %v1041
      %1354 = vmatprep.subr.bf16.mxu0 0
      %1355 = vmatpush1.bf16.msra.mxu0 %v1042
      %1356 = vmatprep.subr.bf16.mxu0 0
      %1357 = vmatpush1.bf16.msra.mxu0 %v1043
      %1358 = vmatprep.subr.bf16.mxu0 0
      %1359 = vmatpush1.bf16.msra.mxu0 %v1044
      %1360 = vmatprep.subr.bf16.mxu0 0
      %1361 = vmatpush1.bf16.msra.mxu0 %v1045
      %1362 = vmatprep.subr.bf16.mxu0 0
      %1363 = vmatpush1.bf16.msra.mxu0 %v1046
      %1364 = vmatprep.subr.bf16.mxu0 0
      %1365 = vmatpush1.bf16.msra.mxu0 %v1047
      %1366 = vmatprep.subr.bf16.mxu0 0
      %1367 = vmatpush1.bf16.msra.mxu0 %v1048
      %1368 = vmatprep.subr.bf16.mxu0 0
      %1369 = vmatpush1.bf16.msra.mxu0 %v1049
      %1370 = vmatprep.subr.bf16.mxu0 0
      %1371 = vmatpush1.bf16.msra.mxu0 %v1050
      %1372 = vmatprep.subr.bf16.mxu0 0
      %1373 = vmatpush1.bf16.msra.mxu0 %v1051
      %1374 = vmatprep.subr.bf16.mxu0 0
      %1375 = vmatpush1.bf16.msra.mxu0 %v1052
      %1376 = vmatprep.subr.bf16.mxu0 0
      %1377 = vmatpush1.bf16.msra.mxu0 %v1053
      %1378 = vmatprep.mubr.bf16.mxu0 %v541
      %1379 = vmatmul.mubr.bf16.gmra.mrb[0].mxu0 %v540
      %v1380 = vpop.f32.mrb[0].mxu0
      %v1381 = vadd.f32 %v1340, %v1380
      %v1382 = vpop.f32.mrb[0].mxu0
      %v1383 = vpop.f32.mrb[0].mxu0
      %v1384 = vadd.f32 %v1343, %v1383
      %v1385 = vpop.f32.mrb[0].mxu0
      %1386 = vdwg.mxu0
      %1387 = vmatprep.subr.bf16.mxu0 0
      %1388 = vmatpush1.bf16.msra.mxu0 %v1054
      %1389 = vmatprep.subr.bf16.mxu0 0
      %1390 = vmatpush1.bf16.msra.mxu0 %v1055
      %1391 = vmatprep.subr.bf16.mxu0 0
      %1392 = vmatpush1.bf16.msra.mxu0 %v1056
      %1393 = vmatprep.subr.bf16.mxu0 0
      %1394 = vmatpush1.bf16.msra.mxu0 %v1057
      %1395 = vmatprep.subr.bf16.mxu0 0
      %1396 = vmatpush1.bf16.msra.mxu0 %v1058
      %1397 = vmatprep.subr.bf16.mxu0 0
      %1398 = vmatpush1.bf16.msra.mxu0 %v1059
      %1399 = vmatprep.subr.bf16.mxu0 0
      %1400 = vmatpush1.bf16.msra.mxu0 %v1060
      %1401 = vmatprep.subr.bf16.mxu0 0
      %1402 = vmatpush1.bf16.msra.mxu0 %v1061
      %1403 = vmatprep.subr.bf16.mxu0 0
      %1404 = vmatpush1.bf16.msra.mxu0 %v1062
      %1405 = vmatprep.subr.bf16.mxu0 0
      %1406 = vmatpush1.bf16.msra.mxu0 %v1063
      %1407 = vmatprep.subr.bf16.mxu0 0
      %1408 = vmatpush1.bf16.msra.mxu0 %v1064
      %1409 = vmatprep.subr.bf16.mxu0 0
      %1410 = vmatpush1.bf16.msra.mxu0 %v1065
      %1411 = vmatprep.subr.bf16.mxu0 0
      %1412 = vmatpush1.bf16.msra.mxu0 %v1066
      %1413 = vmatprep.subr.bf16.mxu0 0
      %1414 = vmatpush1.bf16.msra.mxu0 %v1067
      %1415 = vmatprep.subr.bf16.mxu0 0
      %1416 = vmatpush1.bf16.msra.mxu0 %v1068
      %1417 = vmatprep.subr.bf16.mxu0 0
      %1418 = vmatpush1.bf16.msra.mxu0 %v1069
      %1419 = vmatprep.mubr.bf16.mxu0 %v543
      %1420 = vmatmul.mubr.bf16.gmra.mrb[0].mxu0 %v542
      %v1421 = vpop.f32.mrb[0].mxu0
      %v1422 = vadd.f32 %v1381, %v1421
      %v1423 = vpop.f32.mrb[0].mxu0
      %v1424 = vpop.f32.mrb[0].mxu0
      %v1425 = vadd.f32 %v1384, %v1424
      %v1426 = vpop.f32.mrb[0].mxu0
      %1427 = vdwg.mxu0
      %1428 = vmatprep.subr.bf16.mxu0 0
      %1429 = vmatpush1.bf16.msra.mxu0 %v1070
      %1430 = vmatprep.subr.bf16.mxu0 0
      %1431 = vmatpush1.bf16.msra.mxu0 %v1071
      %1432 = vmatprep.subr.bf16.mxu0 0
      %1433 = vmatpush1.bf16.msra.mxu0 %v1072
      %1434 = vmatprep.subr.bf16.mxu0 0
      %1435 = vmatpush1.bf16.msra.mxu0 %v1073
      %1436 = vmatprep.subr.bf16.mxu0 0
      %1437 = vmatpush1.bf16.msra.mxu0 %v1074
      %1438 = vmatprep.subr.bf16.mxu0 0
      %1439 = vmatpush1.bf16.msra.mxu0 %v1075
      %1440 = vmatprep.subr.bf16.mxu0 0
      %1441 = vmatpush1.bf16.msra.mxu0 %v1076
      %1442 = vmatprep.subr.bf16.mxu0 0
      %1443 = vmatpush1.bf16.msra.mxu0 %v1077
      %1444 = vmatprep.subr.bf16.mxu0 0
      %1445 = vmatpush1.bf16.msra.mxu0 0
      %1446 = vmatprep.subr.bf16.mxu0 0
      %1447 = vmatpush1.bf16.msra.mxu0 0
      %1448 = vmatprep.subr.bf16.mxu0 0
      %1449 = vmatpush1.bf16.msra.mxu0 0
      %1450 = vmatprep.subr.bf16.mxu0 0
      %1451 = vmatpush1.bf16.msra.mxu0 0
      %1452 = vmatprep.subr.bf16.mxu0 0
      %1453 = vmatpush1.bf16.msra.mxu0 0
      %1454 = vmatprep.subr.bf16.mxu0 0
      %1455 = vmatpush1.bf16.msra.mxu0 0
      %1456 = vmatprep.subr.bf16.mxu0 0
      %1457 = vmatpush1.bf16.msra.mxu0 0
      %1458 = vmatprep.subr.bf16.mxu0 0
      %1459 = vmatpush1.bf16.msra.mxu0 0
      %1460 = vmatprep.mubr.bf16.mxu0 0
      %1461 = vmatmul.mubr.bf16.gmra.mrb[0].mxu0 %v544
      %v1462 = vpop.f32.mrb[0].mxu0
      %v1463 = vadd.f32 %v1422, %v1462
      %v1464 = vpop.f32.mrb[0].mxu0
      %v1465 = vpop.f32.mrb[0].mxu0
      %v1466 = vadd.f32 %v1425, %v1465
      %v1467 = vpop.f32.mrb[0].mxu0
      %1468 = vdwg.mxu0
      %v1469 = vld [vmem:[%s256] sm:$0x1]
      %v1471 = vlaneseq
      %v1472 = vshrl.u32 %v1471, 7
      %v1473 = vsub.s32 0, %v1472
      %v1474 = vrot.slane %v1469, %v1473
      %v1476 = vmul.f32 %v1463, %v1474
      %v1477 = vmul.f32 %v1466, %v1474
      %v1478 = vld [vmem:[%s259] sm:$0x1]
      %v1480 = vlaneseq
      %v1481 = vshrl.u32 %v1480, 7
      %v1482 = vsub.s32 0, %v1481
      %v1483 = vrot.slane %v1478, %v1482
      %v1485 = vadd.f32 %v1476, %v1483
      %v1486 = vadd.f32 %v1477, %v1483
      %v1487 = vmax.f32 %v1485, 0.0
      %v1488 = vmax.f32 %v1486, 0.0
      %v1489 = vpack.c.bf16 %v1488, %v1487
      %v1491 = vunpack.c.l.b16 %v1489
      %v1492 = vunpack.c.h.b16 %v1489
      %v1493 = vpack.c.b16 %v1491, %v1491
      %v1494 = vpack.c.b16 %v1492, %v1492
      %1497 = vst [vmem:[%s267] sm:$0xf] %v1493
      %1498 = vst [vmem:[%s267 + $0x4] sm:$0xf] %v1494
      %s1499 = smul.u32 2, %s19
      %p1500 = scmp.lt.s32.totalorder %s1499, 3
      %s1501 = scalar_select %p1500, %s1499, 3
      %p1502 = scmp.lt.s32.totalorder %s20, 0
      %s1503 = scalar_select %p1502, %s20, 0
      %s1504 = sadd.s32 %s1503, %s1501
      %s1505 = smul.addr %s1504, 4
      %s1506 = scalar_lea.vmem %s4, %s1505
      // Predicated region
      $region37: #{custom_cnn_forward.4} parent=35 // pred_check
        %p1507 = pneg %p151
      $region38: #{custom_cnn_forward.4} parent=35 // pred_check_branch
        %1509 = sbr.rel (%p1507) target = $region40
      $region39: #{custom_cnn_forward.4} parent=35 // pred_region
        %s1510 = smul.u32 2, %s19
      $region40: #{custom_cnn_forward.4} parent=35 // pred_fallthru
        _
    $region36: #{custom_cnn_forward.4} parent=5 // pred_fallthru
      _
    %p1511 = scmp.le.s32.totalorder 2, %s10
    // Predicated region
    $region41: #{custom_cnn_forward.4} parent=5 // pred_check
      %p1512 = pneg %p1511
    $region42: #{custom_cnn_forward.4} parent=5 // pred_check_branch
      %1514 = sbr.rel (%p1512) target = $region44
    $region43: #{custom_cnn_forward.4} parent=5 // pred_region
      %s1515 = ssub.s32 %s10, 2
      // Predicated region
      $region45: #{custom_cnn_forward.4} parent=43 // pred_check
        %p1516 = pneg %p157
      $region46: #{custom_cnn_forward.4} parent=43 // pred_check_branch
        %1518 = sbr.rel (%p1516) target = $region48
      $region47: #{custom_cnn_forward.4} parent=43 // pred_region
        %s1519 = smul.u32 2, %s21
        %p1520 = scmp.lt.s32.totalorder %s1519, 3
        %s1521 = scalar_select %p1520, %s1519, 3
        %p1522 = scmp.lt.s32.totalorder %s22, 0
        %s1523 = scalar_select %p1522, %s22, 0
        %s1524 = sadd.s32 %s1523, %s1521
        %s1525 = smul.addr %s1524, 4
        %s1526 = scalar_lea.vmem %s4, %s1525
      $region48: #{custom_cnn_forward.4} parent=43 // pred_fallthru
        _
    $region44: #{custom_cnn_forward.4} parent=5 // pred_fallthru
      _
  $region6: #{custom_cnn_forward.4} parent=0 // loop_footer
    %s14 = sadd.s32 1, %s10
  $region7: #{custom_cnn_forward.4} parent=0 // loop_footer_branch
    %9 = sbr.rel target = $region3
  $region8: #{custom_cnn_forward.4} parent=0 // loop_exit
    _

// kernel: custom_cnn_forward.5
$region0: #{custom_cnn_forward.5}
  #allocation0 [shape = 'u32[]', space=smem, size = 0x4, offset = 0x4, fixed_abs, tag = 'smem constant byte address 0x4 - core index']
  #allocation1 [shape = 'u32[144,128]{1,0:T(1,128)}', space=vmem, size = 0x12000, scoped, tag = 'internal scratch']
  %s0 = inlined_call_operand.vmem [shape: bf16[8,1152], index: 0, kind: input, shape index: {}]
  %s1 = inlined_call_operand.vmem [shape: bf16[1152,512], index: 1, kind: input, shape index: {}]
  %s2 = inlined_call_operand.vmem [shape: f32[1,512], index: 2, kind: input, shape index: {}]
  %s3 = inlined_call_operand.vmem [shape: f32[1,512], index: 3, kind: input, shape index: {}]
  %s4 = inlined_call_operand.vmem [shape: f32[2,8], index: 4, kind: input, shape index: {}]
  %s5 = inlined_call_operand.vmem [shape: bf16[512,128], index: 5, kind: input, shape index: {}]
  %s6 = inlined_call_operand.vmem [shape: f32[1,128], index: 6, kind: input, shape index: {}]
  %s7 = inlined_call_operand.hbm [shape: f32[2,128], index: 7, kind: output, shape index: {}]
  %s8 = sld [smem:[#allocation0]]
  $region38: #{custom_cnn_forward.5} parent=0
    _
  %s10 = ssub.s32 1, %s8
  %s11 = scalar_select 0, %s10, %s8
  $region1: #{custom_cnn_forward.5} parent=0
    #allocation2 [shape = 'u8[1024]{0}', space=vmem, size = 0x400, scoped, tag = 'output window, operand 0, single buffered']
    #allocation3 [shape = 's32[1]{0}', space=sflag, size = 0x4, scoped, tag = 'scoped memory for custom_cnn_forward.5']
    %12 = vsyncpa [#allocation3], 0
    // Predicated region
    $region2: #{custom_cnn_forward.5} parent=1 // pred_check
      _
    $region3: #{custom_cnn_forward.5} parent=1 // pred_check_branch
      %14 = sbr.rel (0) target = $region5
    $region4: #{custom_cnn_forward.5} parent=1 // pred_region
      _
    $region5: #{custom_cnn_forward.5} parent=1 // pred_fallthru
      _
    // Predicated region
    $region6: #{custom_cnn_forward.5} parent=1 // pred_check
      _
    $region7: #{custom_cnn_forward.5} parent=1 // pred_check_branch
      %16 = sbr.rel (0) target = $region9
    $region8: #{custom_cnn_forward.5} parent=1 // pred_region
      _
    $region9: #{custom_cnn_forward.5} parent=1 // pred_fallthru
      _
    // Predicated region
    $region10: #{custom_cnn_forward.5} parent=1 // pred_check
      _
    $region11: #{custom_cnn_forward.5} parent=1 // pred_check_branch
      %18 = sbr.rel (0) target = $region13
    $region12: #{custom_cnn_forward.5} parent=1 // pred_region
      _
    $region13: #{custom_cnn_forward.5} parent=1 // pred_fallthru
      _
    // Predicated region
    $region14: #{custom_cnn_forward.5} parent=1 // pred_check
      _
    $region15: #{custom_cnn_forward.5} parent=1 // pred_check_branch
      %20 = sbr.rel (0) target = $region17
    $region16: #{custom_cnn_forward.5} parent=1 // pred_region
      _
    $region17: #{custom_cnn_forward.5} parent=1 // pred_fallthru
      _
    // Predicated region
    $region18: #{custom_cnn_forward.5} parent=1 // pred_check
      _
    $region19: #{custom_cnn_forward.5} parent=1 // pred_check_branch
      %22 = sbr.rel (0) target = $region21
    $region20: #{custom_cnn_forward.5} parent=1 // pred_region
      _
    $region21: #{custom_cnn_forward.5} parent=1 // pred_fallthru
      _
    // Predicated region
    $region22: #{custom_cnn_forward.5} parent=1 // pred_check
      _
    $region23: #{custom_cnn_forward.5} parent=1 // pred_check_branch
      %24 = sbr.rel (0) target = $region25
    $region24: #{custom_cnn_forward.5} parent=1 // pred_region
      _
    $region25: #{custom_cnn_forward.5} parent=1 // pred_fallthru
      _
    // Predicated region
    $region26: #{custom_cnn_forward.5} parent=1 // pred_check
      _
    $region27: #{custom_cnn_forward.5} parent=1 // pred_check_branch
      %26 = sbr.rel (0) target = $region29
    $region28: #{custom_cnn_forward.5} parent=1 // pred_region
      _
    $region29: #{custom_cnn_forward.5} parent=1 // pred_fallthru
      _
    %v28 = vld [vmem:[%s0] sm:$0xff]
    %v29 = vld [vmem:[%s0 + $0x8] sm:$0xff]
    %v30 = vld [vmem:[%s0 + $0x10] sm:$0xff]
    %v31 = vld [vmem:[%s0 + $0x18] sm:$0xff]
    %v32 = vld [vmem:[%s0 + $0x20] sm:$0xf]
    %v33 = vld [vmem:[%s1] sm:$0xff]
    %v34 = vld [vmem:[%s1 + $0x8] sm:$0xff]
    %v35 = vld [vmem:[%s1 + $0x10] sm:$0xff]
    %v36 = vld [vmem:[%s1 + $0x18] sm:$0xff]
    %v37 = vld [vmem:[%s1 + $0x20] sm:$0xff]
    %v38 = vld [vmem:[%s1 + $0x28] sm:$0xff]
    %v39 = vld [vmem:[%s1 + $0x30] sm:$0xff]
    %v40 = vld [vmem:[%s1 + $0x38] sm:$0xff]
    %v41 = vld [vmem:[%s1 + $0x40] sm:$0xff]
    %v42 = vld [vmem:[%s1 + $0x48] sm:$0xff]
    %v43 = vld [vmem:[%s1 + $0x50] sm:$0xff]
    %v44 = vld [vmem:[%s1 + $0x58] sm:$0xff]
    %v45 = vld [vmem:[%s1 + $0x60] sm:$0xff]
    %v46 = vld [vmem:[%s1 + $0x68] sm:$0xff]
    %v47 = vld [vmem:[%s1 + $0x70] sm:$0xff]
    %v48 = vld [vmem:[%s1 + $0x78] sm:$0xff]
    %v49 = vld [vmem:[%s1 + $0x80] sm:$0xff]
    %v50 = vld [vmem:[%s1 + $0x88] sm:$0xff]
    %v51 = vld [vmem:[%s1 + $0x90] sm:$0xff]
    %v52 = vld [vmem:[%s1 + $0x98] sm:$0xff]
    %v53 = vld [vmem:[%s1 + $0xa0] sm:$0xff]
    %v54 = vld [vmem:[%s1 + $0xa8] sm:$0xff]
    %v55 = vld [vmem:[%s1 + $0xb0] sm:$0xff]
    %v56 = vld [vmem:[%s1 + $0xb8] sm:$0xff]
    %v57 = vld [vmem:[%s1 + $0xc0] sm:$0xff]
    %v58 = vld [vmem:[%s1 + $0xc8] sm:$0xff]
    %v59 = vld [vmem:[%s1 + $0xd0] sm:$0xff]
    %v60 = vld [vmem:[%s1 + $0xd8] sm:$0xff]
    %v61 = vld [vmem:[%s1 + $0xe0] sm:$0xff]
    %v62 = vld [vmem:[%s1 + $0xe8] sm:$0xff]
    %v63 = vld [vmem:[%s1 + $0xf0] sm:$0xff]
    %v64 = vld [vmem:[%s1 + $0xf8] sm:$0xff]
    %v65 = vld [vmem:[%s1 + $0x100] sm:$0xff]
    %v66 = vld [vmem:[%s1 + $0x108] sm:$0xff]
    %v67 = vld [vmem:[%s1 + $0x110] sm:$0xff]
    %v68 = vld [vmem:[%s1 + $0x118] sm:$0xff]
    %v69 = vld [vmem:[%s1 + $0x120] sm:$0xff]
    %v70 = vld [vmem:[%s1 + $0x128] sm:$0xff]
    %v71 = vld [vmem:[%s1 + $0x130] sm:$0xff]
    %v72 = vld [vmem:[%s1 + $0x138] sm:$0xff]
    %v73 = vld [vmem:[%s1 + $0x140] sm:$0xff]
    %v74 = vld [vmem:[%s1 + $0x148] sm:$0xff]
    %v75 = vld [vmem:[%s1 + $0x150] sm:$0xff]
    %v76 = vld [vmem:[%s1 + $0x158] sm:$0xff]
    %v77 = vld [vmem:[%s1 + $0x160] sm:$0xff]
    %v78 = vld [vmem:[%s1 + $0x168] sm:$0xff]
    %v79 = vld [vmem:[%s1 + $0x170] sm:$0xff]
    %v80 = vld [vmem:[%s1 + $0x178] sm:$0xff]
    %v81 = vld [vmem:[%s1 + $0x180] sm:$0xff]
    %v82 = vld [vmem:[%s1 + $0x188] sm:$0xff]
    %v83 = vld [vmem:[%s1 + $0x190] sm:$0xff]
    %v84 = vld [vmem:[%s1 + $0x198] sm:$0xff]
    %v85 = vld [vmem:[%s1 + $0x1a0] sm:$0xff]
    %v86 = vld [vmem:[%s1 + $0x1a8] sm:$0xff]
    %v87 = vld [vmem:[%s1 + $0x1b0] sm:$0xff]
    %v88 = vld [vmem:[%s1 + $0x1b8] sm:$0xff]
    %v89 = vld [vmem:[%s1 + $0x1c0] sm:$0xff]
    %v90 = vld [vmem:[%s1 + $0x1c8] sm:$0xff]
    %v91 = vld [vmem:[%s1 + $0x1d0] sm:$0xff]
    %v92 = vld [vmem:[%s1 + $0x1d8] sm:$0xff]
    %v93 = vld [vmem:[%s1 + $0x1e0] sm:$0xff]
    %v94 = vld [vmem:[%s1 + $0x1e8] sm:$0xff]
    %v95 = vld [vmem:[%s1 + $0x1f0] sm:$0xff]
    %v96 = vld [vmem:[%s1 + $0x1f8] sm:$0xff]
    %v97 = vld [vmem:[%s1 + $0x200] sm:$0xff]
    %v98 = vld [vmem:[%s1 + $0x208] sm:$0xff]
    %v99 = vld [vmem:[%s1 + $0x210] sm:$0xff]
    %v100 = vld [vmem:[%s1 + $0x218] sm:$0xff]
    %v101 = vld [vmem:[%s1 + $0x220] sm:$0xff]
    %v102 = vld [vmem:[%s1 + $0x228] sm:$0xff]
    %v103 = vld [vmem:[%s1 + $0x230] sm:$0xff]
    %v104 = vld [vmem:[%s1 + $0x238] sm:$0xff]
    %v105 = vld [vmem:[%s1 + $0x240] sm:$0xff]
    %v106 = vld [vmem:[%s1 + $0x248] sm:$0xff]
    %v107 = vld [vmem:[%s1 + $0x250] sm:$0xff]
    %v108 = vld [vmem:[%s1 + $0x258] sm:$0xff]
    %v109 = vld [vmem:[%s1 + $0x260] sm:$0xff]
    %v110 = vld [vmem:[%s1 + $0x268] sm:$0xff]
    %v111 = vld [vmem:[%s1 + $0x270] sm:$0xff]
    %v112 = vld [vmem:[%s1 + $0x278] sm:$0xff]
    %v113 = vld [vmem:[%s1 + $0x280] sm:$0xff]
    %v114 = vld [vmem:[%s1 + $0x288] sm:$0xff]
    %v115 = vld [vmem:[%s1 + $0x290] sm:$0xff]
    %v116 = vld [vmem:[%s1 + $0x298] sm:$0xff]
    %v117 = vld [vmem:[%s1 + $0x2a0] sm:$0xff]
    %v118 = vld [vmem:[%s1 + $0x2a8] sm:$0xff]
    %v119 = vld [vmem:[%s1 + $0x2b0] sm:$0xff]
    %v120 = vld [vmem:[%s1 + $0x2b8] sm:$0xff]
    %v121 = vld [vmem:[%s1 + $0x2c0] sm:$0xff]
    %v122 = vld [vmem:[%s1 + $0x2c8] sm:$0xff]
    %v123 = vld [vmem:[%s1 + $0x2d0] sm:$0xff]
    %v124 = vld [vmem:[%s1 + $0x2d8] sm:$0xff]
    %v125 = vld [vmem:[%s1 + $0x2e0] sm:$0xff]
    %v126 = vld [vmem:[%s1 + $0x2e8] sm:$0xff]
    %v127 = vld [vmem:[%s1 + $0x2f0] sm:$0xff]
    %v128 = vld [vmem:[%s1 + $0x2f8] sm:$0xff]
    %v129 = vld [vmem:[%s1 + $0x300] sm:$0xff]
    %v130 = vld [vmem:[%s1 + $0x308] sm:$0xff]
    %v131 = vld [vmem:[%s1 + $0x310] sm:$0xff]
    %v132 = vld [vmem:[%s1 + $0x318] sm:$0xff]
    %v133 = vld [vmem:[%s1 + $0x320] sm:$0xff]
    %v134 = vld [vmem:[%s1 + $0x328] sm:$0xff]
    %v135 = vld [vmem:[%s1 + $0x330] sm:$0xff]
    %v136 = vld [vmem:[%s1 + $0x338] sm:$0xff]
    %v137 = vld [vmem:[%s1 + $0x340] sm:$0xff]
    %v138 = vld [vmem:[%s1 + $0x348] sm:$0xff]
    %v139 = vld [vmem:[%s1 + $0x350] sm:$0xff]
    %v140 = vld [vmem:[%s1 + $0x358] sm:$0xff]
    %v141 = vld [vmem:[%s1 + $0x360] sm:$0xff]
    %v142 = vld [vmem:[%s1 + $0x368] sm:$0xff]
    %v143 = vld [vmem:[%s1 + $0x370] sm:$0xff]
    %v144 = vld [vmem:[%s1 + $0x378] sm:$0xff]
    %v145 = vld [vmem:[%s1 + $0x380] sm:$0xff]
    %v146 = vld [vmem:[%s1 + $0x388] sm:$0xff]
    %v147 = vld [vmem:[%s1 + $0x390] sm:$0xff]
    %v148 = vld [vmem:[%s1 + $0x398] sm:$0xff]
    %v149 = vld [vmem:[%s1 + $0x3a0] sm:$0xff]
    %v150 = vld [vmem:[%s1 + $0x3a8] sm:$0xff]
    %v151 = vld [vmem:[%s1 + $0x3b0] sm:$0xff]
    %v152 = vld [vmem:[%s1 + $0x3b8] sm:$0xff]
    %v153 = vld [vmem:[%s1 + $0x3c0] sm:$0xff]
    %v154 = vld [vmem:[%s1 + $0x3c8] sm:$0xff]
    %v155 = vld [vmem:[%s1 + $0x3d0] sm:$0xff]
    %v156 = vld [vmem:[%s1 + $0x3d8] sm:$0xff]
    %v157 = vld [vmem:[%s1 + $0x3e0] sm:$0xff]
    %v158 = vld [vmem:[%s1 + $0x3e8] sm:$0xff]
    %v159 = vld [vmem:[%s1 + $0x3f0] sm:$0xff]
    %v160 = vld [vmem:[%s1 + $0x3f8] sm:$0xff]
    %v161 = vld [vmem:[%s1 + $0x400] sm:$0xff]
    %v162 = vld [vmem:[%s1 + $0x408] sm:$0xff]
    %v163 = vld [vmem:[%s1 + $0x410] sm:$0xff]
    %v164 = vld [vmem:[%s1 + $0x418] sm:$0xff]
    %v165 = vld [vmem:[%s1 + $0x420] sm:$0xff]
    %v166 = vld [vmem:[%s1 + $0x428] sm:$0xff]
    %v167 = vld [vmem:[%s1 + $0x430] sm:$0xff]
    %v168 = vld [vmem:[%s1 + $0x438] sm:$0xff]
    %v169 = vld [vmem:[%s1 + $0x440] sm:$0xff]
    %v170 = vld [vmem:[%s1 + $0x448] sm:$0xff]
    %v171 = vld [vmem:[%s1 + $0x450] sm:$0xff]
    %v172 = vld [vmem:[%s1 + $0x458] sm:$0xff]
    %v173 = vld [vmem:[%s1 + $0x460] sm:$0xff]
    %v174 = vld [vmem:[%s1 + $0x468] sm:$0xff]
    %v175 = vld [vmem:[%s1 + $0x470] sm:$0xff]
    %v176 = vld [vmem:[%s1 + $0x478] sm:$0xff]
    %v177 = vld [vmem:[%s1 + $0x480] sm:$0xff]
    %v178 = vld [vmem:[%s1 + $0x488] sm:$0xff]
    %v179 = vld [vmem:[%s1 + $0x490] sm:$0xff]
    %v180 = vld [vmem:[%s1 + $0x498] sm:$0xff]
    %v181 = vld [vmem:[%s1 + $0x4a0] sm:$0xff]
    %v182 = vld [vmem:[%s1 + $0x4a8] sm:$0xff]
    %v183 = vld [vmem:[%s1 + $0x4b0] sm:$0xff]
    %v184 = vld [vmem:[%s1 + $0x4b8] sm:$0xff]
    %v185 = vld [vmem:[%s1 + $0x4c0] sm:$0xff]
    %v186 = vld [vmem:[%s1 + $0x4c8] sm:$0xff]
    %v187 = vld [vmem:[%s1 + $0x4d0] sm:$0xff]
    %v188 = vld [vmem:[%s1 + $0x4d8] sm:$0xff]
    %v189 = vld [vmem:[%s1 + $0x4e0] sm:$0xff]
    %v190 = vld [vmem:[%s1 + $0x4e8] sm:$0xff]
    %v191 = vld [vmem:[%s1 + $0x4f0] sm:$0xff]
    %v192 = vld [vmem:[%s1 + $0x4f8] sm:$0xff]
    %v193 = vld [vmem:[%s1 + $0x500] sm:$0xff]
    %v194 = vld [vmem:[%s1 + $0x508] sm:$0xff]
    %v195 = vld [vmem:[%s1 + $0x510] sm:$0xff]
    %v196 = vld [vmem:[%s1 + $0x518] sm:$0xff]
    %v197 = vld [vmem:[%s1 + $0x520] sm:$0xff]
    %v198 = vld [vmem:[%s1 + $0x528] sm:$0xff]
    %v199 = vld [vmem:[%s1 + $0x530] sm:$0xff]
    %v200 = vld [vmem:[%s1 + $0x538] sm:$0xff]
    %v201 = vld [vmem:[%s1 + $0x540] sm:$0xff]
    %v202 = vld [vmem:[%s1 + $0x548] sm:$0xff]
    %v203 = vld [vmem:[%s1 + $0x550] sm:$0xff]
    %v204 = vld [vmem:[%s1 + $0x558] sm:$0xff]
    %v205 = vld [vmem:[%s1 + $0x560] sm:$0xff]
    %v206 = vld [vmem:[%s1 + $0x568] sm:$0xff]
    %v207 = vld [vmem:[%s1 + $0x570] sm:$0xff]
    %v208 = vld [vmem:[%s1 + $0x578] sm:$0xff]
    %v209 = vld [vmem:[%s1 + $0x580] sm:$0xff]
    %v210 = vld [vmem:[%s1 + $0x588] sm:$0xff]
    %v211 = vld [vmem:[%s1 + $0x590] sm:$0xff]
    %v212 = vld [vmem:[%s1 + $0x598] sm:$0xff]
    %v213 = vld [vmem:[%s1 + $0x5a0] sm:$0xff]
    %v214 = vld [vmem:[%s1 + $0x5a8] sm:$0xff]
    %v215 = vld [vmem:[%s1 + $0x5b0] sm:$0xff]
    %v216 = vld [vmem:[%s1 + $0x5b8] sm:$0xff]
    %v217 = vld [vmem:[%s1 + $0x5c0] sm:$0xff]
    %v218 = vld [vmem:[%s1 + $0x5c8] sm:$0xff]
    %v219 = vld [vmem:[%s1 + $0x5d0] sm:$0xff]
    %v220 = vld [vmem:[%s1 + $0x5d8] sm:$0xff]
    %v221 = vld [vmem:[%s1 + $0x5e0] sm:$0xff]
    %v222 = vld [vmem:[%s1 + $0x5e8] sm:$0xff]
    %v223 = vld [vmem:[%s1 + $0x5f0] sm:$0xff]
    %v224 = vld [vmem:[%s1 + $0x5f8] sm:$0xff]
    %v225 = vld [vmem:[%s1 + $0x600] sm:$0xff]
    %v226 = vld [vmem:[%s1 + $0x608] sm:$0xff]
    %v227 = vld [vmem:[%s1 + $0x610] sm:$0xff]
    %v228 = vld [vmem:[%s1 + $0x618] sm:$0xff]
    %v229 = vld [vmem:[%s1 + $0x620] sm:$0xff]
    %v230 = vld [vmem:[%s1 + $0x628] sm:$0xff]
    %v231 = vld [vmem:[%s1 + $0x630] sm:$0xff]
    %v232 = vld [vmem:[%s1 + $0x638] sm:$0xff]
    %v233 = vld [vmem:[%s1 + $0x640] sm:$0xff]
    %v234 = vld [vmem:[%s1 + $0x648] sm:$0xff]
    %v235 = vld [vmem:[%s1 + $0x650] sm:$0xff]
    %v236 = vld [vmem:[%s1 + $0x658] sm:$0xff]
    %v237 = vld [vmem:[%s1 + $0x660] sm:$0xff]
    %v238 = vld [vmem:[%s1 + $0x668] sm:$0xff]
    %v239 = vld [vmem:[%s1 + $0x670] sm:$0xff]
    %v240 = vld [vmem:[%s1 + $0x678] sm:$0xff]
    %v241 = vld [vmem:[%s1 + $0x680] sm:$0xff]
    %v242 = vld [vmem:[%s1 + $0x688] sm:$0xff]
    %v243 = vld [vmem:[%s1 + $0x690] sm:$0xff]
    %v244 = vld [vmem:[%s1 + $0x698] sm:$0xff]
    %v245 = vld [vmem:[%s1 + $0x6a0] sm:$0xff]
    %v246 = vld [vmem:[%s1 + $0x6a8] sm:$0xff]
    %v247 = vld [vmem:[%s1 + $0x6b0] sm:$0xff]
    %v248 = vld [vmem:[%s1 + $0x6b8] sm:$0xff]
    %v249 = vld [vmem:[%s1 + $0x6c0] sm:$0xff]
    %v250 = vld [vmem:[%s1 + $0x6c8] sm:$0xff]
    %v251 = vld [vmem:[%s1 + $0x6d0] sm:$0xff]
    %v252 = vld [vmem:[%s1 + $0x6d8] sm:$0xff]
    %v253 = vld [vmem:[%s1 + $0x6e0] sm:$0xff]
    %v254 = vld [vmem:[%s1 + $0x6e8] sm:$0xff]
    %v255 = vld [vmem:[%s1 + $0x6f0] sm:$0xff]
    %v256 = vld [vmem:[%s1 + $0x6f8] sm:$0xff]
    %v257 = vld [vmem:[%s1 + $0x700] sm:$0xff]
    %v258 = vld [vmem:[%s1 + $0x708] sm:$0xff]
    %v259 = vld [vmem:[%s1 + $0x710] sm:$0xff]
    %v260 = vld [vmem:[%s1 + $0x718] sm:$0xff]
    %v261 = vld [vmem:[%s1 + $0x720] sm:$0xff]
    %v262 = vld [vmem:[%s1 + $0x728] sm:$0xff]
    %v263 = vld [vmem:[%s1 + $0x730] sm:$0xff]
    %v264 = vld [vmem:[%s1 + $0x738] sm:$0xff]
    %v265 = vld [vmem:[%s1 + $0x740] sm:$0xff]
    %v266 = vld [vmem:[%s1 + $0x748] sm:$0xff]
    %v267 = vld [vmem:[%s1 + $0x750] sm:$0xff]
    %v268 = vld [vmem:[%s1 + $0x758] sm:$0xff]
    %v269 = vld [vmem:[%s1 + $0x760] sm:$0xff]
    %v270 = vld [vmem:[%s1 + $0x768] sm:$0xff]
    %v271 = vld [vmem:[%s1 + $0x770] sm:$0xff]
    %v272 = vld [vmem:[%s1 + $0x778] sm:$0xff]
    %v273 = vld [vmem:[%s1 + $0x780] sm:$0xff]
    %v274 = vld [vmem:[%s1 + $0x788] sm:$0xff]
    %v275 = vld [vmem:[%s1 + $0x790] sm:$0xff]
    %v276 = vld [vmem:[%s1 + $0x798] sm:$0xff]
    %v277 = vld [vmem:[%s1 + $0x7a0] sm:$0xff]
    %v278 = vld [vmem:[%s1 + $0x7a8] sm:$0xff]
    %v279 = vld [vmem:[%s1 + $0x7b0] sm:$0xff]
    %v280 = vld [vmem:[%s1 + $0x7b8] sm:$0xff]
    %v281 = vld [vmem:[%s1 + $0x7c0] sm:$0xff]
    %v282 = vld [vmem:[%s1 + $0x7c8] sm:$0xff]
    %v283 = vld [vmem:[%s1 + $0x7d0] sm:$0xff]
    %v284 = vld [vmem:[%s1 + $0x7d8] sm:$0xff]
    %v285 = vld [vmem:[%s1 + $0x7e0] sm:$0xff]
    %v286 = vld [vmem:[%s1 + $0x7e8] sm:$0xff]
    %v287 = vld [vmem:[%s1 + $0x7f0] sm:$0xff]
    %v288 = vld [vmem:[%s1 + $0x7f8] sm:$0xff]
    %v289 = vld [vmem:[%s1 + $0x800] sm:$0xff]
    %v290 = vld [vmem:[%s1 + $0x808] sm:$0xff]
    %v291 = vld [vmem:[%s1 + $0x810] sm:$0xff]
    %v292 = vld [vmem:[%s1 + $0x818] sm:$0xff]
    %v293 = vld [vmem:[%s1 + $0x820] sm:$0xff]
    %v294 = vld [vmem:[%s1 + $0x828] sm:$0xff]
    %v295 = vld [vmem:[%s1 + $0x830] sm:$0xff]
    %v296 = vld [vmem:[%s1 + $0x838] sm:$0xff]
    %v297 = vld [vmem:[%s1 + $0x840] sm:$0xff]
    %v298 = vld [vmem:[%s1 + $0x848] sm:$0xff]
    %v299 = vld [vmem:[%s1 + $0x850] sm:$0xff]
    %v300 = vld [vmem:[%s1 + $0x858] sm:$0xff]
    %v301 = vld [vmem:[%s1 + $0x860] sm:$0xff]
    %v302 = vld [vmem:[%s1 + $0x868] sm:$0xff]
    %v303 = vld [vmem:[%s1 + $0x870] sm:$0xff]
    %v304 = vld [vmem:[%s1 + $0x878] sm:$0xff]
    %v305 = vld [vmem:[%s1 + $0x880] sm:$0xff]
    %v306 = vld [vmem:[%s1 + $0x888] sm:$0xff]
    %v307 = vld [vmem:[%s1 + $0x890] sm:$0xff]
    %v308 = vld [vmem:[%s1 + $0x898] sm:$0xff]
    %v309 = vld [vmem:[%s1 + $0x8a0] sm:$0xff]
    %v310 = vld [vmem:[%s1 + $0x8a8] sm:$0xff]
    %v311 = vld [vmem:[%s1 + $0x8b0] sm:$0xff]
    %v312 = vld [vmem:[%s1 + $0x8b8] sm:$0xff]
    %v313 = vld [vmem:[%s1 + $0x8c0] sm:$0xff]
    %v314 = vld [vmem:[%s1 + $0x8c8] sm:$0xff]
    %v315 = vld [vmem:[%s1 + $0x8d0] sm:$0xff]
    %v316 = vld [vmem:[%s1 + $0x8d8] sm:$0xff]
    %v317 = vld [vmem:[%s1 + $0x8e0] sm:$0xff]
    %v318 = vld [vmem:[%s1 + $0x8e8] sm:$0xff]
    %v319 = vld [vmem:[%s1 + $0x8f0] sm:$0xff]
    %v320 = vld [vmem:[%s1 + $0x8f8] sm:$0xff]
    %v326 = vunpack.c.l.b16 %v28
    %v327 = vunpack.c.h.b16 %v28
    %v328 = vunpack.c.l.b16 %v29
    %v329 = vunpack.c.h.b16 %v29
    %v330 = vunpack.c.l.b16 %v30
    %v331 = vunpack.c.h.b16 %v30
    %v332 = vunpack.c.l.b16 %v31
    %v333 = vunpack.c.h.b16 %v31
    %v334 = vunpack.c.l.b16 %v32
    %v335 = vpack.c.b16 %v326, %v326
    %v336 = vpack.c.b16 %v327, %v327
    %v337 = vpack.c.b16 %v328, %v328
    %v338 = vpack.c.b16 %v329, %v329
    %v339 = vpack.c.b16 %v330, %v330
    %v340 = vpack.c.b16 %v331, %v331
    %v341 = vpack.c.b16 %v332, %v332
    %v342 = vpack.c.b16 %v333, %v333
    %v343 = vpack.c.b16 %v334, %v334
    %v641 = vunpack.c.l.b16 %v33
    %v642 = vunpack.c.h.b16 %v33
    %v643 = vunpack.c.l.b16 %v34
    %v644 = vunpack.c.h.b16 %v34
    %v645 = vunpack.c.l.b16 %v35
    %v646 = vunpack.c.h.b16 %v35
    %v647 = vunpack.c.l.b16 %v36
    %v648 = vunpack.c.h.b16 %v36
    %v649 = vunpack.c.l.b16 %v37
    %v650 = vunpack.c.h.b16 %v37
    %v651 = vunpack.c.l.b16 %v38
    %v652 = vunpack.c.h.b16 %v38
    %v653 = vunpack.c.l.b16 %v39
    %v654 = vunpack.c.h.b16 %v39
    %v655 = vunpack.c.l.b16 %v40
    %v656 = vunpack.c.h.b16 %v40
    %v657 = vunpack.c.l.b16 %v41
    %v658 = vunpack.c.h.b16 %v41
    %v659 = vunpack.c.l.b16 %v42
    %v660 = vunpack.c.h.b16 %v42
    %v661 = vunpack.c.l.b16 %v43
    %v662 = vunpack.c.h.b16 %v43
    %v663 = vunpack.c.l.b16 %v44
    %v664 = vunpack.c.h.b16 %v44
    %v665 = vunpack.c.l.b16 %v45
    %v666 = vunpack.c.h.b16 %v45
    %v667 = vunpack.c.l.b16 %v46
    %v668 = vunpack.c.h.b16 %v46
    %v669 = vunpack.c.l.b16 %v47
    %v670 = vunpack.c.h.b16 %v47
    %v671 = vunpack.c.l.b16 %v48
    %v672 = vunpack.c.h.b16 %v48
    %v673 = vunpack.c.l.b16 %v49
    %v674 = vunpack.c.h.b16 %v49
    %v675 = vunpack.c.l.b16 %v50
    %v676 = vunpack.c.h.b16 %v50
    %v677 = vunpack.c.l.b16 %v51
    %v678 = vunpack.c.h.b16 %v51
    %v679 = vunpack.c.l.b16 %v52
    %v680 = vunpack.c.h.b16 %v52
    %v681 = vunpack.c.l.b16 %v53
    %v682 = vunpack.c.h.b16 %v53
    %v683 = vunpack.c.l.b16 %v54
    %v684 = vunpack.c.h.b16 %v54
    %v685 = vunpack.c.l.b16 %v55
    %v686 = vunpack.c.h.b16 %v55
    %v687 = vunpack.c.l.b16 %v56
    %v688 = vunpack.c.h.b16 %v56
    %v689 = vunpack.c.l.b16 %v57
    %v690 = vunpack.c.h.b16 %v57
    %v691 = vunpack.c.l.b16 %v58
    %v692 = vunpack.c.h.b16 %v58
    %v693 = vunpack.c.l.b16 %v59
    %v694 = vunpack.c.h.b16 %v59
    %v695 = vunpack.c.l.b16 %v60
    %v696 = vunpack.c.h.b16 %v60
    %v697 = vunpack.c.l.b16 %v61
    %v698 = vunpack.c.h.b16 %v61
    %v699 = vunpack.c.l.b16 %v62
    %v700 = vunpack.c.h.b16 %v62
    %v701 = vunpack.c.l.b16 %v63
    %v702 = vunpack.c.h.b16 %v63
    %v703 = vunpack.c.l.b16 %v64
    %v704 = vunpack.c.h.b16 %v64
    %v705 = vunpack.c.l.b16 %v65
    %v706 = vunpack.c.h.b16 %v65
    %v707 = vunpack.c.l.b16 %v66
    %v708 = vunpack.c.h.b16 %v66
    %v709 = vunpack.c.l.b16 %v67
    %v710 = vunpack.c.h.b16 %v67
    %v711 = vunpack.c.l.b16 %v68
    %v712 = vunpack.c.h.b16 %v68
    %v713 = vunpack.c.l.b16 %v69
    %v714 = vunpack.c.h.b16 %v69
    %v715 = vunpack.c.l.b16 %v70
    %v716 = vunpack.c.h.b16 %v70
    %v717 = vunpack.c.l.b16 %v71
    %v718 = vunpack.c.h.b16 %v71
    %v719 = vunpack.c.l.b16 %v72
    %v720 = vunpack.c.h.b16 %v72
    %v721 = vunpack.c.l.b16 %v73
    %v722 = vunpack.c.h.b16 %v73
    %v723 = vunpack.c.l.b16 %v74
    %v724 = vunpack.c.h.b16 %v74
    %v725 = vunpack.c.l.b16 %v75
    %v726 = vunpack.c.h.b16 %v75
    %v727 = vunpack.c.l.b16 %v76
    %v728 = vunpack.c.h.b16 %v76
    %v729 = vunpack.c.l.b16 %v77
    %v730 = vunpack.c.h.b16 %v77
    %v731 = vunpack.c.l.b16 %v78
    %v732 = vunpack.c.h.b16 %v78
    %v733 = vunpack.c.l.b16 %v79
    %v734 = vunpack.c.h.b16 %v79
    %v735 = vunpack.c.l.b16 %v80
    %v736 = vunpack.c.h.b16 %v80
    %v737 = vunpack.c.l.b16 %v81
    %v738 = vunpack.c.h.b16 %v81
    %v739 = vunpack.c.l.b16 %v82
    %v740 = vunpack.c.h.b16 %v82
    %v741 = vunpack.c.l.b16 %v83
    %v742 = vunpack.c.h.b16 %v83
    %v743 = vunpack.c.l.b16 %v84
    %v744 = vunpack.c.h.b16 %v84
    %v745 = vunpack.c.l.b16 %v85
    %v746 = vunpack.c.h.b16 %v85
    %v747 = vunpack.c.l.b16 %v86
    %v748 = vunpack.c.h.b16 %v86
    %v749 = vunpack.c.l.b16 %v87
    %v750 = vunpack.c.h.b16 %v87
    %v751 = vunpack.c.l.b16 %v88
    %v752 = vunpack.c.h.b16 %v88
    %v753 = vunpack.c.l.b16 %v89
    %v754 = vunpack.c.h.b16 %v89
    %v755 = vunpack.c.l.b16 %v90
    %v756 = vunpack.c.h.b16 %v90
    %v757 = vunpack.c.l.b16 %v91
    %v758 = vunpack.c.h.b16 %v91
    %v759 = vunpack.c.l.b16 %v92
    %v760 = vunpack.c.h.b16 %v92
    %v761 = vunpack.c.l.b16 %v93
    %v762 = vunpack.c.h.b16 %v93
    %v763 = vunpack.c.l.b16 %v94
    %v764 = vunpack.c.h.b16 %v94
    %v765 = vunpack.c.l.b16 %v95
    %v766 = vunpack.c.h.b16 %v95
    %v767 = vunpack.c.l.b16 %v96
    %v768 = vunpack.c.h.b16 %v96
    %v769 = vunpack.c.l.b16 %v97
    %v770 = vunpack.c.h.b16 %v97
    %v771 = vunpack.c.l.b16 %v98
    %v772 = vunpack.c.h.b16 %v98
    %v773 = vunpack.c.l.b16 %v99
    %v774 = vunpack.c.h.b16 %v99
    %v775 = vunpack.c.l.b16 %v100
    %v776 = vunpack.c.h.b16 %v100
    %v777 = vunpack.c.l.b16 %v101
    %v778 = vunpack.c.h.b16 %v101
    %v779 = vunpack.c.l.b16 %v102
    %v780 = vunpack.c.h.b16 %v102
    %v781 = vunpack.c.l.b16 %v103
    %v782 = vunpack.c.h.b16 %v103
    %v783 = vunpack.c.l.b16 %v104
    %v784 = vunpack.c.h.b16 %v104
    %v785 = vunpack.c.l.b16 %v105
    %v786 = vunpack.c.h.b16 %v105
    %v787 = vunpack.c.l.b16 %v106
    %v788 = vunpack.c.h.b16 %v106
    %v789 = vunpack.c.l.b16 %v107
    %v790 = vunpack.c.h.b16 %v107
    %v791 = vunpack.c.l.b16 %v108
    %v792 = vunpack.c.h.b16 %v108
    %v793 = vunpack.c.l.b16 %v109
    %v794 = vunpack.c.h.b16 %v109
    %v795 = vunpack.c.l.b16 %v110
    %v796 = vunpack.c.h.b16 %v110
    %v797 = vunpack.c.l.b16 %v111
    %v798 = vunpack.c.h.b16 %v111
    %v799 = vunpack.c.l.b16 %v112
    %v800 = vunpack.c.h.b16 %v112
    %v801 = vunpack.c.l.b16 %v113
    %v802 = vunpack.c.h.b16 %v113
    %v803 = vunpack.c.l.b16 %v114
    %v804 = vunpack.c.h.b16 %v114
    %v805 = vunpack.c.l.b16 %v115
    %v806 = vunpack.c.h.b16 %v115
    %v807 = vunpack.c.l.b16 %v116
    %v808 = vunpack.c.h.b16 %v116
    %v809 = vunpack.c.l.b16 %v117
    %v810 = vunpack.c.h.b16 %v117
    %v811 = vunpack.c.l.b16 %v118
    %v812 = vunpack.c.h.b16 %v118
    %v813 = vunpack.c.l.b16 %v119
    %v814 = vunpack.c.h.b16 %v119
    %v815 = vunpack.c.l.b16 %v120
    %v816 = vunpack.c.h.b16 %v120
    %v817 = vunpack.c.l.b16 %v121
    %v818 = vunpack.c.h.b16 %v121
    %v819 = vunpack.c.l.b16 %v122
    %v820 = vunpack.c.h.b16 %v122
    %v821 = vunpack.c.l.b16 %v123
    %v822 = vunpack.c.h.b16 %v123
    %v823 = vunpack.c.l.b16 %v124
    %v824 = vunpack.c.h.b16 %v124
    %v825 = vunpack.c.l.b16 %v125
    %v826 = vunpack.c.h.b16 %v125
    %v827 = vunpack.c.l.b16 %v126
    %v828 = vunpack.c.h.b16 %v126
    %v829 = vunpack.c.l.b16 %v127
    %v830 = vunpack.c.h.b16 %v127
    %v831 = vunpack.c.l.b16 %v128
    %v832 = vunpack.c.h.b16 %v128
    %v833 = vunpack.c.l.b16 %v129
    %v834 = vunpack.c.h.b16 %v129
    %v835 = vunpack.c.l.b16 %v130
    %v836 = vunpack.c.h.b16 %v130
    %v837 = vunpack.c.l.b16 %v131
    %v838 = vunpack.c.h.b16 %v131
    %v839 = vunpack.c.l.b16 %v132
    %v840 = vunpack.c.h.b16 %v132
    %v841 = vunpack.c.l.b16 %v133
    %v842 = vunpack.c.h.b16 %v133
    %v843 = vunpack.c.l.b16 %v134
    %v844 = vunpack.c.h.b16 %v134
    %v845 = vunpack.c.l.b16 %v135
    %v846 = vunpack.c.h.b16 %v135
    %v847 = vunpack.c.l.b16 %v136
    %v848 = vunpack.c.h.b16 %v136
    %v849 = vunpack.c.l.b16 %v137
    %v850 = vunpack.c.h.b16 %v137
    %v851 = vunpack.c.l.b16 %v138
    %v852 = vunpack.c.h.b16 %v138
    %v853 = vunpack.c.l.b16 %v139
    %v854 = vunpack.c.h.b16 %v139
    %v855 = vunpack.c.l.b16 %v140
    %v856 = vunpack.c.h.b16 %v140
    %v857 = vunpack.c.l.b16 %v141
    %v858 = vunpack.c.h.b16 %v141
    %v859 = vunpack.c.l.b16 %v142
    %v860 = vunpack.c.h.b16 %v142
    %v861 = vunpack.c.l.b16 %v143
    %v862 = vunpack.c.h.b16 %v143
    %v863 = vunpack.c.l.b16 %v144
    %v864 = vunpack.c.h.b16 %v144
    %v865 = vunpack.c.l.b16 %v145
    %v866 = vunpack.c.h.b16 %v145
    %v867 = vunpack.c.l.b16 %v146
    %v868 = vunpack.c.h.b16 %v146
    %v869 = vunpack.c.l.b16 %v147
    %v870 = vunpack.c.h.b16 %v147
    %v871 = vunpack.c.l.b16 %v148
    %v872 = vunpack.c.h.b16 %v148
    %v873 = vunpack.c.l.b16 %v149
    %v874 = vunpack.c.h.b16 %v149
    %v875 = vunpack.c.l.b16 %v150
    %v876 = vunpack.c.h.b16 %v150
    %v877 = vunpack.c.l.b16 %v151
    %v878 = vunpack.c.h.b16 %v151
    %v879 = vunpack.c.l.b16 %v152
    %v880 = vunpack.c.h.b16 %v152
    %v881 = vunpack.c.l.b16 %v153
    %v882 = vunpack.c.h.b16 %v153
    %v883 = vunpack.c.l.b16 %v154
    %v884 = vunpack.c.h.b16 %v154
    %v885 = vunpack.c.l.b16 %v155
    %v886 = vunpack.c.h.b16 %v155
    %v887 = vunpack.c.l.b16 %v156
    %v888 = vunpack.c.h.b16 %v156
    %v889 = vunpack.c.l.b16 %v157
    %v890 = vunpack.c.h.b16 %v157
    %v891 = vunpack.c.l.b16 %v158
    %v892 = vunpack.c.h.b16 %v158
    %v893 = vunpack.c.l.b16 %v159
    %v894 = vunpack.c.h.b16 %v159
    %v895 = vunpack.c.l.b16 %v160
    %v896 = vunpack.c.h.b16 %v160
    %v897 = vunpack.c.l.b16 %v161
    %v898 = vunpack.c.h.b16 %v161
    %v899 = vunpack.c.l.b16 %v162
    %v900 = vunpack.c.h.b16 %v162
    %v901 = vunpack.c.l.b16 %v163
    %v902 = vunpack.c.h.b16 %v163
    %v903 = vunpack.c.l.b16 %v164
    %v904 = vunpack.c.h.b16 %v164
    %v905 = vunpack.c.l.b16 %v165
    %v906 = vunpack.c.h.b16 %v165
    %v907 = vunpack.c.l.b16 %v166
    %v908 = vunpack.c.h.b16 %v166
    %v909 = vunpack.c.l.b16 %v167
    %v910 = vunpack.c.h.b16 %v167
    %v911 = vunpack.c.l.b16 %v168
    %v912 = vunpack.c.h.b16 %v168
    %v913 = vunpack.c.l.b16 %v169
    %v914 = vunpack.c.h.b16 %v169
    %v915 = vunpack.c.l.b16 %v170
    %v916 = vunpack.c.h.b16 %v170
    %v917 = vunpack.c.l.b16 %v171
    %v918 = vunpack.c.h.b16 %v171
    %v919 = vunpack.c.l.b16 %v172
    %v920 = vunpack.c.h.b16 %v172
    %v921 = vunpack.c.l.b16 %v173
    %v922 = vunpack.c.h.b16 %v173
    %v923 = vunpack.c.l.b16 %v174
    %v924 = vunpack.c.h.b16 %v174
    %v925 = vunpack.c.l.b16 %v175
    %v926 = vunpack.c.h.b16 %v175
    %v927 = vunpack.c.l.b16 %v176
    %v928 = vunpack.c.h.b16 %v176
    %v929 = vunpack.c.l.b16 %v177
    %v930 = vunpack.c.h.b16 %v177
    %v931 = vunpack.c.l.b16 %v178
    %v932 = vunpack.c.h.b16 %v178
    %v933 = vunpack.c.l.b16 %v179
    %v934 = vunpack.c.h.b16 %v179
    %v935 = vunpack.c.l.b16 %v180
    %v936 = vunpack.c.h.b16 %v180
    %v937 = vunpack.c.l.b16 %v181
    %v938 = vunpack.c.h.b16 %v181
    %v939 = vunpack.c.l.b16 %v182
    %v940 = vunpack.c.h.b16 %v182
    %v941 = vunpack.c.l.b16 %v183
    %v942 = vunpack.c.h.b16 %v183
    %v943 = vunpack.c.l.b16 %v184
    %v944 = vunpack.c.h.b16 %v184
    %v945 = vunpack.c.l.b16 %v185
    %v946 = vunpack.c.h.b16 %v185
    %v947 = vunpack.c.l.b16 %v186
    %v948 = vunpack.c.h.b16 %v186
    %v949 = vunpack.c.l.b16 %v187
    %v950 = vunpack.c.h.b16 %v187
    %v951 = vunpack.c.l.b16 %v188
    %v952 = vunpack.c.h.b16 %v188
    %v953 = vunpack.c.l.b16 %v189
    %v954 = vunpack.c.h.b16 %v189
    %v955 = vunpack.c.l.b16 %v190
    %v956 = vunpack.c.h.b16 %v190
    %v957 = vunpack.c.l.b16 %v191
    %v958 = vunpack.c.h.b16 %v191
    %v959 = vunpack.c.l.b16 %v192
    %v960 = vunpack.c.h.b16 %v192
    %v961 = vunpack.c.l.b16 %v193
    %v962 = vunpack.c.h.b16 %v193
    %v963 = vunpack.c.l.b16 %v194
    %v964 = vunpack.c.h.b16 %v194
    %v965 = vunpack.c.l.b16 %v195
    %v966 = vunpack.c.h.b16 %v195
    %v967 = vunpack.c.l.b16 %v196
    %v968 = vunpack.c.h.b16 %v196
    %v969 = vunpack.c.l.b16 %v197
    %v970 = vunpack.c.h.b16 %v197
    %v971 = vunpack.c.l.b16 %v198
    %v972 = vunpack.c.h.b16 %v198
    %v973 = vunpack.c.l.b16 %v199
    %v974 = vunpack.c.h.b16 %v199
    %v975 = vunpack.c.l.b16 %v200
    %v976 = vunpack.c.h.b16 %v200
    %v977 = vunpack.c.l.b16 %v201
    %v978 = vunpack.c.h.b16 %v201
    %v979 = vunpack.c.l.b16 %v202
    %v980 = vunpack.c.h.b16 %v202
    %v981 = vunpack.c.l.b16 %v203
    %v982 = vunpack.c.h.b16 %v203
    %v983 = vunpack.c.l.b16 %v204
    %v984 = vunpack.c.h.b16 %v204
    %v985 = vunpack.c.l.b16 %v205
    %v986 = vunpack.c.h.b16 %v205
    %v987 = vunpack.c.l.b16 %v206
    %v988 = vunpack.c.h.b16 %v206
    %v989 = vunpack.c.l.b16 %v207
    %v990 = vunpack.c.h.b16 %v207
    %v991 = vunpack.c.l.b16 %v208
    %v992 = vunpack.c.h.b16 %v208
    %v993 = vunpack.c.l.b16 %v209
    %v994 = vunpack.c.h.b16 %v209
    %v995 = vunpack.c.l.b16 %v210
    %v996 = vunpack.c.h.b16 %v210
    %v997 = vunpack.c.l.b16 %v211
    %v998 = vunpack.c.h.b16 %v211
    %v999 = vunpack.c.l.b16 %v212
    %v1000 = vunpack.c.h.b16 %v212
    %v1001 = vunpack.c.l.b16 %v213
    %v1002 = vunpack.c.h.b16 %v213
    %v1003 = vunpack.c.l.b16 %v214
    %v1004 = vunpack.c.h.b16 %v214
    %v1005 = vunpack.c.l.b16 %v215
    %v1006 = vunpack.c.h.b16 %v215
    %v1007 = vunpack.c.l.b16 %v216
    %v1008 = vunpack.c.h.b16 %v216
    %v1009 = vunpack.c.l.b16 %v217
    %v1010 = vunpack.c.h.b16 %v217
    %v1011 = vunpack.c.l.b16 %v218
    %v1012 = vunpack.c.h.b16 %v218
    %v1013 = vunpack.c.l.b16 %v219
    %v1014 = vunpack.c.h.b16 %v219
    %v1015 = vunpack.c.l.b16 %v220
    %v1016 = vunpack.c.h.b16 %v220
    %v1017 = vunpack.c.l.b16 %v221
    %v1018 = vunpack.c.h.b16 %v221
    %v1019 = vunpack.c.l.b16 %v222
    %v1020 = vunpack.c.h.b16 %v222
    %v1021 = vunpack.c.l.b16 %v223
    %v1022 = vunpack.c.h.b16 %v223
    %v1023 = vunpack.c.l.b16 %v224
    %v1024 = vunpack.c.h.b16 %v224
    %v1025 = vunpack.c.l.b16 %v225
    %v1026 = vunpack.c.h.b16 %v225
    %v1027 = vunpack.c.l.b16 %v226
    %v1028 = vunpack.c.h.b16 %v226
    %v1029 = vunpack.c.l.b16 %v227
    %v1030 = vunpack.c.h.b16 %v227
    %v1031 = vunpack.c.l.b16 %v228
    %v1032 = vunpack.c.h.b16 %v228
    %v1033 = vunpack.c.l.b16 %v229
    %v1034 = vunpack.c.h.b16 %v229
    %v1035 = vunpack.c.l.b16 %v230
    %v1036 = vunpack.c.h.b16 %v230
    %v1037 = vunpack.c.l.b16 %v231
    %v1038 = vunpack.c.h.b16 %v231
    %v1039 = vunpack.c.l.b16 %v232
    %v1040 = vunpack.c.h.b16 %v232
    %v1041 = vunpack.c.l.b16 %v233
    %v1042 = vunpack.c.h.b16 %v233
    %v1043 = vunpack.c.l.b16 %v234
    %v1044 = vunpack.c.h.b16 %v234
    %v1045 = vunpack.c.l.b16 %v235
    %v1046 = vunpack.c.h.b16 %v235
    %v1047 = vunpack.c.l.b16 %v236
    %v1048 = vunpack.c.h.b16 %v236
    %v1049 = vunpack.c.l.b16 %v237
    %v1050 = vunpack.c.h.b16 %v237
    %v1051 = vunpack.c.l.b16 %v238
    %v1052 = vunpack.c.h.b16 %v238
    %v1053 = vunpack.c.l.b16 %v239
    %v1054 = vunpack.c.h.b16 %v239
    %v1055 = vunpack.c.l.b16 %v240
    %v1056 = vunpack.c.h.b16 %v240
    %v1057 = vunpack.c.l.b16 %v241
    %v1058 = vunpack.c.h.b16 %v241
    %v1059 = vunpack.c.l.b16 %v242
    %v1060 = vunpack.c.h.b16 %v242
    %v1061 = vunpack.c.l.b16 %v243
    %v1062 = vunpack.c.h.b16 %v243
    %v1063 = vunpack.c.l.b16 %v244
    %v1064 = vunpack.c.h.b16 %v244
    %v1065 = vunpack.c.l.b16 %v245
    %v1066 = vunpack.c.h.b16 %v245
    %v1067 = vunpack.c.l.b16 %v246
    %v1068 = vunpack.c.h.b16 %v246
    %v1069 = vunpack.c.l.b16 %v247
    %v1070 = vunpack.c.h.b16 %v247
    %v1071 = vunpack.c.l.b16 %v248
    %v1072 = vunpack.c.h.b16 %v248
    %v1073 = vunpack.c.l.b16 %v249
    %v1074 = vunpack.c.h.b16 %v249
    %v1075 = vunpack.c.l.b16 %v250
    %v1076 = vunpack.c.h.b16 %v250
    %v1077 = vunpack.c.l.b16 %v251
    %v1078 = vunpack.c.h.b16 %v251
    %v1079 = vunpack.c.l.b16 %v252
    %v1080 = vunpack.c.h.b16 %v252
    %v1081 = vunpack.c.l.b16 %v253
    %v1082 = vunpack.c.h.b16 %v253
    %v1083 = vunpack.c.l.b16 %v254
    %v1084 = vunpack.c.h.b16 %v254
    %v1085 = vunpack.c.l.b16 %v255
    %v1086 = vunpack.c.h.b16 %v255
    %v1087 = vunpack.c.l.b16 %v256
    %v1088 = vunpack.c.h.b16 %v256
    %v1089 = vunpack.c.l.b16 %v257
    %v1090 = vunpack.c.h.b16 %v257
    %v1091 = vunpack.c.l.b16 %v258
    %v1092 = vunpack.c.h.b16 %v258
    %v1093 = vunpack.c.l.b16 %v259
    %v1094 = vunpack.c.h.b16 %v259
    %v1095 = vunpack.c.l.b16 %v260
    %v1096 = vunpack.c.h.b16 %v260
    %v1097 = vunpack.c.l.b16 %v261
    %v1098 = vunpack.c.h.b16 %v261
    %v1099 = vunpack.c.l.b16 %v262
    %v1100 = vunpack.c.h.b16 %v262
    %v1101 = vunpack.c.l.b16 %v263
    %v1102 = vunpack.c.h.b16 %v263
    %v1103 = vunpack.c.l.b16 %v264
    %v1104 = vunpack.c.h.b16 %v264
    %v1105 = vunpack.c.l.b16 %v265
    %v1106 = vunpack.c.h.b16 %v265
    %v1107 = vunpack.c.l.b16 %v266
    %v1108 = vunpack.c.h.b16 %v266
    %v1109 = vunpack.c.l.b16 %v267
    %v1110 = vunpack.c.h.b16 %v267
    %v1111 = vunpack.c.l.b16 %v268
    %v1112 = vunpack.c.h.b16 %v268
    %v1113 = vunpack.c.l.b16 %v269
    %v1114 = vunpack.c.h.b16 %v269
    %v1115 = vunpack.c.l.b16 %v270
    %v1116 = vunpack.c.h.b16 %v270
    %v1117 = vunpack.c.l.b16 %v271
    %v1118 = vunpack.c.h.b16 %v271
    %v1119 = vunpack.c.l.b16 %v272
    %v1120 = vunpack.c.h.b16 %v272
    %v1121 = vunpack.c.l.b16 %v273
    %v1122 = vunpack.c.h.b16 %v273
    %v1123 = vunpack.c.l.b16 %v274
    %v1124 = vunpack.c.h.b16 %v274
    %v1125 = vunpack.c.l.b16 %v275
    %v1126 = vunpack.c.h.b16 %v275
    %v1127 = vunpack.c.l.b16 %v276
    %v1128 = vunpack.c.h.b16 %v276
    %v1129 = vunpack.c.l.b16 %v277
    %v1130 = vunpack.c.h.b16 %v277
    %v1131 = vunpack.c.l.b16 %v278
    %v1132 = vunpack.c.h.b16 %v278
    %v1133 = vunpack.c.l.b16 %v279
    %v1134 = vunpack.c.h.b16 %v279
    %v1135 = vunpack.c.l.b16 %v280
    %v1136 = vunpack.c.h.b16 %v280
    %v1137 = vunpack.c.l.b16 %v281
    %v1138 = vunpack.c.h.b16 %v281
    %v1139 = vunpack.c.l.b16 %v282
    %v1140 = vunpack.c.h.b16 %v282
    %v1141 = vunpack.c.l.b16 %v283
    %v1142 = vunpack.c.h.b16 %v283
    %v1143 = vunpack.c.l.b16 %v284
    %v1144 = vunpack.c.h.b16 %v284
    %v1145 = vunpack.c.l.b16 %v285
    %v1146 = vunpack.c.h.b16 %v285
    %v1147 = vunpack.c.l.b16 %v286
    %v1148 = vunpack.c.h.b16 %v286
    %v1149 = vunpack.c.l.b16 %v287
    %v1150 = vunpack.c.h.b16 %v287
    %v1151 = vunpack.c.l.b16 %v288
    %v1152 = vunpack.c.h.b16 %v288
    %v1153 = vunpack.c.l.b16 %v289
    %v1154 = vunpack.c.h.b16 %v289
    %v1155 = vunpack.c.l.b16 %v290
    %v1156 = vunpack.c.h.b16 %v290
    %v1157 = vunpack.c.l.b16 %v291
    %v1158 = vunpack.c.h.b16 %v291
    %v1159 = vunpack.c.l.b16 %v292
    %v1160 = vunpack.c.h.b16 %v292
    %v1161 = vunpack.c.l.b16 %v293
    %v1162 = vunpack.c.h.b16 %v293
    %v1163 = vunpack.c.l.b16 %v294
    %v1164 = vunpack.c.h.b16 %v294
    %v1165 = vunpack.c.l.b16 %v295
    %v1166 = vunpack.c.h.b16 %v295
    %v1167 = vunpack.c.l.b16 %v296
    %v1168 = vunpack.c.h.b16 %v296
    %v1169 = vunpack.c.l.b16 %v297
    %v1170 = vunpack.c.h.b16 %v297
    %v1171 = vunpack.c.l.b16 %v298
    %v1172 = vunpack.c.h.b16 %v298
    %v1173 = vunpack.c.l.b16 %v299
    %v1174 = vunpack.c.h.b16 %v299
    %v1175 = vunpack.c.l.b16 %v300
    %v1176 = vunpack.c.h.b16 %v300
    %v1177 = vunpack.c.l.b16 %v301
    %v1178 = vunpack.c.h.b16 %v301
    %v1179 = vunpack.c.l.b16 %v302
    %v1180 = vunpack.c.h.b16 %v302
    %v1181 = vunpack.c.l.b16 %v303
    %v1182 = vunpack.c.h.b16 %v303
    %v1183 = vunpack.c.l.b16 %v304
    %v1184 = vunpack.c.h.b16 %v304
    %v1185 = vunpack.c.l.b16 %v305
    %v1186 = vunpack.c.h.b16 %v305
    %v1187 = vunpack.c.l.b16 %v306
    %v1188 = vunpack.c.h.b16 %v306
    %v1189 = vunpack.c.l.b16 %v307
    %v1190 = vunpack.c.h.b16 %v307
    %v1191 = vunpack.c.l.b16 %v308
    %v1192 = vunpack.c.h.b16 %v308
    %v1193 = vunpack.c.l.b16 %v309
    %v1194 = vunpack.c.h.b16 %v309
    %v1195 = vunpack.c.l.b16 %v310
    %v1196 = vunpack.c.h.b16 %v310
    %v1197 = vunpack.c.l.b16 %v311
    %v1198 = vunpack.c.h.b16 %v311
    %v1199 = vunpack.c.l.b16 %v312
    %v1200 = vunpack.c.h.b16 %v312
    %v1201 = vunpack.c.l.b16 %v313
    %v1202 = vunpack.c.h.b16 %v313
    %v1203 = vunpack.c.l.b16 %v314
    %v1204 = vunpack.c.h.b16 %v314
    %v1205 = vunpack.c.l.b16 %v315
    %v1206 = vunpack.c.h.b16 %v315
    %v1207 = vunpack.c.l.b16 %v316
    %v1208 = vunpack.c.h.b16 %v316
    %v1209 = vunpack.c.l.b16 %v317
    %v1210 = vunpack.c.h.b16 %v317
    %v1211 = vunpack.c.l.b16 %v318
    %v1212 = vunpack.c.h.b16 %v318
    %v1213 = vunpack.c.l.b16 %v319
    %v1214 = vunpack.c.h.b16 %v319
    %v1215 = vunpack.c.l.b16 %v320
    %v1216 = vunpack.c.h.b16 %v320
    %v1217 = vpack.c.b16 %v645, %v641
    %v1218 = vpack.c.b16 %v646, %v642
    %v1219 = vpack.c.b16 %v647, %v643
    %v1220 = vpack.c.b16 %v648, %v644
    %v1221 = vpack.c.b16 %v653, %v649
    %v1222 = vpack.c.b16 %v654, %v650
    %v1223 = vpack.c.b16 %v655, %v651
    %v1224 = vpack.c.b16 %v656, %v652
    %v1225 = vpack.c.b16 %v661, %v657
    %v1226 = vpack.c.b16 %v662, %v658
    %v1227 = vpack.c.b16 %v663, %v659
    %v1228 = vpack.c.b16 %v664, %v660
    %v1229 = vpack.c.b16 %v669, %v665
    %v1230 = vpack.c.b16 %v670, %v666
    %v1231 = vpack.c.b16 %v671, %v667
    %v1232 = vpack.c.b16 %v672, %v668
    %v1233 = vpack.c.b16 %v677, %v673
    %v1234 = vpack.c.b16 %v678, %v674
    %v1235 = vpack.c.b16 %v679, %v675
    %v1236 = vpack.c.b16 %v680, %v676
    %v1237 = vpack.c.b16 %v685, %v681
    %v1238 = vpack.c.b16 %v686, %v682
    %v1239 = vpack.c.b16 %v687, %v683
    %v1240 = vpack.c.b16 %v688, %v684
    %v1241 = vpack.c.b16 %v693, %v689
    %v1242 = vpack.c.b16 %v694, %v690
    %v1243 = vpack.c.b16 %v695, %v691
    %v1244 = vpack.c.b16 %v696, %v692
    %v1245 = vpack.c.b16 %v701, %v697
    %v1246 = vpack.c.b16 %v702, %v698
    %v1247 = vpack.c.b16 %v703, %v699
    %v1248 = vpack.c.b16 %v704, %v700
    %v1249 = vpack.c.b16 %v709, %v705
    %v1250 = vpack.c.b16 %v710, %v706
    %v1251 = vpack.c.b16 %v711, %v707
    %v1252 = vpack.c.b16 %v712, %v708
    %v1253 = vpack.c.b16 %v717, %v713
    %v1254 = vpack.c.b16 %v718, %v714
    %v1255 = vpack.c.b16 %v719, %v715
    %v1256 = vpack.c.b16 %v720, %v716
    %v1257 = vpack.c.b16 %v725, %v721
    %v1258 = vpack.c.b16 %v726, %v722
    %v1259 = vpack.c.b16 %v727, %v723
    %v1260 = vpack.c.b16 %v728, %v724
    %v1261 = vpack.c.b16 %v733, %v729
    %v1262 = vpack.c.b16 %v734, %v730
    %v1263 = vpack.c.b16 %v735, %v731
    %v1264 = vpack.c.b16 %v736, %v732
    %v1265 = vpack.c.b16 %v741, %v737
    %v1266 = vpack.c.b16 %v742, %v738
    %v1267 = vpack.c.b16 %v743, %v739
    %v1268 = vpack.c.b16 %v744, %v740
    %v1269 = vpack.c.b16 %v749, %v745
    %v1270 = vpack.c.b16 %v750, %v746
    %v1271 = vpack.c.b16 %v751, %v747
    %v1272 = vpack.c.b16 %v752, %v748
    %v1273 = vpack.c.b16 %v757, %v753
    %v1274 = vpack.c.b16 %v758, %v754
    %v1275 = vpack.c.b16 %v759, %v755
    %v1276 = vpack.c.b16 %v760, %v756
    %v1277 = vpack.c.b16 %v765, %v761
    %v1278 = vpack.c.b16 %v766, %v762
    %v1279 = vpack.c.b16 %v767, %v763
    %v1280 = vpack.c.b16 %v768, %v764
    %v1281 = vpack.c.b16 %v773, %v769
    %v1282 = vpack.c.b16 %v774, %v770
    %v1283 = vpack.c.b16 %v775, %v771
    %v1284 = vpack.c.b16 %v776, %v772
    %v1285 = vpack.c.b16 %v781, %v777
    %v1286 = vpack.c.b16 %v782, %v778
    %v1287 = vpack.c.b16 %v783, %v779
    %v1288 = vpack.c.b16 %v784, %v780
    %v1289 = vpack.c.b16 %v789, %v785
    %v1290 = vpack.c.b16 %v790, %v786
    %v1291 = vpack.c.b16 %v791, %v787
    %v1292 = vpack.c.b16 %v792, %v788
    %v1293 = vpack.c.b16 %v797, %v793
    %v1294 = vpack.c.b16 %v798, %v794
    %v1295 = vpack.c.b16 %v799, %v795
    %v1296 = vpack.c.b16 %v800, %v796
    %v1297 = vpack.c.b16 %v805, %v801
    %v1298 = vpack.c.b16 %v806, %v802
    %v1299 = vpack.c.b16 %v807, %v803
    %v1300 = vpack.c.b16 %v808, %v804
    %v1301 = vpack.c.b16 %v813, %v809
    %v1302 = vpack.c.b16 %v814, %v810
    %v1303 = vpack.c.b16 %v815, %v811
    %v1304 = vpack.c.b16 %v816, %v812
    %v1305 = vpack.c.b16 %v821, %v817
    %v1306 = vpack.c.b16 %v822, %v818
    %v1307 = vpack.c.b16 %v823, %v819
    %v1308 = vpack.c.b16 %v824, %v820
    %v1309 = vpack.c.b16 %v829, %v825
    %v1310 = vpack.c.b16 %v830, %v826
    %v1311 = vpack.c.b16 %v831, %v827
    %v1312 = vpack.c.b16 %v832, %v828
    %v1313 = vpack.c.b16 %v837, %v833
    %v1314 = vpack.c.b16 %v838, %v834
    %v1315 = vpack.c.b16 %v839, %v835
    %v1316 = vpack.c.b16 %v840, %v836
    %v1317 = vpack.c.b16 %v845, %v841
    %v1318 = vpack.c.b16 %v846, %v842
    %v1319 = vpack.c.b16 %v847, %v843
    %v1320 = vpack.c.b16 %v848, %v844
    %v1321 = vpack.c.b16 %v853, %v849
    %v1322 = vpack.c.b16 %v854, %v850
    %v1323 = vpack.c.b16 %v855, %v851
    %v1324 = vpack.c.b16 %v856, %v852
    %v1325 = vpack.c.b16 %v861, %v857
    %v1326 = vpack.c.b16 %v862, %v858
    %v1327 = vpack.c.b16 %v863, %v859
    %v1328 = vpack.c.b16 %v864, %v860
    %v1329 = vpack.c.b16 %v869, %v865
    %v1330 = vpack.c.b16 %v870, %v866
    %v1331 = vpack.c.b16 %v871, %v867
    %v1332 = vpack.c.b16 %v872, %v868
    %v1333 = vpack.c.b16 %v877, %v873
    %v1334 = vpack.c.b16 %v878, %v874
    %v1335 = vpack.c.b16 %v879, %v875
    %v1336 = vpack.c.b16 %v880, %v876
    %v1337 = vpack.c.b16 %v885, %v881
    %v1338 = vpack.c.b16 %v886, %v882
    %v1339 = vpack.c.b16 %v887, %v883
    %v1340 = vpack.c.b16 %v888, %v884
    %v1341 = vpack.c.b16 %v893, %v889
    %v1342 = vpack.c.b16 %v894, %v890
    %v1343 = vpack.c.b16 %v895, %v891
    %v1344 = vpack.c.b16 %v896, %v892
    %v1345 = vpack.c.b16 %v901, %v897
    %v1346 = vpack.c.b16 %v902, %v898
    %v1347 = vpack.c.b16 %v903, %v899
    %v1348 = vpack.c.b16 %v904, %v900
    %v1349 = vpack.c.b16 %v909, %v905
    %v1350 = vpack.c.b16 %v910, %v906
    %v1351 = vpack.c.b16 %v911, %v907
    %v1352 = vpack.c.b16 %v912, %v908
    %v1353 = vpack.c.b16 %v917, %v913
    %v1354 = vpack.c.b16 %v918, %v914
    %v1355 = vpack.c.b16 %v919, %v915
    %v1356 = vpack.c.b16 %v920, %v916
    %v1357 = vpack.c.b16 %v925, %v921
    %v1358 = vpack.c.b16 %v926, %v922
    %v1359 = vpack.c.b16 %v927, %v923
    %v1360 = vpack.c.b16 %v928, %v924
    %v1361 = vpack.c.b16 %v933, %v929
    %v1362 = vpack.c.b16 %v934, %v930
    %v1363 = vpack.c.b16 %v935, %v931
    %v1364 = vpack.c.b16 %v936, %v932
    %v1365 = vpack.c.b16 %v941, %v937
    %v1366 = vpack.c.b16 %v942, %v938
    %v1367 = vpack.c.b16 %v943, %v939
    %v1368 = vpack.c.b16 %v944, %v940
    %v1369 = vpack.c.b16 %v949, %v945
    %v1370 = vpack.c.b16 %v950, %v946
    %v1371 = vpack.c.b16 %v951, %v947
    %v1372 = vpack.c.b16 %v952, %v948
    %v1373 = vpack.c.b16 %v957, %v953
    %v1374 = vpack.c.b16 %v958, %v954
    %v1375 = vpack.c.b16 %v959, %v955
    %v1376 = vpack.c.b16 %v960, %v956
    %v1377 = vpack.c.b16 %v965, %v961
    %v1378 = vpack.c.b16 %v966, %v962
    %v1379 = vpack.c.b16 %v967, %v963
    %v1380 = vpack.c.b16 %v968, %v964
    %v1381 = vpack.c.b16 %v973, %v969
    %v1382 = vpack.c.b16 %v974, %v970
    %v1383 = vpack.c.b16 %v975, %v971
    %v1384 = vpack.c.b16 %v976, %v972
    %v1385 = vpack.c.b16 %v981, %v977
    %v1386 = vpack.c.b16 %v982, %v978
    %v1387 = vpack.c.b16 %v983, %v979
    %v1388 = vpack.c.b16 %v984, %v980
    %v1389 = vpack.c.b16 %v989, %v985
    %v1390 = vpack.c.b16 %v990, %v986
    %v1391 = vpack.c.b16 %v991, %v987
    %v1392 = vpack.c.b16 %v992, %v988
    %v1393 = vpack.c.b16 %v997, %v993
    %v1394 = vpack.c.b16 %v998, %v994
    %v1395 = vpack.c.b16 %v999, %v995
    %v1396 = vpack.c.b16 %v1000, %v996
    %v1397 = vpack.c.b16 %v1005, %v1001
    %v1398 = vpack.c.b16 %v1006, %v1002
    %v1399 = vpack.c.b16 %v1007, %v1003
    %v1400 = vpack.c.b16 %v1008, %v1004
    %v1401 = vpack.c.b16 %v1013, %v1009
    %v1402 = vpack.c.b16 %v1014, %v1010
    %v1403 = vpack.c.b16 %v1015, %v1011
    %v1404 = vpack.c.b16 %v1016, %v1012
    %v1405 = vpack.c.b16 %v1021, %v1017
    %v1406 = vpack.c.b16 %v1022, %v1018
    %v1407 = vpack.c.b16 %v1023, %v1019
    %v1408 = vpack.c.b16 %v1024, %v1020
    %v1409 = vpack.c.b16 %v1029, %v1025
    %v1410 = vpack.c.b16 %v1030, %v1026
    %v1411 = vpack.c.b16 %v1031, %v1027
    %v1412 = vpack.c.b16 %v1032, %v1028
    %v1413 = vpack.c.b16 %v1037, %v1033
    %v1414 = vpack.c.b16 %v1038, %v1034
    %v1415 = vpack.c.b16 %v1039, %v1035
    %v1416 = vpack.c.b16 %v1040, %v1036
    %v1417 = vpack.c.b16 %v1045, %v1041
    %v1418 = vpack.c.b16 %v1046, %v1042
    %v1419 = vpack.c.b16 %v1047, %v1043
    %v1420 = vpack.c.b16 %v1048, %v1044
    %v1421 = vpack.c.b16 %v1053, %v1049
    %v1422 = vpack.c.b16 %v1054, %v1050
    %v1423 = vpack.c.b16 %v1055, %v1051
    %v1424 = vpack.c.b16 %v1056, %v1052
    %v1425 = vpack.c.b16 %v1061, %v1057
    %v1426 = vpack.c.b16 %v1062, %v1058
    %v1427 = vpack.c.b16 %v1063, %v1059
    %v1428 = vpack.c.b16 %v1064, %v1060
    %v1429 = vpack.c.b16 %v1069, %v1065
    %v1430 = vpack.c.b16 %v1070, %v1066
    %v1431 = vpack.c.b16 %v1071, %v1067
    %v1432 = vpack.c.b16 %v1072, %v1068
    %v1433 = vpack.c.b16 %v1077, %v1073
    %v1434 = vpack.c.b16 %v1078, %v1074
    %v1435 = vpack.c.b16 %v1079, %v1075
    %v1436 = vpack.c.b16 %v1080, %v1076
    %v1437 = vpack.c.b16 %v1085, %v1081
    %v1438 = vpack.c.b16 %v1086, %v1082
    %v1439 = vpack.c.b16 %v1087, %v1083
    %v1440 = vpack.c.b16 %v1088, %v1084
    %v1441 = vpack.c.b16 %v1093, %v1089
    %v1442 = vpack.c.b16 %v1094, %v1090
    %v1443 = vpack.c.b16 %v1095, %v1091
    %v1444 = vpack.c.b16 %v1096, %v1092
    %v1445 = vpack.c.b16 %v1101, %v1097
    %v1446 = vpack.c.b16 %v1102, %v1098
    %v1447 = vpack.c.b16 %v1103, %v1099
    %v1448 = vpack.c.b16 %v1104, %v1100
    %v1449 = vpack.c.b16 %v1109, %v1105
    %v1450 = vpack.c.b16 %v1110, %v1106
    %v1451 = vpack.c.b16 %v1111, %v1107
    %v1452 = vpack.c.b16 %v1112, %v1108
    %v1453 = vpack.c.b16 %v1117, %v1113
    %v1454 = vpack.c.b16 %v1118, %v1114
    %v1455 = vpack.c.b16 %v1119, %v1115
    %v1456 = vpack.c.b16 %v1120, %v1116
    %v1457 = vpack.c.b16 %v1125, %v1121
    %v1458 = vpack.c.b16 %v1126, %v1122
    %v1459 = vpack.c.b16 %v1127, %v1123
    %v1460 = vpack.c.b16 %v1128, %v1124
    %v1461 = vpack.c.b16 %v1133, %v1129
    %v1462 = vpack.c.b16 %v1134, %v1130
    %v1463 = vpack.c.b16 %v1135, %v1131
    %v1464 = vpack.c.b16 %v1136, %v1132
    %v1465 = vpack.c.b16 %v1141, %v1137
    %v1466 = vpack.c.b16 %v1142, %v1138
    %v1467 = vpack.c.b16 %v1143, %v1139
    %v1468 = vpack.c.b16 %v1144, %v1140
    %v1469 = vpack.c.b16 %v1149, %v1145
    %v1470 = vpack.c.b16 %v1150, %v1146
    %v1471 = vpack.c.b16 %v1151, %v1147
    %v1472 = vpack.c.b16 %v1152, %v1148
    %v1473 = vpack.c.b16 %v1157, %v1153
    %v1474 = vpack.c.b16 %v1158, %v1154
    %v1475 = vpack.c.b16 %v1159, %v1155
    %v1476 = vpack.c.b16 %v1160, %v1156
    %v1477 = vpack.c.b16 %v1165, %v1161
    %v1478 = vpack.c.b16 %v1166, %v1162
    %v1479 = vpack.c.b16 %v1167, %v1163
    %v1480 = vpack.c.b16 %v1168, %v1164
    %v1481 = vpack.c.b16 %v1173, %v1169
    %v1482 = vpack.c.b16 %v1174, %v1170
    %v1483 = vpack.c.b16 %v1175, %v1171
    %v1484 = vpack.c.b16 %v1176, %v1172
    %v1485 = vpack.c.b16 %v1181, %v1177
    %v1486 = vpack.c.b16 %v1182, %v1178
    %v1487 = vpack.c.b16 %v1183, %v1179
    %v1488 = vpack.c.b16 %v1184, %v1180
    %v1489 = vpack.c.b16 %v1189, %v1185
    %v1490 = vpack.c.b16 %v1190, %v1186
    %v1491 = vpack.c.b16 %v1191, %v1187
    %v1492 = vpack.c.b16 %v1192, %v1188
    %v1493 = vpack.c.b16 %v1197, %v1193
    %v1494 = vpack.c.b16 %v1198, %v1194
    %v1495 = vpack.c.b16 %v1199, %v1195
    %v1496 = vpack.c.b16 %v1200, %v1196
    %v1497 = vpack.c.b16 %v1205, %v1201
    %v1498 = vpack.c.b16 %v1206, %v1202
    %v1499 = vpack.c.b16 %v1207, %v1203
    %v1500 = vpack.c.b16 %v1208, %v1204
    %v1501 = vpack.c.b16 %v1213, %v1209
    %v1502 = vpack.c.b16 %v1214, %v1210
    %v1503 = vpack.c.b16 %v1215, %v1211
    %v1504 = vpack.c.b16 %v1216, %v1212
    %1793 = vmatprep.subr.bf16.mxu0 %v1218
    %1794 = vmatpush1.bf16.msra.mxu0 %v1217
    %1795 = vmatprep.subr.bf16.mxu0 %v1222
    %1796 = vmatpush1.bf16.msra.mxu0 %v1221
    %1797 = vmatprep.subr.bf16.mxu0 %v1226
    %1798 = vmatpush1.bf16.msra.mxu0 %v1225
    %1799 = vmatprep.subr.bf16.mxu0 %v1230
    %1800 = vmatpush1.bf16.msra.mxu0 %v1229
    %1801 = vmatprep.subr.bf16.mxu0 %v1234
    %1802 = vmatpush1.bf16.msra.mxu0 %v1233
    %1803 = vmatprep.subr.bf16.mxu0 %v1238
    %1804 = vmatpush1.bf16.msra.mxu0 %v1237
    %1805 = vmatprep.subr.bf16.mxu0 %v1242
    %1806 = vmatpush1.bf16.msra.mxu0 %v1241
    %1807 = vmatprep.subr.bf16.mxu0 %v1246
    %1808 = vmatpush1.bf16.msra.mxu0 %v1245
    %1809 = vmatprep.subr.bf16.mxu0 %v1250
    %1810 = vmatpush1.bf16.msra.mxu0 %v1249
    %1811 = vmatprep.subr.bf16.mxu0 %v1254
    %1812 = vmatpush1.bf16.msra.mxu0 %v1253
    %1813 = vmatprep.subr.bf16.mxu0 %v1258
    %1814 = vmatpush1.bf16.msra.mxu0 %v1257
    %1815 = vmatprep.subr.bf16.mxu0 %v1262
    %1816 = vmatpush1.bf16.msra.mxu0 %v1261
    %1817 = vmatprep.subr.bf16.mxu0 %v1266
    %1818 = vmatpush1.bf16.msra.mxu0 %v1265
    %1819 = vmatprep.subr.bf16.mxu0 %v1270
    %1820 = vmatpush1.bf16.msra.mxu0 %v1269
    %1821 = vmatprep.subr.bf16.mxu0 %v1274
    %1822 = vmatpush1.bf16.msra.mxu0 %v1273
    %1823 = vmatprep.subr.bf16.mxu0 %v1278
    %1824 = vmatpush1.bf16.msra.mxu0 %v1277
    %1825 = vmatprep.mubr.bf16.mxu0 %v336
    %1826 = vmatmul.mubr.bf16.gmra.mrb[0].mxu0 %v335
    %v1827 = vpop.f32.mrb[0].mxu0
    %v1828 = vadd.f32 0.0, %v1827
    %v1829 = vpop.f32.mrb[0].mxu0
    %v1830 = vadd.f32 0.0, %v1829
    %v1831 = vpop.f32.mrb[0].mxu0
    %v1832 = vpop.f32.mrb[0].mxu0
    %1833 = vdwg.mxu0
    %1834 = vmatprep.subr.bf16.mxu0 %v1282
    %1835 = vmatpush1.bf16.msra.mxu0 %v1281
    %1836 = vmatprep.subr.bf16.mxu0 %v1286
    %1837 = vmatpush1.bf16.msra.mxu0 %v1285
    %1838 = vmatprep.subr.bf16.mxu0 %v1290
    %1839 = vmatpush1.bf16.msra.mxu0 %v1289
    %1840 = vmatprep.subr.bf16.mxu0 %v1294
    %1841 = vmatpush1.bf16.msra.mxu0 %v1293
    %1842 = vmatprep.subr.bf16.mxu0 %v1298
    %1843 = vmatpush1.bf16.msra.mxu0 %v1297
    %1844 = vmatprep.subr.bf16.mxu0 %v1302
    %1845 = vmatpush1.bf16.msra.mxu0 %v1301
    %1846 = vmatprep.subr.bf16.mxu0 %v1306
    %1847 = vmatpush1.bf16.msra.mxu0 %v1305
    %1848 = vmatprep.subr.bf16.mxu0 %v1310
    %1849 = vmatpush1.bf16.msra.mxu0 %v1309
    %1850 = vmatprep.subr.bf16.mxu0 %v1314
    %1851 = vmatpush1.bf16.msra.mxu0 %v1313
    %1852 = vmatprep.subr.bf16.mxu0 %v1318
    %1853 = vmatpush1.bf16.msra.mxu0 %v1317
    %1854 = vmatprep.subr.bf16.mxu0 %v1322
    %1855 = vmatpush1.bf16.msra.mxu0 %v1321
    %1856 = vmatprep.subr.bf16.mxu0 %v1326
    %1857 = vmatpush1.bf16.msra.mxu0 %v1325
    %1858 = vmatprep.subr.bf16.mxu0 %v1330
    %1859 = vmatpush1.bf16.msra.mxu0 %v1329
    %1860 = vmatprep.subr.bf16.mxu0 %v1334
    %1861 = vmatpush1.bf16.msra.mxu0 %v1333
    %1862 = vmatprep.subr.bf16.mxu0 %v1338
    %1863 = vmatpush1.bf16.msra.mxu0 %v1337
    %1864 = vmatprep.subr.bf16.mxu0 %v1342
    %1865 = vmatpush1.bf16.msra.mxu0 %v1341
    %1866 = vmatprep.mubr.bf16.mxu0 %v338
    %1867 = vmatmul.mubr.bf16.gmra.mrb[0].mxu0 %v337
    %v1868 = vpop.f32.mrb[0].mxu0
    %v1869 = vadd.f32 %v1828, %v1868
    %v1870 = vpop.f32.mrb[0].mxu0
    %v1871 = vadd.f32 %v1830, %v1870
    %v1872 = vpop.f32.mrb[0].mxu0
    %v1873 = vpop.f32.mrb[0].mxu0
    %1874 = vdwg.mxu0
    %1875 = vmatprep.subr.bf16.mxu0 %v1346
    %1876 = vmatpush1.bf16.msra.mxu0 %v1345
    %1877 = vmatprep.subr.bf16.mxu0 %v1350
    %1878 = vmatpush1.bf16.msra.mxu0 %v1349
    %1879 = vmatprep.subr.bf16.mxu0 %v1354
    %1880 = vmatpush1.bf16.msra.mxu0 %v1353
    %1881 = vmatprep.subr.bf16.mxu0 %v1358
    %1882 = vmatpush1.bf16.msra.mxu0 %v1357
    %1883 = vmatprep.subr.bf16.mxu0 %v1362
    %1884 = vmatpush1.bf16.msra.mxu0 %v1361
    %1885 = vmatprep.subr.bf16.mxu0 %v1366
    %1886 = vmatpush1.bf16.msra.mxu0 %v1365
    %1887 = vmatprep.subr.bf16.mxu0 %v1370
    %1888 = vmatpush1.bf16.msra.mxu0 %v1369
    %1889 = vmatprep.subr.bf16.mxu0 %v1374
    %1890 = vmatpush1.bf16.msra.mxu0 %v1373
    %1891 = vmatprep.subr.bf16.mxu0 %v1378
    %1892 = vmatpush1.bf16.msra.mxu0 %v1377
    %1893 = vmatprep.subr.bf16.mxu0 %v1382
    %1894 = vmatpush1.bf16.msra.mxu0 %v1381
    %1895 = vmatprep.subr.bf16.mxu0 %v1386
    %1896 = vmatpush1.bf16.msra.mxu0 %v1385
    %1897 = vmatprep.subr.bf16.mxu0 %v1390
    %1898 = vmatpush1.bf16.msra.mxu0 %v1389
    %1899 = vmatprep.subr.bf16.mxu0 %v1394
    %1900 = vmatpush1.bf16.msra.mxu0 %v1393
    %1901 = vmatprep.subr.bf16.mxu0 %v1398
    %1902 = vmatpush1.bf16.msra.mxu0 %v1397
    %1903 = vmatprep.subr.bf16.mxu0 %v1402
    %1904 = vmatpush1.bf16.msra.mxu0 %v1401
    %1905 = vmatprep.subr.bf16.mxu0 %v1406
    %1906 = vmatpush1.bf16.msra.mxu0 %v1405
    %1907 = vmatprep.mubr.bf16.mxu0 %v340
    %1908 = vmatmul.mubr.bf16.gmra.mrb[0].mxu0 %v339
    %v1909 = vpop.f32.mrb[0].mxu0
    %v1910 = vadd.f32 %v1869, %v1909
    %v1911 = vpop.f32.mrb[0].mxu0
    %v1912 = vadd.f32 %v1871, %v1911
    %v1913 = vpop.f32.mrb[0].mxu0
    %v1914 = vpop.f32.mrb[0].mxu0
    %1915 = vdwg.mxu0
    %1916 = vmatprep.subr.bf16.mxu0 %v1410
    %1917 = vmatpush1.bf16.msra.mxu0 %v1409
    %1918 = vmatprep.subr.bf16.mxu0 %v1414
    %1919 = vmatpush1.bf16.msra.mxu0 %v1413
    %1920 = vmatprep.subr.bf16.mxu0 %v1418
    %1921 = vmatpush1.bf16.msra.mxu0 %v1417
    %1922 = vmatprep.subr.bf16.mxu0 %v1422
    %1923 = vmatpush1.bf16.msra.mxu0 %v1421
    %1924 = vmatprep.subr.bf16.mxu0 %v1426
    %1925 = vmatpush1.bf16.msra.mxu0 %v1425
    %1926 = vmatprep.subr.bf16.mxu0 %v1430
    %1927 = vmatpush1.bf16.msra.mxu0 %v1429
    %1928 = vmatprep.subr.bf16.mxu0 %v1434
    %1929 = vmatpush1.bf16.msra.mxu0 %v1433
    %1930 = vmatprep.subr.bf16.mxu0 %v1438
    %1931 = vmatpush1.bf16.msra.mxu0 %v1437
    %1932 = vmatprep.subr.bf16.mxu0 %v1442
    %1933 = vmatpush1.bf16.msra.mxu0 %v1441
    %1934 = vmatprep.subr.bf16.mxu0 %v1446
    %1935 = vmatpush1.bf16.msra.mxu0 %v1445
    %1936 = vmatprep.subr.bf16.mxu0 %v1450
    %1937 = vmatpush1.bf16.msra.mxu0 %v1449
    %1938 = vmatprep.subr.bf16.mxu0 %v1454
    %1939 = vmatpush1.bf16.msra.mxu0 %v1453
    %1940 = vmatprep.subr.bf16.mxu0 %v1458
    %1941 = vmatpush1.bf16.msra.mxu0 %v1457
    %1942 = vmatprep.subr.bf16.mxu0 %v1462
    %1943 = vmatpush1.bf16.msra.mxu0 %v1461
    %1944 = vmatprep.subr.bf16.mxu0 %v1466
    %1945 = vmatpush1.bf16.msra.mxu0 %v1465
    %1946 = vmatprep.subr.bf16.mxu0 %v1470
    %1947 = vmatpush1.bf16.msra.mxu0 %v1469
    %1948 = vmatprep.mubr.bf16.mxu0 %v342
    %1949 = vmatmul.mubr.bf16.gmra.mrb[0].mxu0 %v341
    %v1950 = vpop.f32.mrb[0].mxu0
    %v1951 = vadd.f32 %v1910, %v1950
    %v1952 = vpop.f32.mrb[0].mxu0
    %v1953 = vadd.f32 %v1912, %v1952
    %v1954 = vpop.f32.mrb[0].mxu0
    %v1955 = vpop.f32.mrb[0].mxu0
    %1956 = vdwg.mxu0
    %1957 = vmatprep.subr.bf16.mxu0 %v1474
    %1958 = vmatpush1.bf16.msra.mxu0 %v1473
    %1959 = vmatprep.subr.bf16.mxu0 %v1478
    %1960 = vmatpush1.bf16.msra.mxu0 %v1477
    %1961 = vmatprep.subr.bf16.mxu0 %v1482
    %1962 = vmatpush1.bf16.msra.mxu0 %v1481
    %1963 = vmatprep.subr.bf16.mxu0 %v1486
    %1964 = vmatpush1.bf16.msra.mxu0 %v1485
    %1965 = vmatprep.subr.bf16.mxu0 %v1490
    %1966 = vmatpush1.bf16.msra.mxu0 %v1489
    %1967 = vmatprep.subr.bf16.mxu0 %v1494
    %1968 = vmatpush1.bf16.msra.mxu0 %v1493
    %1969 = vmatprep.subr.bf16.mxu0 %v1498
    %1970 = vmatpush1.bf16.msra.mxu0 %v1497
    %1971 = vmatprep.subr.bf16.mxu0 %v1502
    %1972 = vmatpush1.bf16.msra.mxu0 %v1501
    %1973 = vmatprep.subr.bf16.mxu0 0
    %1974 = vmatpush1.bf16.msra.mxu0 0
    %1975 = vmatprep.subr.bf16.mxu0 0
    %1976 = vmatpush1.bf16.msra.mxu0 0
    %1977 = vmatprep.subr.bf16.mxu0 0
    %1978 = vmatpush1.bf16.msra.mxu0 0
    %1979 = vmatprep.subr.bf16.mxu0 0
    %1980 = vmatpush1.bf16.msra.mxu0 0
    %1981 = vmatprep.subr.bf16.mxu0 0
    %1982 = vmatpush1.bf16.msra.mxu0 0
    %1983 = vmatprep.subr.bf16.mxu0 0
    %1984 = vmatpush1.bf16.msra.mxu0 0
    %1985 = vmatprep.subr.bf16.mxu0 0
    %1986 = vmatpush1.bf16.msra.mxu0 0
    %1987 = vmatprep.subr.bf16.mxu0 0
    %1988 = vmatpush1.bf16.msra.mxu0 0
    %1989 = vmatprep.mubr.bf16.mxu0 0
    %1990 = vmatmul.mubr.bf16.gmra.mrb[0].mxu0 %v343
    %v1991 = vpop.f32.mrb[0].mxu0
    %v1992 = vadd.f32 %v1951, %v1991
    %v1993 = vpop.f32.mrb[0].mxu0
    %v1994 = vadd.f32 %v1953, %v1993
    %v1995 = vpop.f32.mrb[0].mxu0
    %v1996 = vpop.f32.mrb[0].mxu0
    %1997 = vdwg.mxu0
    %1998 = vmatprep.subr.bf16.mxu0 %v1220
    %1999 = vmatpush1.bf16.msra.mxu0 %v1219
    %2000 = vmatprep.subr.bf16.mxu0 %v1224
    %2001 = vmatpush1.bf16.msra.mxu0 %v1223
    %2002 = vmatprep.subr.bf16.mxu0 %v1228
    %2003 = vmatpush1.bf16.msra.mxu0 %v1227
    %2004 = vmatprep.subr.bf16.mxu0 %v1232
    %2005 = vmatpush1.bf16.msra.mxu0 %v1231
    %2006 = vmatprep.subr.bf16.mxu0 %v1236
    %2007 = vmatpush1.bf16.msra.mxu0 %v1235
    %2008 = vmatprep.subr.bf16.mxu0 %v1240
    %2009 = vmatpush1.bf16.msra.mxu0 %v1239
    %2010 = vmatprep.subr.bf16.mxu0 %v1244
    %2011 = vmatpush1.bf16.msra.mxu0 %v1243
    %2012 = vmatprep.subr.bf16.mxu0 %v1248
    %2013 = vmatpush1.bf16.msra.mxu0 %v1247
    %2014 = vmatprep.subr.bf16.mxu0 %v1252
    %2015 = vmatpush1.bf16.msra.mxu0 %v1251
    %2016 = vmatprep.subr.bf16.mxu0 %v1256
    %2017 = vmatpush1.bf16.msra.mxu0 %v1255
    %2018 = vmatprep.subr.bf16.mxu0 %v1260
    %2019 = vmatpush1.bf16.msra.mxu0 %v1259
    %2020 = vmatprep.subr.bf16.mxu0 %v1264
    %2021 = vmatpush1.bf16.msra.mxu0 %v1263
    %2022 = vmatprep.subr.bf16.mxu0 %v1268
    %2023 = vmatpush1.bf16.msra.mxu0 %v1267
    %2024 = vmatprep.subr.bf16.mxu0 %v1272
    %2025 = vmatpush1.bf16.msra.mxu0 %v1271
    %2026 = vmatprep.subr.bf16.mxu0 %v1276
    %2027 = vmatpush1.bf16.msra.mxu0 %v1275
    %2028 = vmatprep.subr.bf16.mxu0 %v1280
    %2029 = vmatpush1.bf16.msra.mxu0 %v1279
    %2030 = vmatprep.mubr.bf16.mxu0 %v336
    %2031 = vmatmul.mubr.bf16.gmra.mrb[0].mxu0 %v335
    %v2032 = vpop.f32.mrb[0].mxu0
    %v2033 = vadd.f32 0.0, %v2032
    %v2034 = vpop.f32.mrb[0].mxu0
    %v2035 = vadd.f32 0.0, %v2034
    %v2036 = vpop.f32.mrb[0].mxu0
    %v2037 = vpop.f32.mrb[0].mxu0
    %2038 = vdwg.mxu0
    %2039 = vmatprep.subr.bf16.mxu0 %v1284
    %2040 = vmatpush1.bf16.msra.mxu0 %v1283
    %2041 = vmatprep.subr.bf16.mxu0 %v1288
    %2042 = vmatpush1.bf16.msra.mxu0 %v1287
    %2043 = vmatprep.subr.bf16.mxu0 %v1292
    %2044 = vmatpush1.bf16.msra.mxu0 %v1291
    %2045 = vmatprep.subr.bf16.mxu0 %v1296
    %2046 = vmatpush1.bf16.msra.mxu0 %v1295
    %2047 = vmatprep.subr.bf16.mxu0 %v1300
    %2048 = vmatpush1.bf16.msra.mxu0 %v1299
    %2049 = vmatprep.subr.bf16.mxu0 %v1304
    %2050 = vmatpush1.bf16.msra.mxu0 %v1303
    %2051 = vmatprep.subr.bf16.mxu0 %v1308
    %2052 = vmatpush1.bf16.msra.mxu0 %v1307
    %2053 = vmatprep.subr.bf16.mxu0 %v1312
    %2054 = vmatpush1.bf16.msra.mxu0 %v1311
    %2055 = vmatprep.subr.bf16.mxu0 %v1316
    %2056 = vmatpush1.bf16.msra.mxu0 %v1315
    %2057 = vmatprep.subr.bf16.mxu0 %v1320
    %2058 = vmatpush1.bf16.msra.mxu0 %v1319
    %2059 = vmatprep.subr.bf16.mxu0 %v1324
    %2060 = vmatpush1.bf16.msra.mxu0 %v1323
    %2061 = vmatprep.subr.bf16.mxu0 %v1328
    %2062 = vmatpush1.bf16.msra.mxu0 %v1327
    %2063 = vmatprep.subr.bf16.mxu0 %v1332
    %2064 = vmatpush1.bf16.msra.mxu0 %v1331
    %2065 = vmatprep.subr.bf16.mxu0 %v1336
    %2066 = vmatpush1.bf16.msra.mxu0 %v1335
    %2067 = vmatprep.subr.bf16.mxu0 %v1340
    %2068 = vmatpush1.bf16.msra.mxu0 %v1339
    %2069 = vmatprep.subr.bf16.mxu0 %v1344
    %2070 = vmatpush1.bf16.msra.mxu0 %v1343
    %2071 = vmatprep.mubr.bf16.mxu0 %v338
    %2072 = vmatmul.mubr.bf16.gmra.mrb[0].mxu0 %v337
    %v2073 = vpop.f32.mrb[0].mxu0
    %v2074 = vadd.f32 %v2033, %v2073
    %v2075 = vpop.f32.mrb[0].mxu0
    %v2076 = vadd.f32 %v2035, %v2075
    %v2077 = vpop.f32.mrb[0].mxu0
    %v2078 = vpop.f32.mrb[0].mxu0
    %2079 = vdwg.mxu0
    %2080 = vmatprep.subr.bf16.mxu0 %v1348
    %2081 = vmatpush1.bf16.msra.mxu0 %v1347
    %2082 = vmatprep.subr.bf16.mxu0 %v1352
    %2083 = vmatpush1.bf16.msra.mxu0 %v1351
    %2084 = vmatprep.subr.bf16.mxu0 %v1356
    %2085 = vmatpush1.bf16.msra.mxu0 %v1355
    %2086 = vmatprep.subr.bf16.mxu0 %v1360
    %2087 = vmatpush1.bf16.msra.mxu0 %v1359
    %2088 = vmatprep.subr.bf16.mxu0 %v1364
    %2089 = vmatpush1.bf16.msra.mxu0 %v1363
    %2090 = vmatprep.subr.bf16.mxu0 %v1368
    %2091 = vmatpush1.bf16.msra.mxu0 %v1367
    %2092 = vmatprep.subr.bf16.mxu0 %v1372
    %2093 = vmatpush1.bf16.msra.mxu0 %v1371
    %2094 = vmatprep.subr.bf16.mxu0 %v1376
    %2095 = vmatpush1.bf16.msra.mxu0 %v1375
    %2096 = vmatprep.subr.bf16.mxu0 %v1380
    %2097 = vmatpush1.bf16.msra.mxu0 %v1379
    %2098 = vmatprep.subr.bf16.mxu0 %v1384
    %2099 = vmatpush1.bf16.msra.mxu0 %v1383
    %2100 = vmatprep.subr.bf16.mxu0 %v1388
    %2101 = vmatpush1.bf16.msra.mxu0 %v1387
    %2102 = vmatprep.subr.bf16.mxu0 %v1392
    %2103 = vmatpush1.bf16.msra.mxu0 %v1391
    %2104 = vmatprep.subr.bf16.mxu0 %v1396
    %2105 = vmatpush1.bf16.msra.mxu0 %v1395
    %2106 = vmatprep.subr.bf16.mxu0 %v1400
    %2107 = vmatpush1.bf16.msra.mxu0 %v1399
    %2108 = vmatprep.subr.bf16.mxu0 %v1404
    %2109 = vmatpush1.bf16.msra.mxu0 %v1403
    %2110 = vmatprep.subr.bf16.mxu0 %v1408
    %2111 = vmatpush1.bf16.msra.mxu0 %v1407
    %2112 = vmatprep.mubr.bf16.mxu0 %v340
    %2113 = vmatmul.mubr.bf16.gmra.mrb[0].mxu0 %v339
    %v2114 = vpop.f32.mrb[0].mxu0
    %v2115 = vadd.f32 %v2074, %v2114
    %v2116 = vpop.f32.mrb[0].mxu0
    %v2117 = vadd.f32 %v2076, %v2116
    %v2118 = vpop.f32.mrb[0].mxu0
    %v2119 = vpop.f32.mrb[0].mxu0
    %2120 = vdwg.mxu0
    %2121 = vmatprep.subr.bf16.mxu0 %v1412
    %2122 = vmatpush1.bf16.msra.mxu0 %v1411
    %2123 = vmatprep.subr.bf16.mxu0 %v1416
    %2124 = vmatpush1.bf16.msra.mxu0 %v1415
    %2125 = vmatprep.subr.bf16.mxu0 %v1420
    %2126 = vmatpush1.bf16.msra.mxu0 %v1419
    %2127 = vmatprep.subr.bf16.mxu0 %v1424
    %2128 = vmatpush1.bf16.msra.mxu0 %v1423
    %2129 = vmatprep.subr.bf16.mxu0 %v1428
    %2130 = vmatpush1.bf16.msra.mxu0 %v1427
    %2131 = vmatprep.subr.bf16.mxu0 %v1432
    %2132 = vmatpush1.bf16.msra.mxu0 %v1431
    %2133 = vmatprep.subr.bf16.mxu0 %v1436
    %2134 = vmatpush1.bf16.msra.mxu0 %v1435
    %2135 = vmatprep.subr.bf16.mxu0 %v1440
    %2136 = vmatpush1.bf16.msra.mxu0 %v1439
    %2137 = vmatprep.subr.bf16.mxu0 %v1444
    %2138 = vmatpush1.bf16.msra.mxu0 %v1443
    %2139 = vmatprep.subr.bf16.mxu0 %v1448
    %2140 = vmatpush1.bf16.msra.mxu0 %v1447
    %2141 = vmatprep.subr.bf16.mxu0 %v1452
    %2142 = vmatpush1.bf16.msra.mxu0 %v1451
    %2143 = vmatprep.subr.bf16.mxu0 %v1456
    %2144 = vmatpush1.bf16.msra.mxu0 %v1455
    %2145 = vmatprep.subr.bf16.mxu0 %v1460
    %2146 = vmatpush1.bf16.msra.mxu0 %v1459
    %2147 = vmatprep.subr.bf16.mxu0 %v1464
    %2148 = vmatpush1.bf16.msra.mxu0 %v1463
    %2149 = vmatprep.subr.bf16.mxu0 %v1468
    %2150 = vmatpush1.bf16.msra.mxu0 %v1467
    %2151 = vmatprep.subr.bf16.mxu0 %v1472
    %2152 = vmatpush1.bf16.msra.mxu0 %v1471
    %2153 = vmatprep.mubr.bf16.mxu0 %v342
    %2154 = vmatmul.mubr.bf16.gmra.mrb[0].mxu0 %v341
    %v2155 = vpop.f32.mrb[0].mxu0
    %v2156 = vadd.f32 %v2115, %v2155
    %v2157 = vpop.f32.mrb[0].mxu0
    %v2158 = vadd.f32 %v2117, %v2157
    %v2159 = vpop.f32.mrb[0].mxu0
    %v2160 = vpop.f32.mrb[0].mxu0
    %2161 = vdwg.mxu0
    %2162 = vmatprep.subr.bf16.mxu0 %v1476
    %2163 = vmatpush1.bf16.msra.mxu0 %v1475
    %2164 = vmatprep.subr.bf16.mxu0 %v1480
    %2165 = vmatpush1.bf16.msra.mxu0 %v1479
    %2166 = vmatprep.subr.bf16.mxu0 %v1484
    %2167 = vmatpush1.bf16.msra.mxu0 %v1483
    %2168 = vmatprep.subr.bf16.mxu0 %v1488
    %2169 = vmatpush1.bf16.msra.mxu0 %v1487
    %2170 = vmatprep.subr.bf16.mxu0 %v1492
    %2171 = vmatpush1.bf16.msra.mxu0 %v1491
    %2172 = vmatprep.subr.bf16.mxu0 %v1496
    %2173 = vmatpush1.bf16.msra.mxu0 %v1495
    %2174 = vmatprep.subr.bf16.mxu0 %v1500
    %2175 = vmatpush1.bf16.msra.mxu0 %v1499
    %2176 = vmatprep.subr.bf16.mxu0 %v1504
    %2177 = vmatpush1.bf16.msra.mxu0 %v1503
    %2178 = vmatprep.subr.bf16.mxu0 0
    %2179 = vmatpush1.bf16.msra.mxu0 0
    %2180 = vmatprep.subr.bf16.mxu0 0
    %2181 = vmatpush1.bf16.msra.mxu0 0
    %2182 = vmatprep.subr.bf16.mxu0 0
    %2183 = vmatpush1.bf16.msra.mxu0 0
    %2184 = vmatprep.subr.bf16.mxu0 0
    %2185 = vmatpush1.bf16.msra.mxu0 0
    %2186 = vmatprep.subr.bf16.mxu0 0
    %2187 = vmatpush1.bf16.msra.mxu0 0
    %2188 = vmatprep.subr.bf16.mxu0 0
    %2189 = vmatpush1.bf16.msra.mxu0 0
    %2190 = vmatprep.subr.bf16.mxu0 0
    %2191 = vmatpush1.bf16.msra.mxu0 0
    %2192 = vmatprep.subr.bf16.mxu0 0
    %2193 = vmatpush1.bf16.msra.mxu0 0
    %2194 = vmatprep.mubr.bf16.mxu0 0
    %2195 = vmatmul.mubr.bf16.gmra.mrb[0].mxu0 %v343
    %v2196 = vpop.f32.mrb[0].mxu0
    %v2197 = vadd.f32 %v2156, %v2196
    %v2198 = vpop.f32.mrb[0].mxu0
    %v2199 = vadd.f32 %v2158, %v2198
    %v2200 = vpop.f32.mrb[0].mxu0
    %v2201 = vpop.f32.mrb[0].mxu0
    %2202 = vdwg.mxu0
    %v2203 = vld [vmem:[%s2] sm:$0xf]
    %v2205 = vlaneseq
    %v2206 = vshrl.u32 %v2205, 7
    %v2207 = vsub.s32 0, %v2206
    %v2208 = vrot.slane %v2203, %v2207
    %v2209 = vlaneseq
    %v2210 = vshrl.u32 %v2209, 7
    %v2211 = vsub.s32 1, %v2210
    %v2212 = vrot.slane %v2203, %v2211
    %v2213 = vlaneseq
    %v2214 = vshrl.u32 %v2213, 7
    %v2215 = vsub.s32 2, %v2214
    %v2216 = vrot.slane %v2203, %v2215
    %v2217 = vlaneseq
    %v2218 = vshrl.u32 %v2217, 7
    %v2219 = vsub.s32 3, %v2218
    %v2220 = vrot.slane %v2203, %v2219
    %v2225 = vmul.f32 %v1992, %v2208
    %v2226 = vmul.f32 %v1994, %v2212
    %v2227 = vmul.f32 %v2197, %v2216
    %v2228 = vmul.f32 %v2199, %v2220
    %v2229 = vld [vmem:[%s3] sm:$0xf]
    %v2231 = vlaneseq
    %v2232 = vshrl.u32 %v2231, 7
    %v2233 = vsub.s32 0, %v2232
    %v2234 = vrot.slane %v2229, %v2233
    %v2235 = vlaneseq
    %v2236 = vshrl.u32 %v2235, 7
    %v2237 = vsub.s32 1, %v2236
    %v2238 = vrot.slane %v2229, %v2237
    %v2239 = vlaneseq
    %v2240 = vshrl.u32 %v2239, 7
    %v2241 = vsub.s32 2, %v2240
    %v2242 = vrot.slane %v2229, %v2241
    %v2243 = vlaneseq
    %v2244 = vshrl.u32 %v2243, 7
    %v2245 = vsub.s32 3, %v2244
    %v2246 = vrot.slane %v2229, %v2245
    %v2251 = vadd.f32 %v2225, %v2234
    %v2252 = vadd.f32 %v2226, %v2238
    %v2253 = vadd.f32 %v2227, %v2242
    %v2254 = vadd.f32 %v2228, %v2246
    %v2255 = vmax.f32 %v2251, 0.0
    %v2256 = vmax.f32 %v2252, 0.0
    %v2257 = vmax.f32 %v2253, 0.0
    %v2258 = vmax.f32 %v2254, 0.0
    %v2259 = vld [vmem:[%s4] sm:$0x3]
    %vm2260 = vcmask 64512
    %v2262 = vsel %vm2260, %v2259, 0
    %2264 = vmatprep.subr.mxu0 %v2256
    %2265 = vmatpush1.msra.mxu0 %v2255
    %2266 = vmatprep.subr.mxu0 0.0
    %2267 = vmatpush1.msra.mxu0 0.0
    %2268 = vmatprep.subr.mxu0 0.0
    %2269 = vmatpush1.msra.mxu0 0.0
    %2270 = vmatprep.subr.mxu0 0.0
    %2271 = vmatpush1.msra.mxu0 0.0
    %2272 = vmatprep.subr.mxu0 0.0
    %2273 = vmatpush1.msra.mxu0 0.0
    %2274 = vmatprep.subr.mxu0 0.0
    %2275 = vmatpush1.msra.mxu0 0.0
    %2276 = vmatprep.subr.mxu0 0.0
    %2277 = vmatpush1.msra.mxu0 0.0
    %2278 = vmatprep.subr.mxu0 0.0
    %2279 = vmatpush1.msra.mxu0 0.0
    %2280 = vmatprep.subr.mxu0 0.0
    %2281 = vmatpush1.msra.mxu0 0.0
    %2282 = vmatprep.subr.mxu0 0.0
    %2283 = vmatpush1.msra.mxu0 0.0
    %2284 = vmatprep.subr.mxu0 0.0
    %2285 = vmatpush1.msra.mxu0 0.0
    %2286 = vmatprep.subr.mxu0 0.0
    %2287 = vmatpush1.msra.mxu0 0.0
    %2288 = vmatprep.subr.mxu0 0.0
    %2289 = vmatpush1.msra.mxu0 0.0
    %2290 = vmatprep.subr.mxu0 0.0
    %2291 = vmatpush1.msra.mxu0 0.0
    %2292 = vmatprep.subr.mxu0 0.0
    %2293 = vmatpush1.msra.mxu0 0.0
    %2294 = vmatprep.subr.mxu0 0.0
    %2295 = vmatpush1.msra.mxu0 0.0
    %2296 = vmatprep.subr.mxu0 0.0
    %2297 = vmatpush1.msra.mxu0 0.0
    %2298 = vmatprep.subr.mxu0 0.0
    %2299 = vmatpush1.msra.mxu0 0.0
    %2300 = vmatprep.subr.mxu0 0.0
    %2301 = vmatpush1.msra.mxu0 0.0
    %2302 = vmatprep.subr.mxu0 0.0
    %2303 = vmatpush1.msra.mxu0 0.0
    %2304 = vmatprep.subr.mxu0 0.0
    %2305 = vmatpush1.msra.mxu0 0.0
    %2306 = vmatprep.subr.mxu0 0.0
    %2307 = vmatpush1.msra.mxu0 0.0
    %2308 = vmatprep.subr.mxu0 0.0
    %2309 = vmatpush1.msra.mxu0 0.0
    %2310 = vmatprep.subr.mxu0 0.0
    %2311 = vmatpush1.msra.mxu0 0.0
    %2312 = vmatprep.subr.mxu0 0.0
    %2313 = vmatpush1.msra.mxu0 0.0
    %2314 = vmatprep.subr.mxu0 0.0
    %2315 = vmatpush1.msra.mxu0 0.0
    %2316 = vmatprep.subr.mxu0 0.0
    %2317 = vmatpush1.msra.mxu0 0.0
    %2318 = vmatprep.subr.mxu0 0.0
    %2319 = vmatpush1.msra.mxu0 0.0
    %2320 = vmatprep.subr.mxu0 0.0
    %2321 = vmatpush1.msra.mxu0 0.0
    %2322 = vmatprep.subr.mxu0 0.0
    %2323 = vmatpush1.msra.mxu0 0.0
    %2324 = vmatprep.subr.mxu0 0.0
    %2325 = vmatpush1.msra.mxu0 0.0
    %2326 = vmatprep.subr.mxu0 0.0
    %2327 = vmatpush1.msra.mxu0 0.0
    %2328 = vmatprep.mubr.f32.mxu0 0.0
    %2329 = vmatmul.mubr.f32.gmra.mrb[0].mxu0 %v2262
    %v2330 = vpop.f32.mrb[0].mxu0
    %v2331 = vadd.f32 0.0, %v2330
    %v2332 = vpop.f32.mrb[0].mxu0
    %v2333 = vadd.f32 0.0, %v2332
    %2334 = vdwg.mxu0
    %2335 = vmatprep.subr.mxu0 %v2258
    %2336 = vmatpush1.msra.mxu0 %v2257
    %2337 = vmatprep.subr.mxu0 0.0
    %2338 = vmatpush1.msra.mxu0 0.0
    %2339 = vmatprep.subr.mxu0 0.0
    %2340 = vmatpush1.msra.mxu0 0.0
    %2341 = vmatprep.subr.mxu0 0.0
    %2342 = vmatpush1.msra.mxu0 0.0
    %2343 = vmatprep.subr.mxu0 0.0
    %2344 = vmatpush1.msra.mxu0 0.0
    %2345 = vmatprep.subr.mxu0 0.0
    %2346 = vmatpush1.msra.mxu0 0.0
    %2347 = vmatprep.subr.mxu0 0.0
    %2348 = vmatpush1.msra.mxu0 0.0
    %2349 = vmatprep.subr.mxu0 0.0
    %2350 = vmatpush1.msra.mxu0 0.0
    %2351 = vmatprep.subr.mxu0 0.0
    %2352 = vmatpush1.msra.mxu0 0.0
    %2353 = vmatprep.subr.mxu0 0.0
    %2354 = vmatpush1.msra.mxu0 0.0
    %2355 = vmatprep.subr.mxu0 0.0
    %2356 = vmatpush1.msra.mxu0 0.0
    %2357 = vmatprep.subr.mxu0 0.0
    %2358 = vmatpush1.msra.mxu0 0.0
    %2359 = vmatprep.subr.mxu0 0.0
    %2360 = vmatpush1.msra.mxu0 0.0
    %2361 = vmatprep.subr.mxu0 0.0
    %2362 = vmatpush1.msra.mxu0 0.0
    %2363 = vmatprep.subr.mxu0 0.0
    %2364 = vmatpush1.msra.mxu0 0.0
    %2365 = vmatprep.subr.mxu0 0.0
    %2366 = vmatpush1.msra.mxu0 0.0
    %2367 = vmatprep.subr.mxu0 0.0
    %2368 = vmatpush1.msra.mxu0 0.0
    %2369 = vmatprep.subr.mxu0 0.0
    %2370 = vmatpush1.msra.mxu0 0.0
    %2371 = vmatprep.subr.mxu0 0.0
    %2372 = vmatpush1.msra.mxu0 0.0
    %2373 = vmatprep.subr.mxu0 0.0
    %2374 = vmatpush1.msra.mxu0 0.0
    %2375 = vmatprep.subr.mxu0 0.0
    %2376 = vmatpush1.msra.mxu0 0.0
    %2377 = vmatprep.subr.mxu0 0.0
    %2378 = vmatpush1.msra.mxu0 0.0
    %2379 = vmatprep.subr.mxu0 0.0
    %2380 = vmatpush1.msra.mxu0 0.0
    %2381 = vmatprep.subr.mxu0 0.0
    %2382 = vmatpush1.msra.mxu0 0.0
    %2383 = vmatprep.subr.mxu0 0.0
    %2384 = vmatpush1.msra.mxu0 0.0
    %2385 = vmatprep.subr.mxu0 0.0
    %2386 = vmatpush1.msra.mxu0 0.0
    %2387 = vmatprep.subr.mxu0 0.0
    %2388 = vmatpush1.msra.mxu0 0.0
    %2389 = vmatprep.subr.mxu0 0.0
    %2390 = vmatpush1.msra.mxu0 0.0
    %2391 = vmatprep.subr.mxu0 0.0
    %2392 = vmatpush1.msra.mxu0 0.0
    %2393 = vmatprep.subr.mxu0 0.0
    %2394 = vmatpush1.msra.mxu0 0.0
    %2395 = vmatprep.subr.mxu0 0.0
    %2396 = vmatpush1.msra.mxu0 0.0
    %2397 = vmatprep.subr.mxu0 0.0
    %2398 = vmatpush1.msra.mxu0 0.0
    %2399 = vmatprep.mubr.f32.mxu0 0.0
    %2400 = vmatmul.mubr.f32.gmra.mrb[0].mxu0 %v2262
    %v2401 = vpop.f32.mrb[0].mxu0
    %v2402 = vadd.f32 0.0, %v2401
    %v2403 = vpop.f32.mrb[0].mxu0
    %v2404 = vadd.f32 0.0, %v2403
    %2405 = vdwg.mxu0
    %v2406 = vpack.c.bf16 %v2331, %v2331
    %v2407 = vpack.c.bf16 %v2333, %v2333
    %v2408 = vpack.c.bf16 %v2402, %v2402
    %v2409 = vpack.c.bf16 %v2404, %v2404
    %v2410 = vld [vmem:[%s5] sm:$0xf]
    %v2411 = vld [vmem:[%s5 + $0x4] sm:$0xf]
    %v2412 = vld [vmem:[%s5 + $0x8] sm:$0xf]
    %v2413 = vld [vmem:[%s5 + $0xc] sm:$0xf]
    %v2414 = vld [vmem:[%s5 + $0x10] sm:$0xf]
    %v2415 = vld [vmem:[%s5 + $0x14] sm:$0xf]
    %v2416 = vld [vmem:[%s5 + $0x18] sm:$0xf]
    %v2417 = vld [vmem:[%s5 + $0x1c] sm:$0xf]
    %v2418 = vld [vmem:[%s5 + $0x20] sm:$0xf]
    %v2419 = vld [vmem:[%s5 + $0x24] sm:$0xf]
    %v2420 = vld [vmem:[%s5 + $0x28] sm:$0xf]
    %v2421 = vld [vmem:[%s5 + $0x2c] sm:$0xf]
    %v2422 = vld [vmem:[%s5 + $0x30] sm:$0xf]
    %v2423 = vld [vmem:[%s5 + $0x34] sm:$0xf]
    %v2424 = vld [vmem:[%s5 + $0x38] sm:$0xf]
    %v2425 = vld [vmem:[%s5 + $0x3c] sm:$0xf]
    %v2426 = vld [vmem:[%s5 + $0x40] sm:$0xf]
    %v2427 = vld [vmem:[%s5 + $0x44] sm:$0xf]
    %v2428 = vld [vmem:[%s5 + $0x48] sm:$0xf]
    %v2429 = vld [vmem:[%s5 + $0x4c] sm:$0xf]
    %v2430 = vld [vmem:[%s5 + $0x50] sm:$0xf]
    %v2431 = vld [vmem:[%s5 + $0x54] sm:$0xf]
    %v2432 = vld [vmem:[%s5 + $0x58] sm:$0xf]
    %v2433 = vld [vmem:[%s5 + $0x5c] sm:$0xf]
    %v2434 = vld [vmem:[%s5 + $0x60] sm:$0xf]
    %v2435 = vld [vmem:[%s5 + $0x64] sm:$0xf]
    %v2436 = vld [vmem:[%s5 + $0x68] sm:$0xf]
    %v2437 = vld [vmem:[%s5 + $0x6c] sm:$0xf]
    %v2438 = vld [vmem:[%s5 + $0x70] sm:$0xf]
    %v2439 = vld [vmem:[%s5 + $0x74] sm:$0xf]
    %v2440 = vld [vmem:[%s5 + $0x78] sm:$0xf]
    %v2441 = vld [vmem:[%s5 + $0x7c] sm:$0xf]
    %v2442 = vld [vmem:[%s5 + $0x80] sm:$0xf]
    %v2443 = vld [vmem:[%s5 + $0x84] sm:$0xf]
    %v2444 = vld [vmem:[%s5 + $0x88] sm:$0xf]
    %v2445 = vld [vmem:[%s5 + $0x8c] sm:$0xf]
    %v2446 = vld [vmem:[%s5 + $0x90] sm:$0xf]
    %v2447 = vld [vmem:[%s5 + $0x94] sm:$0xf]
    %v2448 = vld [vmem:[%s5 + $0x98] sm:$0xf]
    %v2449 = vld [vmem:[%s5 + $0x9c] sm:$0xf]
    %v2450 = vld [vmem:[%s5 + $0xa0] sm:$0xf]
    %v2451 = vld [vmem:[%s5 + $0xa4] sm:$0xf]
    %v2452 = vld [vmem:[%s5 + $0xa8] sm:$0xf]
    %v2453 = vld [vmem:[%s5 + $0xac] sm:$0xf]
    %v2454 = vld [vmem:[%s5 + $0xb0] sm:$0xf]
    %v2455 = vld [vmem:[%s5 + $0xb4] sm:$0xf]
    %v2456 = vld [vmem:[%s5 + $0xb8] sm:$0xf]
    %v2457 = vld [vmem:[%s5 + $0xbc] sm:$0xf]
    %v2458 = vld [vmem:[%s5 + $0xc0] sm:$0xf]
    %v2459 = vld [vmem:[%s5 + $0xc4] sm:$0xf]
    %v2460 = vld [vmem:[%s5 + $0xc8] sm:$0xf]
    %v2461 = vld [vmem:[%s5 + $0xcc] sm:$0xf]
    %v2462 = vld [vmem:[%s5 + $0xd0] sm:$0xf]
    %v2463 = vld [vmem:[%s5 + $0xd4] sm:$0xf]
    %v2464 = vld [vmem:[%s5 + $0xd8] sm:$0xf]
    %v2465 = vld [vmem:[%s5 + $0xdc] sm:$0xf]
    %v2466 = vld [vmem:[%s5 + $0xe0] sm:$0xf]
    %v2467 = vld [vmem:[%s5 + $0xe4] sm:$0xf]
    %v2468 = vld [vmem:[%s5 + $0xe8] sm:$0xf]
    %v2469 = vld [vmem:[%s5 + $0xec] sm:$0xf]
    %v2470 = vld [vmem:[%s5 + $0xf0] sm:$0xf]
    %v2471 = vld [vmem:[%s5 + $0xf4] sm:$0xf]
    %v2472 = vld [vmem:[%s5 + $0xf8] sm:$0xf]
    %v2473 = vld [vmem:[%s5 + $0xfc] sm:$0xf]
    %v2474 = vld [vmem:[%s6] sm:$0x1]
    %v2476 = vlaneseq
    %v2477 = vshrl.u32 %v2476, 7
    %v2478 = vsub.s32 0, %v2477
    %v2479 = vrot.slane %v2474, %v2478
    %v2545 = vunpack.c.l.b16 %v2410
    %v2546 = vunpack.c.l.b16 %v2411
    %v2547 = vunpack.c.l.b16 %v2412
    %v2548 = vunpack.c.l.b16 %v2413
    %v2549 = vunpack.c.l.b16 %v2414
    %v2550 = vunpack.c.l.b16 %v2415
    %v2551 = vunpack.c.l.b16 %v2416
    %v2552 = vunpack.c.l.b16 %v2417
    %v2553 = vunpack.c.l.b16 %v2418
    %v2554 = vunpack.c.l.b16 %v2419
    %v2555 = vunpack.c.l.b16 %v2420
    %v2556 = vunpack.c.l.b16 %v2421
    %v2557 = vunpack.c.l.b16 %v2422
    %v2558 = vunpack.c.l.b16 %v2423
    %v2559 = vunpack.c.l.b16 %v2424
    %v2560 = vunpack.c.l.b16 %v2425
    %v2561 = vunpack.c.l.b16 %v2426
    %v2562 = vunpack.c.l.b16 %v2427
    %v2563 = vunpack.c.l.b16 %v2428
    %v2564 = vunpack.c.l.b16 %v2429
    %v2565 = vunpack.c.l.b16 %v2430
    %v2566 = vunpack.c.l.b16 %v2431
    %v2567 = vunpack.c.l.b16 %v2432
    %v2568 = vunpack.c.l.b16 %v2433
    %v2569 = vunpack.c.l.b16 %v2434
    %v2570 = vunpack.c.l.b16 %v2435
    %v2571 = vunpack.c.l.b16 %v2436
    %v2572 = vunpack.c.l.b16 %v2437
    %v2573 = vunpack.c.l.b16 %v2438
    %v2574 = vunpack.c.l.b16 %v2439
    %v2575 = vunpack.c.l.b16 %v2440
    %v2576 = vunpack.c.l.b16 %v2441
    %v2577 = vunpack.c.l.b16 %v2442
    %v2578 = vunpack.c.l.b16 %v2443
    %v2579 = vunpack.c.l.b16 %v2444
    %v2580 = vunpack.c.l.b16 %v2445
    %v2581 = vunpack.c.l.b16 %v2446
    %v2582 = vunpack.c.l.b16 %v2447
    %v2583 = vunpack.c.l.b16 %v2448
    %v2584 = vunpack.c.l.b16 %v2449
    %v2585 = vunpack.c.l.b16 %v2450
    %v2586 = vunpack.c.l.b16 %v2451
    %v2587 = vunpack.c.l.b16 %v2452
    %v2588 = vunpack.c.l.b16 %v2453
    %v2589 = vunpack.c.l.b16 %v2454
    %v2590 = vunpack.c.l.b16 %v2455
    %v2591 = vunpack.c.l.b16 %v2456
    %v2592 = vunpack.c.l.b16 %v2457
    %v2593 = vunpack.c.l.b16 %v2458
    %v2594 = vunpack.c.l.b16 %v2459
    %v2595 = vunpack.c.l.b16 %v2460
    %v2596 = vunpack.c.l.b16 %v2461
    %v2597 = vunpack.c.l.b16 %v2462
    %v2598 = vunpack.c.l.b16 %v2463
    %v2599 = vunpack.c.l.b16 %v2464
    %v2600 = vunpack.c.l.b16 %v2465
    %v2601 = vunpack.c.l.b16 %v2466
    %v2602 = vunpack.c.l.b16 %v2467
    %v2603 = vunpack.c.l.b16 %v2468
    %v2604 = vunpack.c.l.b16 %v2469
    %v2605 = vunpack.c.l.b16 %v2470
    %v2606 = vunpack.c.l.b16 %v2471
    %v2607 = vunpack.c.l.b16 %v2472
    %v2608 = vunpack.c.l.b16 %v2473
    %v2609 = vpack.c.b16 %v2546, %v2545
    %v2610 = vpack.c.b16 %v2548, %v2547
    %v2611 = vpack.c.b16 %v2550, %v2549
    %v2612 = vpack.c.b16 %v2552, %v2551
    %v2613 = vpack.c.b16 %v2554, %v2553
    %v2614 = vpack.c.b16 %v2556, %v2555
    %v2615 = vpack.c.b16 %v2558, %v2557
    %v2616 = vpack.c.b16 %v2560, %v2559
    %v2617 = vpack.c.b16 %v2562, %v2561
    %v2618 = vpack.c.b16 %v2564, %v2563
    %v2619 = vpack.c.b16 %v2566, %v2565
    %v2620 = vpack.c.b16 %v2568, %v2567
    %v2621 = vpack.c.b16 %v2570, %v2569
    %v2622 = vpack.c.b16 %v2572, %v2571
    %v2623 = vpack.c.b16 %v2574, %v2573
    %v2624 = vpack.c.b16 %v2576, %v2575
    %v2625 = vpack.c.b16 %v2578, %v2577
    %v2626 = vpack.c.b16 %v2580, %v2579
    %v2627 = vpack.c.b16 %v2582, %v2581
    %v2628 = vpack.c.b16 %v2584, %v2583
    %v2629 = vpack.c.b16 %v2586, %v2585
    %v2630 = vpack.c.b16 %v2588, %v2587
    %v2631 = vpack.c.b16 %v2590, %v2589
    %v2632 = vpack.c.b16 %v2592, %v2591
    %v2633 = vpack.c.b16 %v2594, %v2593
    %v2634 = vpack.c.b16 %v2596, %v2595
    %v2635 = vpack.c.b16 %v2598, %v2597
    %v2636 = vpack.c.b16 %v2600, %v2599
    %v2637 = vpack.c.b16 %v2602, %v2601
    %v2638 = vpack.c.b16 %v2604, %v2603
    %v2639 = vpack.c.b16 %v2606, %v2605
    %v2640 = vpack.c.b16 %v2608, %v2607
    %2673 = vmatprep.subr.bf16.mxu0 0
    %2674 = vmatpush1.bf16.msra.mxu0 %v2609
    %2675 = vmatprep.subr.bf16.mxu0 0
    %2676 = vmatpush1.bf16.msra.mxu0 %v2610
    %2677 = vmatprep.subr.bf16.mxu0 0
    %2678 = vmatpush1.bf16.msra.mxu0 %v2611
    %2679 = vmatprep.subr.bf16.mxu0 0
    %2680 = vmatpush1.bf16.msra.mxu0 %v2612
    %2681 = vmatprep.subr.bf16.mxu0 0
    %2682 = vmatpush1.bf16.msra.mxu0 %v2613
    %2683 = vmatprep.subr.bf16.mxu0 0
    %2684 = vmatpush1.bf16.msra.mxu0 %v2614
    %2685 = vmatprep.subr.bf16.mxu0 0
    %2686 = vmatpush1.bf16.msra.mxu0 %v2615
    %2687 = vmatprep.subr.bf16.mxu0 0
    %2688 = vmatpush1.bf16.msra.mxu0 %v2616
    %2689 = vmatprep.subr.bf16.mxu0 0
    %2690 = vmatpush1.bf16.msra.mxu0 %v2617
    %2691 = vmatprep.subr.bf16.mxu0 0
    %2692 = vmatpush1.bf16.msra.mxu0 %v2618
    %2693 = vmatprep.subr.bf16.mxu0 0
    %2694 = vmatpush1.bf16.msra.mxu0 %v2619
    %2695 = vmatprep.subr.bf16.mxu0 0
    %2696 = vmatpush1.bf16.msra.mxu0 %v2620
    %2697 = vmatprep.subr.bf16.mxu0 0
    %2698 = vmatpush1.bf16.msra.mxu0 %v2621
    %2699 = vmatprep.subr.bf16.mxu0 0
    %2700 = vmatpush1.bf16.msra.mxu0 %v2622
    %2701 = vmatprep.subr.bf16.mxu0 0
    %2702 = vmatpush1.bf16.msra.mxu0 %v2623
    %2703 = vmatprep.subr.bf16.mxu0 0
    %2704 = vmatpush1.bf16.msra.mxu0 %v2624
    %2705 = vmatprep.mubr.bf16.mxu0 %v2407
    %2706 = vmatmul.mubr.bf16.gmra.mrb[0].mxu0 %v2406
    %v2707 = vpop.f32.mrb[0].mxu0
    %v2708 = vadd.f32 %v2479, %v2707
    %v2709 = vpop.f32.mrb[0].mxu0
    %v2710 = vpop.f32.mrb[0].mxu0
    %v2711 = vpop.f32.mrb[0].mxu0
    %2712 = vdwg.mxu0
    %2713 = vmatprep.subr.bf16.mxu0 0
    %2714 = vmatpush1.bf16.msra.mxu0 %v2625
    %2715 = vmatprep.subr.bf16.mxu0 0
    %2716 = vmatpush1.bf16.msra.mxu0 %v2626
    %2717 = vmatprep.subr.bf16.mxu0 0
    %2718 = vmatpush1.bf16.msra.mxu0 %v2627
    %2719 = vmatprep.subr.bf16.mxu0 0
    %2720 = vmatpush1.bf16.msra.mxu0 %v2628
    %2721 = vmatprep.subr.bf16.mxu0 0
    %2722 = vmatpush1.bf16.msra.mxu0 %v2629
    %2723 = vmatprep.subr.bf16.mxu0 0
    %2724 = vmatpush1.bf16.msra.mxu0 %v2630
    %2725 = vmatprep.subr.bf16.mxu0 0
    %2726 = vmatpush1.bf16.msra.mxu0 %v2631
    %2727 = vmatprep.subr.bf16.mxu0 0
    %2728 = vmatpush1.bf16.msra.mxu0 %v2632
    %2729 = vmatprep.subr.bf16.mxu0 0
    %2730 = vmatpush1.bf16.msra.mxu0 %v2633
    %2731 = vmatprep.subr.bf16.mxu0 0
    %2732 = vmatpush1.bf16.msra.mxu0 %v2634
    %2733 = vmatprep.subr.bf16.mxu0 0
    %2734 = vmatpush1.bf16.msra.mxu0 %v2635
    %2735 = vmatprep.subr.bf16.mxu0 0
    %2736 = vmatpush1.bf16.msra.mxu0 %v2636
    %2737 = vmatprep.subr.bf16.mxu0 0
    %2738 = vmatpush1.bf16.msra.mxu0 %v2637
    %2739 = vmatprep.subr.bf16.mxu0 0
    %2740 = vmatpush1.bf16.msra.mxu0 %v2638
    %2741 = vmatprep.subr.bf16.mxu0 0
    %2742 = vmatpush1.bf16.msra.mxu0 %v2639
    %2743 = vmatprep.subr.bf16.mxu0 0
    %2744 = vmatpush1.bf16.msra.mxu0 %v2640
    %2745 = vmatprep.mubr.bf16.mxu0 %v2409
    %2746 = vmatmul.mubr.bf16.gmra.mrb[0].mxu0 %v2408
    %v2747 = vpop.f32.mrb[0].mxu0
    %v2748 = vadd.f32 %v2708, %v2747
    %v2749 = vpop.f32.mrb[0].mxu0
    %v2750 = vpop.f32.mrb[0].mxu0
    %v2751 = vpop.f32.mrb[0].mxu0
    %2752 = vdwg.mxu0
    %2753 = vst [vmem:[#allocation2] sm:$0x3] %v2748
    // Predicated region
    $region30: #{custom_cnn_forward.5} parent=1 // pred_check
      _
    $region31: #{custom_cnn_forward.5} parent=1 // pred_check_branch
      %2755 = sbr.rel (0) target = $region33
    $region32: #{custom_cnn_forward.5} parent=1 // pred_region
      %s2757 = ssub.s32 32, 32
      %2758 = vsyncadd [#allocation3], %s2757
      %s2760 = sshll.u32 [#allocation2], 4
      %s2761 = int_to_ptr.vmem [resolvable:$true] %s2760
      %2763 = dma.vmem_to_hbm [thread:$0]  %s2761, 32, %s7, [#allocation3]
    $region33: #{custom_cnn_forward.5} parent=1 // pred_fallthru
      _
    // Predicated region
    $region34: #{custom_cnn_forward.5} parent=1 // pred_check
      _
    $region35: #{custom_cnn_forward.5} parent=1 // pred_check_branch
      %2765 = sbr.rel (0) target = $region37
    $region36: #{custom_cnn_forward.5} parent=1 // pred_region
      %2766 = dma.done [#allocation3], 32
    $region37: #{custom_cnn_forward.5} parent=1 // pred_fallthru
      _
    %2767 = vsyncpa [#allocation3], 1

</llo_original>
